<compile_context>
chip_gen: v6e
topology: v6e:2x2x1
jax: 0.10.0
libtpu: 0.0.40
codegen_flags: <defaults>
</compile_context>

<pallas_src>
import jax
import jax.numpy as jnp
from jax.experimental import pallas as pl
from jax.experimental.pallas import tpu as pltpu

EMBED_SIZE = 768
LN_EPS = 1e-5


def encoder_kernel(x_ref, wt_ref, p_ref, o_ref):
    """Fused Linear (x @ W^T + b) + LayerNorm over the last dim.

    x_ref : (TM, E) row tile of the flattened (B*S, E) input
    wt_ref: (E, E)  W.T (grid-invariant, resident in VMEM)
    p_ref : (3, E)  packed [bias; gamma; beta] (grid-invariant)
    o_ref : (TM, E) output row tile
    """
    bias = p_ref[0:1, :]
    gamma = p_ref[1:2, :]
    beta = p_ref[2:3, :]

    # MXU matmul with f32 accumulation; operands stay in their native dtype.
    y = jnp.dot(x_ref[...], wt_ref[...],
                preferred_element_type=jnp.float32) + bias

    # LayerNorm in f32 over the lane (E) axis.
    mean = jnp.mean(y, axis=-1, keepdims=True)
    centered = y - mean
    var = jnp.mean(centered * centered, axis=-1, keepdims=True)
    inv = jax.lax.rsqrt(var + LN_EPS)
    out = centered * inv * gamma + beta

    o_ref[...] = out.astype(o_ref.dtype)


def _build_call(rows_p, tm, E, out_dtype, single_buffer_consts):
    def const_spec(shape):
        if single_buffer_consts:
            # Grid-invariant operands: no double buffering needed.
            return pl.BlockSpec(shape, lambda i: (0, 0),
                                pipeline_mode=pl.Buffered(1))
        return pl.BlockSpec(shape, lambda i: (0, 0))

    cost = pl.CostEstimate(
        flops=2 * rows_p * E * E,
        transcendentals=rows_p,  # one rsqrt per row
        bytes_accessed=(2 * rows_p * E + E * E + 3 * E) * 4,
    )

    return pl.pallas_call(
        encoder_kernel,
        out_shape=jax.ShapeDtypeStruct((rows_p, E), out_dtype),
        grid_spec=pltpu.PrefetchScalarGridSpec(
            num_scalar_prefetch=0,
            grid=(rows_p // tm,),
            in_specs=[
                pl.BlockSpec((tm, E), lambda i: (i, 0)),   # x row tile
                const_spec((E, E)),                        # W^T (resident)
                const_spec((3, E)),                        # bias/gamma/beta
            ],
            out_specs=pl.BlockSpec((tm, E), lambda i: (i, 0)),
        ),
        compiler_params=pltpu.CompilerParams(
            dimension_semantics=("parallel",),   # rows are independent (megacore)
            vmem_limit_bytes=32 * 1024 * 1024,
        ),
        cost_estimate=cost,
    )


def encoder_forward(x, W, b, gamma, beta, *, tm=256, matmul_dtype=None):
    """y = LayerNorm(x @ W.T + b), matching PyTorch nn.Linear + nn.LayerNorm.

    x: (B, S, E); W: (E, E) as (out, in); b/gamma/beta: (E,).
    tm: row tile (MXU-aligned, default 256).
    matmul_dtype: optionally cast the matmul operands (e.g. jnp.bfloat16) for
    higher MXU throughput on v6e/v7x; LayerNorm math stays in f32.
    """
    B, S, E = x.shape
    assert E == EMBED_SIZE
    rows = B * S

    # Effective row tile: default 256, shrunk to a multiple of 8 for tiny
    # inputs; pad rows so the grid covers them exactly (ragged tail safe).
    tm_eff = min(tm, -(-rows // 8) * 8)
    tm_eff = max(8, -(-tm_eff // 8) * 8)
    rows_p = pl.cdiv(rows, tm_eff) * tm_eff

    x2 = x.reshape(rows, E)
    if rows_p != rows:
        x2 = jnp.pad(x2, ((0, rows_p - rows), (0, 0)))

    wt = W.T  # one-time wrapper transpose; kernel computes x @ W^T
    if matmul_dtype is not None:
        x2 = x2.astype(matmul_dtype)
        wt = wt.astype(matmul_dtype)

    params = jnp.stack([b.astype(jnp.float32),
                        gamma.astype(jnp.float32),
                        beta.astype(jnp.float32)], axis=0)  # (3, E)

    try:
        out = _build_call(rows_p, tm_eff, E, x.dtype, True)(x2, wt, params)
    except Exception:
        # Fallback if this jax build rejects pipeline_mode=pl.Buffered(1).
        out = _build_call(rows_p, tm_eff, E, x.dtype, False)(x2, wt, params)

    if rows_p != rows:
        out = out[:rows]
    return out.reshape(B, S, E)


def reference_forward(x, W, b, gamma, beta):
    y = jnp.einsum("bse,oe->bso", x, W) + b
    mean = jnp.mean(y, axis=-1, keepdims=True)
    var = jnp.var(y, axis=-1, keepdims=True)
    return (y - mean) / jnp.sqrt(var + LN_EPS) * gamma + beta


if __name__ == "__main__":
    key = jax.random.PRNGKey(0)
    k_x, k_w, k_b = jax.random.split(key, 3)

    B, S, E = 2, 8, EMBED_SIZE
    x = jax.random.normal(k_x, (B, S, E), dtype=jnp.float32)

    # Deterministic parameter init (nn.Linear-style uniform bounds).
    bound = 1.0 / (E ** 0.5)
    W = jax.random.uniform(k_w, (E, E), minval=-bound, maxval=bound,
                           dtype=jnp.float32)   # (out, in)
    b = jax.random.uniform(k_b, (E,), minval=-bound, maxval=bound,
                           dtype=jnp.float32)
    gamma = jnp.ones((E,), dtype=jnp.float32)   # LayerNorm default weight
    beta = jnp.zeros((E,), dtype=jnp.float32)   # LayerNorm default bias

    out = encoder_forward(x, W, b, gamma, beta)
    out = jax.block_until_ready(out)

    ref = reference_forward(x, W, b, gamma, beta)
    assert out.shape == (B, S, E)
    assert jnp.allclose(out, ref, atol=1e-4, rtol=1e-4)

    print("KERNEL_OK")
</pallas_src>

<mosaic_0001>
module attributes {stable_mosaic.version = 11 : i64} {
  func.func @encoder_kernel(%arg0: i32, %arg1: memref<16x768xf32, #tpu.memory_space<vmem>>, %arg2: memref<768x768xf32, #tpu.memory_space<vmem>>, %arg3: memref<3x768xf32, #tpu.memory_space<vmem>>, %arg4: memref<16x768xf32, #tpu.memory_space<vmem>>) attributes {dimension_semantics = [#tpu.dimension_semantics<parallel>], iteration_bounds = array<i64: 1>, scalar_prefetch = 0 : i64, scratch_operands = 0 : i64, tpu.core_type = #tpu.core_type<tc>, window_params = [{transform_indices = @transform_0, window_bounds = array<i64: 16, 768>}, {pipeline_mode = #tpu.pipeline_mode<synchronous>, transform_indices = @transform_1, window_bounds = array<i64: 768, 768>}, {pipeline_mode = #tpu.pipeline_mode<synchronous>, transform_indices = @transform_2, window_bounds = array<i64: 3, 768>}, {transform_indices = @transform_3, window_bounds = array<i64: 16, 768>}]} {
    %c0 = arith.constant 0 : index
    %c0_0 = arith.constant 0 : index
    %0 = vector.load %arg3[%c0, %c0_0] : memref<3x768xf32, #tpu.memory_space<vmem>>, vector<1x768xf32>
    %c1 = arith.constant 1 : index
    %c0_1 = arith.constant 0 : index
    %1 = vector.load %arg3[%c1, %c0_1] : memref<3x768xf32, #tpu.memory_space<vmem>>, vector<1x768xf32>
    %c2 = arith.constant 2 : index
    %c0_2 = arith.constant 0 : index
    %2 = vector.load %arg3[%c2, %c0_2] : memref<3x768xf32, #tpu.memory_space<vmem>>, vector<1x768xf32>
    %c0_3 = arith.constant 0 : index
    %c0_4 = arith.constant 0 : index
    %3 = vector.load %arg1[%c0_3, %c0_4] : memref<16x768xf32, #tpu.memory_space<vmem>>, vector<16x768xf32>
    %c0_5 = arith.constant 0 : index
    %c0_6 = arith.constant 0 : index
    %4 = vector.load %arg2[%c0_5, %c0_6] : memref<768x768xf32, #tpu.memory_space<vmem>>, vector<768x768xf32>
    %cst = arith.constant dense<0.000000e+00> : vector<16x768xf32>
    %5 = tpu.matmul %3, %4, %cst {dimension_numbers = #tpu.dot_dimension_numbers<[1], [0], [0], [1], [0, 0, 1, 1], [], []>} : vector<16x768xf32>, vector<768x768xf32>, vector<16x768xf32> -> vector<16x768xf32>
    %6 = vector.broadcast %0 : vector<1x768xf32> to vector<16x768xf32>
    %7 = arith.addf %5, %6 : vector<16x768xf32>
    %cst_7 = arith.constant dense<0.000000e+00> : vector<16xf32>
    %8 = vector.multi_reduction <add>, %7, %cst_7 [1] : vector<16x768xf32> to vector<16xf32>
    %9 = vector.shape_cast %8 : vector<16xf32> to vector<16x1xf32>
    %cst_8 = arith.constant 7.680000e+02 : f32
    %10 = vector.broadcast %cst_8 : f32 to vector<16x1xf32>
    %11 = arith.divf %9, %10 : vector<16x1xf32>
    %12 = vector.broadcast %11 : vector<16x1xf32> to vector<16x768xf32>
    %13 = arith.subf %7, %12 : vector<16x768xf32>
    %14 = arith.mulf %13, %13 : vector<16x768xf32>
    %cst_9 = arith.constant dense<0.000000e+00> : vector<16xf32>
    %15 = vector.multi_reduction <add>, %14, %cst_9 [1] : vector<16x768xf32> to vector<16xf32>
    %16 = vector.shape_cast %15 : vector<16xf32> to vector<16x1xf32>
    %cst_10 = arith.constant 7.680000e+02 : f32
    %17 = vector.broadcast %cst_10 : f32 to vector<16x1xf32>
    %18 = arith.divf %16, %17 : vector<16x1xf32>
    %cst_11 = arith.constant 9.99999974E-6 : f32
    %19 = vector.broadcast %cst_11 : f32 to vector<16x1xf32>
    %20 = arith.addf %18, %19 : vector<16x1xf32>
    %21 = math.rsqrt %20 : vector<16x1xf32>
    %22 = vector.broadcast %21 : vector<16x1xf32> to vector<16x768xf32>
    %23 = arith.mulf %13, %22 : vector<16x768xf32>
    %24 = vector.broadcast %1 : vector<1x768xf32> to vector<16x768xf32>
    %25 = arith.mulf %23, %24 : vector<16x768xf32>
    %26 = vector.broadcast %2 : vector<1x768xf32> to vector<16x768xf32>
    %27 = arith.addf %25, %26 : vector<16x768xf32>
    %c0_12 = arith.constant 0 : index
    %c0_13 = arith.constant 0 : index
    %28 = vector.load %arg4[%c0_12, %c0_13] : memref<16x768xf32, #tpu.memory_space<vmem>>, vector<16x768xf32>
    tpu.vector_store %arg4[%c0_12, %c0_13], %27 {strides = array<i32>} : memref<16x768xf32, #tpu.memory_space<vmem>>, vector<16x768xf32>,
    return
  }
  func.func @transform_0(%arg0: i32) -> (i32, i32) {
    %c0_i32 = arith.constant 0 : i32
    %c0_i32_0 = arith.constant 0 : i32
    return %arg0, %c0_i32 : i32, i32
  }
  func.func @transform_1(%arg0: i32) -> (i32, i32) {
    %c0_i32 = arith.constant 0 : i32
    %c0_i32_0 = arith.constant 0 : i32
    %c0_i32_1 = arith.constant 0 : i32
    return %c0_i32, %c0_i32_0 : i32, i32
  }
  func.func @transform_2(%arg0: i32) -> (i32, i32) {
    %c0_i32 = arith.constant 0 : i32
    %c0_i32_0 = arith.constant 0 : i32
    %c0_i32_1 = arith.constant 0 : i32
    return %c0_i32, %c0_i32_0 : i32, i32
  }
  func.func @transform_3(%arg0: i32) -> (i32, i32) {
    %c0_i32 = arith.constant 0 : i32
    %c0_i32_0 = arith.constant 0 : i32
    return %arg0, %c0_i32 : i32, i32
  }
}

module attributes {stable_mosaic.version = 11 : i64} {
  func.func @encoder_kernel(%arg0: i32, %arg1: memref<16x768xf32, #tpu.memory_space<vmem>>, %arg2: memref<768x768xf32, #tpu.memory_space<vmem>>, %arg3: memref<3x768xf32, #tpu.memory_space<vmem>>, %arg4: memref<16x768xf32, #tpu.memory_space<vmem>>) attributes {dimension_semantics = [#tpu.dimension_semantics<parallel>], iteration_bounds = array<i64: 1>, scalar_prefetch = 0 : i64, scratch_operands = 0 : i64, tpu.core_type = #tpu.core_type<tc>, window_params = [{transform_indices = @transform_0, window_bounds = array<i64: 16, 768>}, {pipeline_mode = #tpu.pipeline_mode<synchronous>, transform_indices = @transform_1, window_bounds = array<i64: 768, 768>}, {pipeline_mode = #tpu.pipeline_mode<synchronous>, transform_indices = @transform_2, window_bounds = array<i64: 3, 768>}, {transform_indices = @transform_3, window_bounds = array<i64: 16, 768>}]} {
    %c0 = arith.constant 0 : index
    %c0_0 = arith.constant 0 : index
    %0 = vector.load %arg3[%c0, %c0_0] : memref<3x768xf32, #tpu.memory_space<vmem>>, vector<1x768xf32>
    %c1 = arith.constant 1 : index
    %c0_1 = arith.constant 0 : index
    %1 = vector.load %arg3[%c1, %c0_1] : memref<3x768xf32, #tpu.memory_space<vmem>>, vector<1x768xf32>
    %c2 = arith.constant 2 : index
    %c0_2 = arith.constant 0 : index
    %2 = vector.load %arg3[%c2, %c0_2] : memref<3x768xf32, #tpu.memory_space<vmem>>, vector<1x768xf32>
    %c0_3 = arith.constant 0 : index
    %c0_4 = arith.constant 0 : index
    %3 = vector.load %arg1[%c0_3, %c0_4] : memref<16x768xf32, #tpu.memory_space<vmem>>, vector<16x768xf32>
    %c0_5 = arith.constant 0 : index
    %c0_6 = arith.constant 0 : index
    %4 = vector.load %arg2[%c0_5, %c0_6] : memref<768x768xf32, #tpu.memory_space<vmem>>, vector<768x768xf32>
    %cst = arith.constant dense<0.000000e+00> : vector<16x768xf32>
    %5 = tpu.matmul %3, %4, %cst {dimension_numbers = #tpu.dot_dimension_numbers<[1], [0], [0], [1], [0, 0, 1, 1], [], []>} : vector<16x768xf32>, vector<768x768xf32>, vector<16x768xf32> -> vector<16x768xf32>
    %6 = vector.broadcast %0 : vector<1x768xf32> to vector<16x768xf32>
    %7 = arith.addf %5, %6 : vector<16x768xf32>
    %cst_7 = arith.constant dense<0.000000e+00> : vector<16xf32>
    %8 = vector.multi_reduction <add>, %7, %cst_7 [1] : vector<16x768xf32> to vector<16xf32>
    %9 = vector.shape_cast %8 : vector<16xf32> to vector<16x1xf32>
    %cst_8 = arith.constant 7.680000e+02 : f32
    %10 = vector.broadcast %cst_8 : f32 to vector<16x1xf32>
    %11 = arith.divf %9, %10 : vector<16x1xf32>
    %12 = vector.broadcast %11 : vector<16x1xf32> to vector<16x768xf32>
    %13 = arith.subf %7, %12 : vector<16x768xf32>
    %14 = arith.mulf %13, %13 : vector<16x768xf32>
    %cst_9 = arith.constant dense<0.000000e+00> : vector<16xf32>
    %15 = vector.multi_reduction <add>, %14, %cst_9 [1] : vector<16x768xf32> to vector<16xf32>
    %16 = vector.shape_cast %15 : vector<16xf32> to vector<16x1xf32>
    %cst_10 = arith.constant 7.680000e+02 : f32
    %17 = vector.broadcast %cst_10 : f32 to vector<16x1xf32>
    %18 = arith.divf %16, %17 : vector<16x1xf32>
    %cst_11 = arith.constant 9.99999974E-6 : f32
    %19 = vector.broadcast %cst_11 : f32 to vector<16x1xf32>
    %20 = arith.addf %18, %19 : vector<16x1xf32>
    %21 = math.rsqrt %20 : vector<16x1xf32>
    %22 = vector.broadcast %21 : vector<16x1xf32> to vector<16x768xf32>
    %23 = arith.mulf %13, %22 : vector<16x768xf32>
    %24 = vector.broadcast %1 : vector<1x768xf32> to vector<16x768xf32>
    %25 = arith.mulf %23, %24 : vector<16x768xf32>
    %26 = vector.broadcast %2 : vector<1x768xf32> to vector<16x768xf32>
    %27 = arith.addf %25, %26 : vector<16x768xf32>
    %c0_12 = arith.constant 0 : index
    %c0_13 = arith.constant 0 : index
    %28 = vector.load %arg4[%c0_12, %c0_13] : memref<16x768xf32, #tpu.memory_space<vmem>>, vector<16x768xf32>
    tpu.vector_store %arg4[%c0_12, %c0_13], %27 {strides = array<i32>} : memref<16x768xf32, #tpu.memory_space<vmem>>, vector<16x768xf32>,
    return
  }
  func.func @transform_0(%arg0: i32) -> (i32, i32) {
    %c0_i32 = arith.constant 0 : i32
    %c0_i32_0 = arith.constant 0 : i32
    return %arg0, %c0_i32 : i32, i32
  }
  func.func @transform_1(%arg0: i32) -> (i32, i32) {
    %c0_i32 = arith.constant 0 : i32
    %c0_i32_0 = arith.constant 0 : i32
    %c0_i32_1 = arith.constant 0 : i32
    return %c0_i32, %c0_i32_0 : i32, i32
  }
  func.func @transform_2(%arg0: i32) -> (i32, i32) {
    %c0_i32 = arith.constant 0 : i32
    %c0_i32_0 = arith.constant 0 : i32
    %c0_i32_1 = arith.constant 0 : i32
    return %c0_i32, %c0_i32_0 : i32, i32
  }
  func.func @transform_3(%arg0: i32) -> (i32, i32) {
    %c0_i32 = arith.constant 0 : i32
    %c0_i32_0 = arith.constant 0 : i32
    return %arg0, %c0_i32 : i32, i32
  }
}

</mosaic_0001>

<llo_original>
// kernel: tpu_custom_call.1
$region0: #{tpu_custom_call.1}
  #allocation0 [shape = 'u32[]', space=smem, size = 0x4, offset = 0x4, fixed_abs, tag = 'smem constant byte address 0x4 - core index']
  #allocation1 [shape = 'u32[144,128]{1,0:T(1,128)}', space=vmem, size = 0x12000, scoped, tag = 'internal scratch']
  %s0 = inlined_call_operand.hbm [shape: f32[16,768], index: 0, kind: input, shape index: {}]
  %s1 = inlined_call_operand.hbm [shape: f32[768,768], index: 1, kind: input, shape index: {}]
  %s2 = inlined_call_operand.hbm [shape: f32[3,768], index: 2, kind: input, shape index: {}]
  %s3 = inlined_call_operand.hbm [shape: f32[16,768], index: 3, kind: output, shape index: {}]
  %s4 = sld [smem:[#allocation0]]
  $region34: #{tpu_custom_call.1} parent=0
    _
  %s6 = ssub.s32 1, %s4
  %s7 = scalar_select 0, %s6, %s4
  $region1: #{tpu_custom_call.1} parent=0
    #allocation2 [shape = 'u8[49152]{0}', space=vmem, size = 0xc000, scoped, tag = 'input window, operand 0, single buffered']
    #allocation3 [shape = 's32[1]{0}', space=sflag, size = 0x4, scoped, tag = 'scoped memory for tpu_custom_call.1']
    #allocation4 [shape = 's32[1]{0}', space=sflag, size = 0x4, scoped, tag = 'scoped memory for tpu_custom_call.1']
    #allocation5 [shape = 'u8[2359296]{0}', space=vmem, size = 0x240000, scoped, tag = 'input window, operand 1, single buffered']
    #allocation6 [shape = 's32[1]{0}', space=sflag, size = 0x4, scoped, tag = 'scoped memory for tpu_custom_call.1']
    #allocation7 [shape = 'u8[12288]{0}', space=vmem, size = 0x3000, scoped, tag = 'input window, operand 2, single buffered']
    #allocation8 [shape = 'u8[49152]{0}', space=vmem, size = 0xc000, scoped, tag = 'output window, operand 0, single buffered']
    %8 = vsyncpa [#allocation3], 0
    %9 = vsyncpa [#allocation6], 0
    %10 = vsyncpa [#allocation4], 0
    // Predicated region
    $region2: #{tpu_custom_call.1} parent=1 // pred_check
      _
    $region3: #{tpu_custom_call.1} parent=1 // pred_check_branch
      %12 = sbr.rel (0) target = $region5
    $region4: #{tpu_custom_call.1} parent=1 // pred_region
      %s14 = ssub.s32 1536, 1536
      %15 = vsyncadd [#allocation3], %s14
      %s16 = sshll.u32 [#allocation2], 4
      %s17 = int_to_ptr.vmem [resolvable:$true] %s16
      %22 = dma.hbm_to_vmem [thread:$0]  %s0, 1536, %s17, [#allocation3], 768, 768, 48
    $region5: #{tpu_custom_call.1} parent=1 // pred_fallthru
      _
    // Predicated region
    $region6: #{tpu_custom_call.1} parent=1 // pred_check
      _
    $region7: #{tpu_custom_call.1} parent=1 // pred_check_branch
      %24 = sbr.rel (0) target = $region9
    $region8: #{tpu_custom_call.1} parent=1 // pred_region
      %s26 = ssub.s32 73728, 73728
      %27 = vsyncadd [#allocation6], %s26
      %s28 = sshll.u32 [#allocation5], 4
      %s29 = int_to_ptr.vmem [resolvable:$true] %s28
      %34 = dma.hbm_to_vmem [thread:$0]  %s1, 73728, %s29, [#allocation6], 768, 768, 48
    $region9: #{tpu_custom_call.1} parent=1 // pred_fallthru
      _
    // Predicated region
    $region10: #{tpu_custom_call.1} parent=1 // pred_check
      _
    $region11: #{tpu_custom_call.1} parent=1 // pred_check_branch
      %36 = sbr.rel (0) target = $region13
    $region12: #{tpu_custom_call.1} parent=1 // pred_region
      %s38 = ssub.s32 384, 384
      %39 = vsyncadd [#allocation6], %s38
      %s41 = sshll.u32 [#allocation7], 4
      %s42 = int_to_ptr.vmem [resolvable:$true] %s41
      %44 = dma.hbm_to_vmem [thread:$0]  %s2, 384, %s42, [#allocation6]
    $region13: #{tpu_custom_call.1} parent=1 // pred_fallthru
      _
    // Predicated region
    $region14: #{tpu_custom_call.1} parent=1 // pred_check
      _
    $region15: #{tpu_custom_call.1} parent=1 // pred_check_branch
      %46 = sbr.rel (0) target = $region17
    $region16: #{tpu_custom_call.1} parent=1 // pred_region
      %47 = dma.done [#allocation3], 1536
    $region17: #{tpu_custom_call.1} parent=1 // pred_fallthru
      _
    // Predicated region
    $region18: #{tpu_custom_call.1} parent=1 // pred_check
      _
    $region19: #{tpu_custom_call.1} parent=1 // pred_check_branch
      %49 = sbr.rel (0) target = $region21
    $region20: #{tpu_custom_call.1} parent=1 // pred_region
      %50 = dma.done [#allocation6], 73728
    $region21: #{tpu_custom_call.1} parent=1 // pred_fallthru
      _
    // Predicated region
    $region22: #{tpu_custom_call.1} parent=1 // pred_check
      _
    $region23: #{tpu_custom_call.1} parent=1 // pred_check_branch
      %52 = sbr.rel (0) target = $region25
    $region24: #{tpu_custom_call.1} parent=1 // pred_region
      %53 = dma.done [#allocation6], 384
    $region25: #{tpu_custom_call.1} parent=1 // pred_fallthru
      _
    %v54 = vld [vmem:[#allocation7] ss:$4 sm:$0x3f]
    %s55 = scalar_lea.vmem [#allocation7], 1
    %v56 = vld [vmem:[%s55] ss:$4 sm:$0x3f]
    %s57 = scalar_lea.vmem [#allocation7], 2
    %v58 = vld [vmem:[%s57] ss:$4 sm:$0x3f]
    %v59 = vld [vmem:[#allocation2] sm:$0xff]
    %v60 = vld [vmem:[#allocation2 + $0x8] sm:$0xff]
    %v61 = vld [vmem:[#allocation2 + $0x10] sm:$0xff]
    %v62 = vld [vmem:[#allocation2 + $0x18] sm:$0xff]
    %v63 = vld [vmem:[#allocation2 + $0x20] sm:$0xff]
    %v64 = vld [vmem:[#allocation2 + $0x28] sm:$0xff]
    %v65 = vld [vmem:[#allocation2 + $0x30] sm:$0xff]
    %v66 = vld [vmem:[#allocation2 + $0x38] sm:$0xff]
    %v67 = vld [vmem:[#allocation2 + $0x40] sm:$0xff]
    %v68 = vld [vmem:[#allocation2 + $0x48] sm:$0xff]
    %v69 = vld [vmem:[#allocation2 + $0x50] sm:$0xff]
    %v70 = vld [vmem:[#allocation2 + $0x58] sm:$0xff]
    %v71 = vld [vmem:[#allocation5] sm:$0xff]
    %v72 = vld [vmem:[#allocation5 + $0x8] sm:$0xff]
    %v73 = vld [vmem:[#allocation5 + $0x10] sm:$0xff]
    %v74 = vld [vmem:[#allocation5 + $0x18] sm:$0xff]
    %v75 = vld [vmem:[#allocation5 + $0x20] sm:$0xff]
    %v76 = vld [vmem:[#allocation5 + $0x28] sm:$0xff]
    %v77 = vld [vmem:[#allocation5 + $0x30] sm:$0xff]
    %v78 = vld [vmem:[#allocation5 + $0x38] sm:$0xff]
    %v79 = vld [vmem:[#allocation5 + $0x40] sm:$0xff]
    %v80 = vld [vmem:[#allocation5 + $0x48] sm:$0xff]
    %v81 = vld [vmem:[#allocation5 + $0x50] sm:$0xff]
    %v82 = vld [vmem:[#allocation5 + $0x58] sm:$0xff]
    %v83 = vld [vmem:[#allocation5 + $0x60] sm:$0xff]
    %v84 = vld [vmem:[#allocation5 + $0x68] sm:$0xff]
    %v85 = vld [vmem:[#allocation5 + $0x70] sm:$0xff]
    %v86 = vld [vmem:[#allocation5 + $0x78] sm:$0xff]
    %v87 = vld [vmem:[#allocation5 + $0x80] sm:$0xff]
    %v88 = vld [vmem:[#allocation5 + $0x88] sm:$0xff]
    %v89 = vld [vmem:[#allocation5 + $0x90] sm:$0xff]
    %v90 = vld [vmem:[#allocation5 + $0x98] sm:$0xff]
    %v91 = vld [vmem:[#allocation5 + $0xa0] sm:$0xff]
    %v92 = vld [vmem:[#allocation5 + $0xa8] sm:$0xff]
    %v93 = vld [vmem:[#allocation5 + $0xb0] sm:$0xff]
    %v94 = vld [vmem:[#allocation5 + $0xb8] sm:$0xff]
    %v95 = vld [vmem:[#allocation5 + $0xc0] sm:$0xff]
    %v96 = vld [vmem:[#allocation5 + $0xc8] sm:$0xff]
    %v97 = vld [vmem:[#allocation5 + $0xd0] sm:$0xff]
    %v98 = vld [vmem:[#allocation5 + $0xd8] sm:$0xff]
    %v99 = vld [vmem:[#allocation5 + $0xe0] sm:$0xff]
    %v100 = vld [vmem:[#allocation5 + $0xe8] sm:$0xff]
    %v101 = vld [vmem:[#allocation5 + $0xf0] sm:$0xff]
    %v102 = vld [vmem:[#allocation5 + $0xf8] sm:$0xff]
    %v103 = vld [vmem:[#allocation5 + $0x100] sm:$0xff]
    %v104 = vld [vmem:[#allocation5 + $0x108] sm:$0xff]
    %v105 = vld [vmem:[#allocation5 + $0x110] sm:$0xff]
    %v106 = vld [vmem:[#allocation5 + $0x118] sm:$0xff]
    %v107 = vld [vmem:[#allocation5 + $0x120] sm:$0xff]
    %v108 = vld [vmem:[#allocation5 + $0x128] sm:$0xff]
    %v109 = vld [vmem:[#allocation5 + $0x130] sm:$0xff]
    %v110 = vld [vmem:[#allocation5 + $0x138] sm:$0xff]
    %v111 = vld [vmem:[#allocation5 + $0x140] sm:$0xff]
    %v112 = vld [vmem:[#allocation5 + $0x148] sm:$0xff]
    %v113 = vld [vmem:[#allocation5 + $0x150] sm:$0xff]
    %v114 = vld [vmem:[#allocation5 + $0x158] sm:$0xff]
    %v115 = vld [vmem:[#allocation5 + $0x160] sm:$0xff]
    %v116 = vld [vmem:[#allocation5 + $0x168] sm:$0xff]
    %v117 = vld [vmem:[#allocation5 + $0x170] sm:$0xff]
    %v118 = vld [vmem:[#allocation5 + $0x178] sm:$0xff]
    %v119 = vld [vmem:[#allocation5 + $0x180] sm:$0xff]
    %v120 = vld [vmem:[#allocation5 + $0x188] sm:$0xff]
    %v121 = vld [vmem:[#allocation5 + $0x190] sm:$0xff]
    %v122 = vld [vmem:[#allocation5 + $0x198] sm:$0xff]
    %v123 = vld [vmem:[#allocation5 + $0x1a0] sm:$0xff]
    %v124 = vld [vmem:[#allocation5 + $0x1a8] sm:$0xff]
    %v125 = vld [vmem:[#allocation5 + $0x1b0] sm:$0xff]
    %v126 = vld [vmem:[#allocation5 + $0x1b8] sm:$0xff]
    %v127 = vld [vmem:[#allocation5 + $0x1c0] sm:$0xff]
    %v128 = vld [vmem:[#allocation5 + $0x1c8] sm:$0xff]
    %v129 = vld [vmem:[#allocation5 + $0x1d0] sm:$0xff]
    %v130 = vld [vmem:[#allocation5 + $0x1d8] sm:$0xff]
    %v131 = vld [vmem:[#allocation5 + $0x1e0] sm:$0xff]
    %v132 = vld [vmem:[#allocation5 + $0x1e8] sm:$0xff]
    %v133 = vld [vmem:[#allocation5 + $0x1f0] sm:$0xff]
    %v134 = vld [vmem:[#allocation5 + $0x1f8] sm:$0xff]
    %v135 = vld [vmem:[#allocation5 + $0x200] sm:$0xff]
    %v136 = vld [vmem:[#allocation5 + $0x208] sm:$0xff]
    %v137 = vld [vmem:[#allocation5 + $0x210] sm:$0xff]
    %v138 = vld [vmem:[#allocation5 + $0x218] sm:$0xff]
    %v139 = vld [vmem:[#allocation5 + $0x220] sm:$0xff]
    %v140 = vld [vmem:[#allocation5 + $0x228] sm:$0xff]
    %v141 = vld [vmem:[#allocation5 + $0x230] sm:$0xff]
    %v142 = vld [vmem:[#allocation5 + $0x238] sm:$0xff]
    %v143 = vld [vmem:[#allocation5 + $0x240] sm:$0xff]
    %v144 = vld [vmem:[#allocation5 + $0x248] sm:$0xff]
    %v145 = vld [vmem:[#allocation5 + $0x250] sm:$0xff]
    %v146 = vld [vmem:[#allocation5 + $0x258] sm:$0xff]
    %v147 = vld [vmem:[#allocation5 + $0x260] sm:$0xff]
    %v148 = vld [vmem:[#allocation5 + $0x268] sm:$0xff]
    %v149 = vld [vmem:[#allocation5 + $0x270] sm:$0xff]
    %v150 = vld [vmem:[#allocation5 + $0x278] sm:$0xff]
    %v151 = vld [vmem:[#allocation5 + $0x280] sm:$0xff]
    %v152 = vld [vmem:[#allocation5 + $0x288] sm:$0xff]
    %v153 = vld [vmem:[#allocation5 + $0x290] sm:$0xff]
    %v154 = vld [vmem:[#allocation5 + $0x298] sm:$0xff]
    %v155 = vld [vmem:[#allocation5 + $0x2a0] sm:$0xff]
    %v156 = vld [vmem:[#allocation5 + $0x2a8] sm:$0xff]
    %v157 = vld [vmem:[#allocation5 + $0x2b0] sm:$0xff]
    %v158 = vld [vmem:[#allocation5 + $0x2b8] sm:$0xff]
    %v159 = vld [vmem:[#allocation5 + $0x2c0] sm:$0xff]
    %v160 = vld [vmem:[#allocation5 + $0x2c8] sm:$0xff]
    %v161 = vld [vmem:[#allocation5 + $0x2d0] sm:$0xff]
    %v162 = vld [vmem:[#allocation5 + $0x2d8] sm:$0xff]
    %v163 = vld [vmem:[#allocation5 + $0x2e0] sm:$0xff]
    %v164 = vld [vmem:[#allocation5 + $0x2e8] sm:$0xff]
    %v165 = vld [vmem:[#allocation5 + $0x2f0] sm:$0xff]
    %v166 = vld [vmem:[#allocation5 + $0x2f8] sm:$0xff]
    %v167 = vld [vmem:[#allocation5 + $0x300] sm:$0xff]
    %v168 = vld [vmem:[#allocation5 + $0x308] sm:$0xff]
    %v169 = vld [vmem:[#allocation5 + $0x310] sm:$0xff]
    %v170 = vld [vmem:[#allocation5 + $0x318] sm:$0xff]
    %v171 = vld [vmem:[#allocation5 + $0x320] sm:$0xff]
    %v172 = vld [vmem:[#allocation5 + $0x328] sm:$0xff]
    %v173 = vld [vmem:[#allocation5 + $0x330] sm:$0xff]
    %v174 = vld [vmem:[#allocation5 + $0x338] sm:$0xff]
    %v175 = vld [vmem:[#allocation5 + $0x340] sm:$0xff]
    %v176 = vld [vmem:[#allocation5 + $0x348] sm:$0xff]
    %v177 = vld [vmem:[#allocation5 + $0x350] sm:$0xff]
    %v178 = vld [vmem:[#allocation5 + $0x358] sm:$0xff]
    %v179 = vld [vmem:[#allocation5 + $0x360] sm:$0xff]
    %v180 = vld [vmem:[#allocation5 + $0x368] sm:$0xff]
    %v181 = vld [vmem:[#allocation5 + $0x370] sm:$0xff]
    %v182 = vld [vmem:[#allocation5 + $0x378] sm:$0xff]
    %v183 = vld [vmem:[#allocation5 + $0x380] sm:$0xff]
    %v184 = vld [vmem:[#allocation5 + $0x388] sm:$0xff]
    %v185 = vld [vmem:[#allocation5 + $0x390] sm:$0xff]
    %v186 = vld [vmem:[#allocation5 + $0x398] sm:$0xff]
    %v187 = vld [vmem:[#allocation5 + $0x3a0] sm:$0xff]
    %v188 = vld [vmem:[#allocation5 + $0x3a8] sm:$0xff]
    %v189 = vld [vmem:[#allocation5 + $0x3b0] sm:$0xff]
    %v190 = vld [vmem:[#allocation5 + $0x3b8] sm:$0xff]
    %v191 = vld [vmem:[#allocation5 + $0x3c0] sm:$0xff]
    %v192 = vld [vmem:[#allocation5 + $0x3c8] sm:$0xff]
    %v193 = vld [vmem:[#allocation5 + $0x3d0] sm:$0xff]
    %v194 = vld [vmem:[#allocation5 + $0x3d8] sm:$0xff]
    %v195 = vld [vmem:[#allocation5 + $0x3e0] sm:$0xff]
    %v196 = vld [vmem:[#allocation5 + $0x3e8] sm:$0xff]
    %v197 = vld [vmem:[#allocation5 + $0x3f0] sm:$0xff]
    %v198 = vld [vmem:[#allocation5 + $0x3f8] sm:$0xff]
    %v199 = vld [vmem:[#allocation5 + $0x400] sm:$0xff]
    %v200 = vld [vmem:[#allocation5 + $0x408] sm:$0xff]
    %v201 = vld [vmem:[#allocation5 + $0x410] sm:$0xff]
    %v202 = vld [vmem:[#allocation5 + $0x418] sm:$0xff]
    %v203 = vld [vmem:[#allocation5 + $0x420] sm:$0xff]
    %v204 = vld [vmem:[#allocation5 + $0x428] sm:$0xff]
    %v205 = vld [vmem:[#allocation5 + $0x430] sm:$0xff]
    %v206 = vld [vmem:[#allocation5 + $0x438] sm:$0xff]
    %v207 = vld [vmem:[#allocation5 + $0x440] sm:$0xff]
    %v208 = vld [vmem:[#allocation5 + $0x448] sm:$0xff]
    %v209 = vld [vmem:[#allocation5 + $0x450] sm:$0xff]
    %v210 = vld [vmem:[#allocation5 + $0x458] sm:$0xff]
    %v211 = vld [vmem:[#allocation5 + $0x460] sm:$0xff]
    %v212 = vld [vmem:[#allocation5 + $0x468] sm:$0xff]
    %v213 = vld [vmem:[#allocation5 + $0x470] sm:$0xff]
    %v214 = vld [vmem:[#allocation5 + $0x478] sm:$0xff]
    %v215 = vld [vmem:[#allocation5 + $0x480] sm:$0xff]
    %v216 = vld [vmem:[#allocation5 + $0x488] sm:$0xff]
    %v217 = vld [vmem:[#allocation5 + $0x490] sm:$0xff]
    %v218 = vld [vmem:[#allocation5 + $0x498] sm:$0xff]
    %v219 = vld [vmem:[#allocation5 + $0x4a0] sm:$0xff]
    %v220 = vld [vmem:[#allocation5 + $0x4a8] sm:$0xff]
    %v221 = vld [vmem:[#allocation5 + $0x4b0] sm:$0xff]
    %v222 = vld [vmem:[#allocation5 + $0x4b8] sm:$0xff]
    %v223 = vld [vmem:[#allocation5 + $0x4c0] sm:$0xff]
    %v224 = vld [vmem:[#allocation5 + $0x4c8] sm:$0xff]
    %v225 = vld [vmem:[#allocation5 + $0x4d0] sm:$0xff]
    %v226 = vld [vmem:[#allocation5 + $0x4d8] sm:$0xff]
    %v227 = vld [vmem:[#allocation5 + $0x4e0] sm:$0xff]
    %v228 = vld [vmem:[#allocation5 + $0x4e8] sm:$0xff]
    %v229 = vld [vmem:[#allocation5 + $0x4f0] sm:$0xff]
    %v230 = vld [vmem:[#allocation5 + $0x4f8] sm:$0xff]
    %v231 = vld [vmem:[#allocation5 + $0x500] sm:$0xff]
    %v232 = vld [vmem:[#allocation5 + $0x508] sm:$0xff]
    %v233 = vld [vmem:[#allocation5 + $0x510] sm:$0xff]
    %v234 = vld [vmem:[#allocation5 + $0x518] sm:$0xff]
    %v235 = vld [vmem:[#allocation5 + $0x520] sm:$0xff]
    %v236 = vld [vmem:[#allocation5 + $0x528] sm:$0xff]
    %v237 = vld [vmem:[#allocation5 + $0x530] sm:$0xff]
    %v238 = vld [vmem:[#allocation5 + $0x538] sm:$0xff]
    %v239 = vld [vmem:[#allocation5 + $0x540] sm:$0xff]
    %v240 = vld [vmem:[#allocation5 + $0x548] sm:$0xff]
    %v241 = vld [vmem:[#allocation5 + $0x550] sm:$0xff]
    %v242 = vld [vmem:[#allocation5 + $0x558] sm:$0xff]
    %v243 = vld [vmem:[#allocation5 + $0x560] sm:$0xff]
    %v244 = vld [vmem:[#allocation5 + $0x568] sm:$0xff]
    %v245 = vld [vmem:[#allocation5 + $0x570] sm:$0xff]
    %v246 = vld [vmem:[#allocation5 + $0x578] sm:$0xff]
    %v247 = vld [vmem:[#allocation5 + $0x580] sm:$0xff]
    %v248 = vld [vmem:[#allocation5 + $0x588] sm:$0xff]
    %v249 = vld [vmem:[#allocation5 + $0x590] sm:$0xff]
    %v250 = vld [vmem:[#allocation5 + $0x598] sm:$0xff]
    %v251 = vld [vmem:[#allocation5 + $0x5a0] sm:$0xff]
    %v252 = vld [vmem:[#allocation5 + $0x5a8] sm:$0xff]
    %v253 = vld [vmem:[#allocation5 + $0x5b0] sm:$0xff]
    %v254 = vld [vmem:[#allocation5 + $0x5b8] sm:$0xff]
    %v255 = vld [vmem:[#allocation5 + $0x5c0] sm:$0xff]
    %v256 = vld [vmem:[#allocation5 + $0x5c8] sm:$0xff]
    %v257 = vld [vmem:[#allocation5 + $0x5d0] sm:$0xff]
    %v258 = vld [vmem:[#allocation5 + $0x5d8] sm:$0xff]
    %v259 = vld [vmem:[#allocation5 + $0x5e0] sm:$0xff]
    %v260 = vld [vmem:[#allocation5 + $0x5e8] sm:$0xff]
    %v261 = vld [vmem:[#allocation5 + $0x5f0] sm:$0xff]
    %v262 = vld [vmem:[#allocation5 + $0x5f8] sm:$0xff]
    %v263 = vld [vmem:[#allocation5 + $0x600] sm:$0xff]
    %v264 = vld [vmem:[#allocation5 + $0x608] sm:$0xff]
    %v265 = vld [vmem:[#allocation5 + $0x610] sm:$0xff]
    %v266 = vld [vmem:[#allocation5 + $0x618] sm:$0xff]
    %v267 = vld [vmem:[#allocation5 + $0x620] sm:$0xff]
    %v268 = vld [vmem:[#allocation5 + $0x628] sm:$0xff]
    %v269 = vld [vmem:[#allocation5 + $0x630] sm:$0xff]
    %v270 = vld [vmem:[#allocation5 + $0x638] sm:$0xff]
    %v271 = vld [vmem:[#allocation5 + $0x640] sm:$0xff]
    %v272 = vld [vmem:[#allocation5 + $0x648] sm:$0xff]
    %v273 = vld [vmem:[#allocation5 + $0x650] sm:$0xff]
    %v274 = vld [vmem:[#allocation5 + $0x658] sm:$0xff]
    %v275 = vld [vmem:[#allocation5 + $0x660] sm:$0xff]
    %v276 = vld [vmem:[#allocation5 + $0x668] sm:$0xff]
    %v277 = vld [vmem:[#allocation5 + $0x670] sm:$0xff]
    %v278 = vld [vmem:[#allocation5 + $0x678] sm:$0xff]
    %v279 = vld [vmem:[#allocation5 + $0x680] sm:$0xff]
    %v280 = vld [vmem:[#allocation5 + $0x688] sm:$0xff]
    %v281 = vld [vmem:[#allocation5 + $0x690] sm:$0xff]
    %v282 = vld [vmem:[#allocation5 + $0x698] sm:$0xff]
    %v283 = vld [vmem:[#allocation5 + $0x6a0] sm:$0xff]
    %v284 = vld [vmem:[#allocation5 + $0x6a8] sm:$0xff]
    %v285 = vld [vmem:[#allocation5 + $0x6b0] sm:$0xff]
    %v286 = vld [vmem:[#allocation5 + $0x6b8] sm:$0xff]
    %v287 = vld [vmem:[#allocation5 + $0x6c0] sm:$0xff]
    %v288 = vld [vmem:[#allocation5 + $0x6c8] sm:$0xff]
    %v289 = vld [vmem:[#allocation5 + $0x6d0] sm:$0xff]
    %v290 = vld [vmem:[#allocation5 + $0x6d8] sm:$0xff]
    %v291 = vld [vmem:[#allocation5 + $0x6e0] sm:$0xff]
    %v292 = vld [vmem:[#allocation5 + $0x6e8] sm:$0xff]
    %v293 = vld [vmem:[#allocation5 + $0x6f0] sm:$0xff]
    %v294 = vld [vmem:[#allocation5 + $0x6f8] sm:$0xff]
    %v295 = vld [vmem:[#allocation5 + $0x700] sm:$0xff]
    %v296 = vld [vmem:[#allocation5 + $0x708] sm:$0xff]
    %v297 = vld [vmem:[#allocation5 + $0x710] sm:$0xff]
    %v298 = vld [vmem:[#allocation5 + $0x718] sm:$0xff]
    %v299 = vld [vmem:[#allocation5 + $0x720] sm:$0xff]
    %v300 = vld [vmem:[#allocation5 + $0x728] sm:$0xff]
    %v301 = vld [vmem:[#allocation5 + $0x730] sm:$0xff]
    %v302 = vld [vmem:[#allocation5 + $0x738] sm:$0xff]
    %v303 = vld [vmem:[#allocation5 + $0x740] sm:$0xff]
    %v304 = vld [vmem:[#allocation5 + $0x748] sm:$0xff]
    %v305 = vld [vmem:[#allocation5 + $0x750] sm:$0xff]
    %v306 = vld [vmem:[#allocation5 + $0x758] sm:$0xff]
    %v307 = vld [vmem:[#allocation5 + $0x760] sm:$0xff]
    %v308 = vld [vmem:[#allocation5 + $0x768] sm:$0xff]
    %v309 = vld [vmem:[#allocation5 + $0x770] sm:$0xff]
    %v310 = vld [vmem:[#allocation5 + $0x778] sm:$0xff]
    %v311 = vld [vmem:[#allocation5 + $0x780] sm:$0xff]
    %v312 = vld [vmem:[#allocation5 + $0x788] sm:$0xff]
    %v313 = vld [vmem:[#allocation5 + $0x790] sm:$0xff]
    %v314 = vld [vmem:[#allocation5 + $0x798] sm:$0xff]
    %v315 = vld [vmem:[#allocation5 + $0x7a0] sm:$0xff]
    %v316 = vld [vmem:[#allocation5 + $0x7a8] sm:$0xff]
    %v317 = vld [vmem:[#allocation5 + $0x7b0] sm:$0xff]
    %v318 = vld [vmem:[#allocation5 + $0x7b8] sm:$0xff]
    %v319 = vld [vmem:[#allocation5 + $0x7c0] sm:$0xff]
    %v320 = vld [vmem:[#allocation5 + $0x7c8] sm:$0xff]
    %v321 = vld [vmem:[#allocation5 + $0x7d0] sm:$0xff]
    %v322 = vld [vmem:[#allocation5 + $0x7d8] sm:$0xff]
    %v323 = vld [vmem:[#allocation5 + $0x7e0] sm:$0xff]
    %v324 = vld [vmem:[#allocation5 + $0x7e8] sm:$0xff]
    %v325 = vld [vmem:[#allocation5 + $0x7f0] sm:$0xff]
    %v326 = vld [vmem:[#allocation5 + $0x7f8] sm:$0xff]
    %v327 = vld [vmem:[#allocation5 + $0x800] sm:$0xff]
    %v328 = vld [vmem:[#allocation5 + $0x808] sm:$0xff]
    %v329 = vld [vmem:[#allocation5 + $0x810] sm:$0xff]
    %v330 = vld [vmem:[#allocation5 + $0x818] sm:$0xff]
    %v331 = vld [vmem:[#allocation5 + $0x820] sm:$0xff]
    %v332 = vld [vmem:[#allocation5 + $0x828] sm:$0xff]
    %v333 = vld [vmem:[#allocation5 + $0x830] sm:$0xff]
    %v334 = vld [vmem:[#allocation5 + $0x838] sm:$0xff]
    %v335 = vld [vmem:[#allocation5 + $0x840] sm:$0xff]
    %v336 = vld [vmem:[#allocation5 + $0x848] sm:$0xff]
    %v337 = vld [vmem:[#allocation5 + $0x850] sm:$0xff]
    %v338 = vld [vmem:[#allocation5 + $0x858] sm:$0xff]
    %v339 = vld [vmem:[#allocation5 + $0x860] sm:$0xff]
    %v340 = vld [vmem:[#allocation5 + $0x868] sm:$0xff]
    %v341 = vld [vmem:[#allocation5 + $0x870] sm:$0xff]
    %v342 = vld [vmem:[#allocation5 + $0x878] sm:$0xff]
    %v343 = vld [vmem:[#allocation5 + $0x880] sm:$0xff]
    %v344 = vld [vmem:[#allocation5 + $0x888] sm:$0xff]
    %v345 = vld [vmem:[#allocation5 + $0x890] sm:$0xff]
    %v346 = vld [vmem:[#allocation5 + $0x898] sm:$0xff]
    %v347 = vld [vmem:[#allocation5 + $0x8a0] sm:$0xff]
    %v348 = vld [vmem:[#allocation5 + $0x8a8] sm:$0xff]
    %v349 = vld [vmem:[#allocation5 + $0x8b0] sm:$0xff]
    %v350 = vld [vmem:[#allocation5 + $0x8b8] sm:$0xff]
    %v351 = vld [vmem:[#allocation5 + $0x8c0] sm:$0xff]
    %v352 = vld [vmem:[#allocation5 + $0x8c8] sm:$0xff]
    %v353 = vld [vmem:[#allocation5 + $0x8d0] sm:$0xff]
    %v354 = vld [vmem:[#allocation5 + $0x8d8] sm:$0xff]
    %v355 = vld [vmem:[#allocation5 + $0x8e0] sm:$0xff]
    %v356 = vld [vmem:[#allocation5 + $0x8e8] sm:$0xff]
    %v357 = vld [vmem:[#allocation5 + $0x8f0] sm:$0xff]
    %v358 = vld [vmem:[#allocation5 + $0x8f8] sm:$0xff]
    %v359 = vld [vmem:[#allocation5 + $0x900] sm:$0xff]
    %v360 = vld [vmem:[#allocation5 + $0x908] sm:$0xff]
    %v361 = vld [vmem:[#allocation5 + $0x910] sm:$0xff]
    %v362 = vld [vmem:[#allocation5 + $0x918] sm:$0xff]
    %v363 = vld [vmem:[#allocation5 + $0x920] sm:$0xff]
    %v364 = vld [vmem:[#allocation5 + $0x928] sm:$0xff]
    %v365 = vld [vmem:[#allocation5 + $0x930] sm:$0xff]
    %v366 = vld [vmem:[#allocation5 + $0x938] sm:$0xff]
    %v367 = vld [vmem:[#allocation5 + $0x940] sm:$0xff]
    %v368 = vld [vmem:[#allocation5 + $0x948] sm:$0xff]
    %v369 = vld [vmem:[#allocation5 + $0x950] sm:$0xff]
    %v370 = vld [vmem:[#allocation5 + $0x958] sm:$0xff]
    %v371 = vld [vmem:[#allocation5 + $0x960] sm:$0xff]
    %v372 = vld [vmem:[#allocation5 + $0x968] sm:$0xff]
    %v373 = vld [vmem:[#allocation5 + $0x970] sm:$0xff]
    %v374 = vld [vmem:[#allocation5 + $0x978] sm:$0xff]
    %v375 = vld [vmem:[#allocation5 + $0x980] sm:$0xff]
    %v376 = vld [vmem:[#allocation5 + $0x988] sm:$0xff]
    %v377 = vld [vmem:[#allocation5 + $0x990] sm:$0xff]
    %v378 = vld [vmem:[#allocation5 + $0x998] sm:$0xff]
    %v379 = vld [vmem:[#allocation5 + $0x9a0] sm:$0xff]
    %v380 = vld [vmem:[#allocation5 + $0x9a8] sm:$0xff]
    %v381 = vld [vmem:[#allocation5 + $0x9b0] sm:$0xff]
    %v382 = vld [vmem:[#allocation5 + $0x9b8] sm:$0xff]
    %v383 = vld [vmem:[#allocation5 + $0x9c0] sm:$0xff]
    %v384 = vld [vmem:[#allocation5 + $0x9c8] sm:$0xff]
    %v385 = vld [vmem:[#allocation5 + $0x9d0] sm:$0xff]
    %v386 = vld [vmem:[#allocation5 + $0x9d8] sm:$0xff]
    %v387 = vld [vmem:[#allocation5 + $0x9e0] sm:$0xff]
    %v388 = vld [vmem:[#allocation5 + $0x9e8] sm:$0xff]
    %v389 = vld [vmem:[#allocation5 + $0x9f0] sm:$0xff]
    %v390 = vld [vmem:[#allocation5 + $0x9f8] sm:$0xff]
    %v391 = vld [vmem:[#allocation5 + $0xa00] sm:$0xff]
    %v392 = vld [vmem:[#allocation5 + $0xa08] sm:$0xff]
    %v393 = vld [vmem:[#allocation5 + $0xa10] sm:$0xff]
    %v394 = vld [vmem:[#allocation5 + $0xa18] sm:$0xff]
    %v395 = vld [vmem:[#allocation5 + $0xa20] sm:$0xff]
    %v396 = vld [vmem:[#allocation5 + $0xa28] sm:$0xff]
    %v397 = vld [vmem:[#allocation5 + $0xa30] sm:$0xff]
    %v398 = vld [vmem:[#allocation5 + $0xa38] sm:$0xff]
    %v399 = vld [vmem:[#allocation5 + $0xa40] sm:$0xff]
    %v400 = vld [vmem:[#allocation5 + $0xa48] sm:$0xff]
    %v401 = vld [vmem:[#allocation5 + $0xa50] sm:$0xff]
    %v402 = vld [vmem:[#allocation5 + $0xa58] sm:$0xff]
    %v403 = vld [vmem:[#allocation5 + $0xa60] sm:$0xff]
    %v404 = vld [vmem:[#allocation5 + $0xa68] sm:$0xff]
    %v405 = vld [vmem:[#allocation5 + $0xa70] sm:$0xff]
    %v406 = vld [vmem:[#allocation5 + $0xa78] sm:$0xff]
    %v407 = vld [vmem:[#allocation5 + $0xa80] sm:$0xff]
    %v408 = vld [vmem:[#allocation5 + $0xa88] sm:$0xff]
    %v409 = vld [vmem:[#allocation5 + $0xa90] sm:$0xff]
    %v410 = vld [vmem:[#allocation5 + $0xa98] sm:$0xff]
    %v411 = vld [vmem:[#allocation5 + $0xaa0] sm:$0xff]
    %v412 = vld [vmem:[#allocation5 + $0xaa8] sm:$0xff]
    %v413 = vld [vmem:[#allocation5 + $0xab0] sm:$0xff]
    %v414 = vld [vmem:[#allocation5 + $0xab8] sm:$0xff]
    %v415 = vld [vmem:[#allocation5 + $0xac0] sm:$0xff]
    %v416 = vld [vmem:[#allocation5 + $0xac8] sm:$0xff]
    %v417 = vld [vmem:[#allocation5 + $0xad0] sm:$0xff]
    %v418 = vld [vmem:[#allocation5 + $0xad8] sm:$0xff]
    %v419 = vld [vmem:[#allocation5 + $0xae0] sm:$0xff]
    %v420 = vld [vmem:[#allocation5 + $0xae8] sm:$0xff]
    %v421 = vld [vmem:[#allocation5 + $0xaf0] sm:$0xff]
    %v422 = vld [vmem:[#allocation5 + $0xaf8] sm:$0xff]
    %v423 = vld [vmem:[#allocation5 + $0xb00] sm:$0xff]
    %v424 = vld [vmem:[#allocation5 + $0xb08] sm:$0xff]
    %v425 = vld [vmem:[#allocation5 + $0xb10] sm:$0xff]
    %v426 = vld [vmem:[#allocation5 + $0xb18] sm:$0xff]
    %v427 = vld [vmem:[#allocation5 + $0xb20] sm:$0xff]
    %v428 = vld [vmem:[#allocation5 + $0xb28] sm:$0xff]
    %v429 = vld [vmem:[#allocation5 + $0xb30] sm:$0xff]
    %v430 = vld [vmem:[#allocation5 + $0xb38] sm:$0xff]
    %v431 = vld [vmem:[#allocation5 + $0xb40] sm:$0xff]
    %v432 = vld [vmem:[#allocation5 + $0xb48] sm:$0xff]
    %v433 = vld [vmem:[#allocation5 + $0xb50] sm:$0xff]
    %v434 = vld [vmem:[#allocation5 + $0xb58] sm:$0xff]
    %v435 = vld [vmem:[#allocation5 + $0xb60] sm:$0xff]
    %v436 = vld [vmem:[#allocation5 + $0xb68] sm:$0xff]
    %v437 = vld [vmem:[#allocation5 + $0xb70] sm:$0xff]
    %v438 = vld [vmem:[#allocation5 + $0xb78] sm:$0xff]
    %v439 = vld [vmem:[#allocation5 + $0xb80] sm:$0xff]
    %v440 = vld [vmem:[#allocation5 + $0xb88] sm:$0xff]
    %v441 = vld [vmem:[#allocation5 + $0xb90] sm:$0xff]
    %v442 = vld [vmem:[#allocation5 + $0xb98] sm:$0xff]
    %v443 = vld [vmem:[#allocation5 + $0xba0] sm:$0xff]
    %v444 = vld [vmem:[#allocation5 + $0xba8] sm:$0xff]
    %v445 = vld [vmem:[#allocation5 + $0xbb0] sm:$0xff]
    %v446 = vld [vmem:[#allocation5 + $0xbb8] sm:$0xff]
    %v447 = vld [vmem:[#allocation5 + $0xbc0] sm:$0xff]
    %v448 = vld [vmem:[#allocation5 + $0xbc8] sm:$0xff]
    %v449 = vld [vmem:[#allocation5 + $0xbd0] sm:$0xff]
    %v450 = vld [vmem:[#allocation5 + $0xbd8] sm:$0xff]
    %v451 = vld [vmem:[#allocation5 + $0xbe0] sm:$0xff]
    %v452 = vld [vmem:[#allocation5 + $0xbe8] sm:$0xff]
    %v453 = vld [vmem:[#allocation5 + $0xbf0] sm:$0xff]
    %v454 = vld [vmem:[#allocation5 + $0xbf8] sm:$0xff]
    %v455 = vld [vmem:[#allocation5 + $0xc00] sm:$0xff]
    %v456 = vld [vmem:[#allocation5 + $0xc08] sm:$0xff]
    %v457 = vld [vmem:[#allocation5 + $0xc10] sm:$0xff]
    %v458 = vld [vmem:[#allocation5 + $0xc18] sm:$0xff]
    %v459 = vld [vmem:[#allocation5 + $0xc20] sm:$0xff]
    %v460 = vld [vmem:[#allocation5 + $0xc28] sm:$0xff]
    %v461 = vld [vmem:[#allocation5 + $0xc30] sm:$0xff]
    %v462 = vld [vmem:[#allocation5 + $0xc38] sm:$0xff]
    %v463 = vld [vmem:[#allocation5 + $0xc40] sm:$0xff]
    %v464 = vld [vmem:[#allocation5 + $0xc48] sm:$0xff]
    %v465 = vld [vmem:[#allocation5 + $0xc50] sm:$0xff]
    %v466 = vld [vmem:[#allocation5 + $0xc58] sm:$0xff]
    %v467 = vld [vmem:[#allocation5 + $0xc60] sm:$0xff]
    %v468 = vld [vmem:[#allocation5 + $0xc68] sm:$0xff]
    %v469 = vld [vmem:[#allocation5 + $0xc70] sm:$0xff]
    %v470 = vld [vmem:[#allocation5 + $0xc78] sm:$0xff]
    %v471 = vld [vmem:[#allocation5 + $0xc80] sm:$0xff]
    %v472 = vld [vmem:[#allocation5 + $0xc88] sm:$0xff]
    %v473 = vld [vmem:[#allocation5 + $0xc90] sm:$0xff]
    %v474 = vld [vmem:[#allocation5 + $0xc98] sm:$0xff]
    %v475 = vld [vmem:[#allocation5 + $0xca0] sm:$0xff]
    %v476 = vld [vmem:[#allocation5 + $0xca8] sm:$0xff]
    %v477 = vld [vmem:[#allocation5 + $0xcb0] sm:$0xff]
    %v478 = vld [vmem:[#allocation5 + $0xcb8] sm:$0xff]
    %v479 = vld [vmem:[#allocation5 + $0xcc0] sm:$0xff]
    %v480 = vld [vmem:[#allocation5 + $0xcc8] sm:$0xff]
    %v481 = vld [vmem:[#allocation5 + $0xcd0] sm:$0xff]
    %v482 = vld [vmem:[#allocation5 + $0xcd8] sm:$0xff]
    %v483 = vld [vmem:[#allocation5 + $0xce0] sm:$0xff]
    %v484 = vld [vmem:[#allocation5 + $0xce8] sm:$0xff]
    %v485 = vld [vmem:[#allocation5 + $0xcf0] sm:$0xff]
    %v486 = vld [vmem:[#allocation5 + $0xcf8] sm:$0xff]
    %v487 = vld [vmem:[#allocation5 + $0xd00] sm:$0xff]
    %v488 = vld [vmem:[#allocation5 + $0xd08] sm:$0xff]
    %v489 = vld [vmem:[#allocation5 + $0xd10] sm:$0xff]
    %v490 = vld [vmem:[#allocation5 + $0xd18] sm:$0xff]
    %v491 = vld [vmem:[#allocation5 + $0xd20] sm:$0xff]
    %v492 = vld [vmem:[#allocation5 + $0xd28] sm:$0xff]
    %v493 = vld [vmem:[#allocation5 + $0xd30] sm:$0xff]
    %v494 = vld [vmem:[#allocation5 + $0xd38] sm:$0xff]
    %v495 = vld [vmem:[#allocation5 + $0xd40] sm:$0xff]
    %v496 = vld [vmem:[#allocation5 + $0xd48] sm:$0xff]
    %v497 = vld [vmem:[#allocation5 + $0xd50] sm:$0xff]
    %v498 = vld [vmem:[#allocation5 + $0xd58] sm:$0xff]
    %v499 = vld [vmem:[#allocation5 + $0xd60] sm:$0xff]
    %v500 = vld [vmem:[#allocation5 + $0xd68] sm:$0xff]
    %v501 = vld [vmem:[#allocation5 + $0xd70] sm:$0xff]
    %v502 = vld [vmem:[#allocation5 + $0xd78] sm:$0xff]
    %v503 = vld [vmem:[#allocation5 + $0xd80] sm:$0xff]
    %v504 = vld [vmem:[#allocation5 + $0xd88] sm:$0xff]
    %v505 = vld [vmem:[#allocation5 + $0xd90] sm:$0xff]
    %v506 = vld [vmem:[#allocation5 + $0xd98] sm:$0xff]
    %v507 = vld [vmem:[#allocation5 + $0xda0] sm:$0xff]
    %v508 = vld [vmem:[#allocation5 + $0xda8] sm:$0xff]
    %v509 = vld [vmem:[#allocation5 + $0xdb0] sm:$0xff]
    %v510 = vld [vmem:[#allocation5 + $0xdb8] sm:$0xff]
    %v511 = vld [vmem:[#allocation5 + $0xdc0] sm:$0xff]
    %v512 = vld [vmem:[#allocation5 + $0xdc8] sm:$0xff]
    %v513 = vld [vmem:[#allocation5 + $0xdd0] sm:$0xff]
    %v514 = vld [vmem:[#allocation5 + $0xdd8] sm:$0xff]
    %v515 = vld [vmem:[#allocation5 + $0xde0] sm:$0xff]
    %v516 = vld [vmem:[#allocation5 + $0xde8] sm:$0xff]
    %v517 = vld [vmem:[#allocation5 + $0xdf0] sm:$0xff]
    %v518 = vld [vmem:[#allocation5 + $0xdf8] sm:$0xff]
    %v519 = vld [vmem:[#allocation5 + $0xe00] sm:$0xff]
    %v520 = vld [vmem:[#allocation5 + $0xe08] sm:$0xff]
    %v521 = vld [vmem:[#allocation5 + $0xe10] sm:$0xff]
    %v522 = vld [vmem:[#allocation5 + $0xe18] sm:$0xff]
    %v523 = vld [vmem:[#allocation5 + $0xe20] sm:$0xff]
    %v524 = vld [vmem:[#allocation5 + $0xe28] sm:$0xff]
    %v525 = vld [vmem:[#allocation5 + $0xe30] sm:$0xff]
    %v526 = vld [vmem:[#allocation5 + $0xe38] sm:$0xff]
    %v527 = vld [vmem:[#allocation5 + $0xe40] sm:$0xff]
    %v528 = vld [vmem:[#allocation5 + $0xe48] sm:$0xff]
    %v529 = vld [vmem:[#allocation5 + $0xe50] sm:$0xff]
    %v530 = vld [vmem:[#allocation5 + $0xe58] sm:$0xff]
    %v531 = vld [vmem:[#allocation5 + $0xe60] sm:$0xff]
    %v532 = vld [vmem:[#allocation5 + $0xe68] sm:$0xff]
    %v533 = vld [vmem:[#allocation5 + $0xe70] sm:$0xff]
    %v534 = vld [vmem:[#allocation5 + $0xe78] sm:$0xff]
    %v535 = vld [vmem:[#allocation5 + $0xe80] sm:$0xff]
    %v536 = vld [vmem:[#allocation5 + $0xe88] sm:$0xff]
    %v537 = vld [vmem:[#allocation5 + $0xe90] sm:$0xff]
    %v538 = vld [vmem:[#allocation5 + $0xe98] sm:$0xff]
    %v539 = vld [vmem:[#allocation5 + $0xea0] sm:$0xff]
    %v540 = vld [vmem:[#allocation5 + $0xea8] sm:$0xff]
    %v541 = vld [vmem:[#allocation5 + $0xeb0] sm:$0xff]
    %v542 = vld [vmem:[#allocation5 + $0xeb8] sm:$0xff]
    %v543 = vld [vmem:[#allocation5 + $0xec0] sm:$0xff]
    %v544 = vld [vmem:[#allocation5 + $0xec8] sm:$0xff]
    %v545 = vld [vmem:[#allocation5 + $0xed0] sm:$0xff]
    %v546 = vld [vmem:[#allocation5 + $0xed8] sm:$0xff]
    %v547 = vld [vmem:[#allocation5 + $0xee0] sm:$0xff]
    %v548 = vld [vmem:[#allocation5 + $0xee8] sm:$0xff]
    %v549 = vld [vmem:[#allocation5 + $0xef0] sm:$0xff]
    %v550 = vld [vmem:[#allocation5 + $0xef8] sm:$0xff]
    %v551 = vld [vmem:[#allocation5 + $0xf00] sm:$0xff]
    %v552 = vld [vmem:[#allocation5 + $0xf08] sm:$0xff]
    %v553 = vld [vmem:[#allocation5 + $0xf10] sm:$0xff]
    %v554 = vld [vmem:[#allocation5 + $0xf18] sm:$0xff]
    %v555 = vld [vmem:[#allocation5 + $0xf20] sm:$0xff]
    %v556 = vld [vmem:[#allocation5 + $0xf28] sm:$0xff]
    %v557 = vld [vmem:[#allocation5 + $0xf30] sm:$0xff]
    %v558 = vld [vmem:[#allocation5 + $0xf38] sm:$0xff]
    %v559 = vld [vmem:[#allocation5 + $0xf40] sm:$0xff]
    %v560 = vld [vmem:[#allocation5 + $0xf48] sm:$0xff]
    %v561 = vld [vmem:[#allocation5 + $0xf50] sm:$0xff]
    %v562 = vld [vmem:[#allocation5 + $0xf58] sm:$0xff]
    %v563 = vld [vmem:[#allocation5 + $0xf60] sm:$0xff]
    %v564 = vld [vmem:[#allocation5 + $0xf68] sm:$0xff]
    %v565 = vld [vmem:[#allocation5 + $0xf70] sm:$0xff]
    %v566 = vld [vmem:[#allocation5 + $0xf78] sm:$0xff]
    %v567 = vld [vmem:[#allocation5 + $0xf80] sm:$0xff]
    %v568 = vld [vmem:[#allocation5 + $0xf88] sm:$0xff]
    %v569 = vld [vmem:[#allocation5 + $0xf90] sm:$0xff]
    %v570 = vld [vmem:[#allocation5 + $0xf98] sm:$0xff]
    %v571 = vld [vmem:[#allocation5 + $0xfa0] sm:$0xff]
    %v572 = vld [vmem:[#allocation5 + $0xfa8] sm:$0xff]
    %v573 = vld [vmem:[#allocation5 + $0xfb0] sm:$0xff]
    %v574 = vld [vmem:[#allocation5 + $0xfb8] sm:$0xff]
    %v575 = vld [vmem:[#allocation5 + $0xfc0] sm:$0xff]
    %v576 = vld [vmem:[#allocation5 + $0xfc8] sm:$0xff]
    %v577 = vld [vmem:[#allocation5 + $0xfd0] sm:$0xff]
    %v578 = vld [vmem:[#allocation5 + $0xfd8] sm:$0xff]
    %v579 = vld [vmem:[#allocation5 + $0xfe0] sm:$0xff]
    %v580 = vld [vmem:[#allocation5 + $0xfe8] sm:$0xff]
    %v581 = vld [vmem:[#allocation5 + $0xff0] sm:$0xff]
    %v582 = vld [vmem:[#allocation5 + $0xff8] sm:$0xff]
    %v583 = vld [vmem:[#allocation5 + $0x1000] sm:$0xff]
    %v584 = vld [vmem:[#allocation5 + $0x1008] sm:$0xff]
    %v585 = vld [vmem:[#allocation5 + $0x1010] sm:$0xff]
    %v586 = vld [vmem:[#allocation5 + $0x1018] sm:$0xff]
    %v587 = vld [vmem:[#allocation5 + $0x1020] sm:$0xff]
    %v588 = vld [vmem:[#allocation5 + $0x1028] sm:$0xff]
    %v589 = vld [vmem:[#allocation5 + $0x1030] sm:$0xff]
    %v590 = vld [vmem:[#allocation5 + $0x1038] sm:$0xff]
    %v591 = vld [vmem:[#allocation5 + $0x1040] sm:$0xff]
    %v592 = vld [vmem:[#allocation5 + $0x1048] sm:$0xff]
    %v593 = vld [vmem:[#allocation5 + $0x1050] sm:$0xff]
    %v594 = vld [vmem:[#allocation5 + $0x1058] sm:$0xff]
    %v595 = vld [vmem:[#allocation5 + $0x1060] sm:$0xff]
    %v596 = vld [vmem:[#allocation5 + $0x1068] sm:$0xff]
    %v597 = vld [vmem:[#allocation5 + $0x1070] sm:$0xff]
    %v598 = vld [vmem:[#allocation5 + $0x1078] sm:$0xff]
    %v599 = vld [vmem:[#allocation5 + $0x1080] sm:$0xff]
    %v600 = vld [vmem:[#allocation5 + $0x1088] sm:$0xff]
    %v601 = vld [vmem:[#allocation5 + $0x1090] sm:$0xff]
    %v602 = vld [vmem:[#allocation5 + $0x1098] sm:$0xff]
    %v603 = vld [vmem:[#allocation5 + $0x10a0] sm:$0xff]
    %v604 = vld [vmem:[#allocation5 + $0x10a8] sm:$0xff]
    %v605 = vld [vmem:[#allocation5 + $0x10b0] sm:$0xff]
    %v606 = vld [vmem:[#allocation5 + $0x10b8] sm:$0xff]
    %v607 = vld [vmem:[#allocation5 + $0x10c0] sm:$0xff]
    %v608 = vld [vmem:[#allocation5 + $0x10c8] sm:$0xff]
    %v609 = vld [vmem:[#allocation5 + $0x10d0] sm:$0xff]
    %v610 = vld [vmem:[#allocation5 + $0x10d8] sm:$0xff]
    %v611 = vld [vmem:[#allocation5 + $0x10e0] sm:$0xff]
    %v612 = vld [vmem:[#allocation5 + $0x10e8] sm:$0xff]
    %v613 = vld [vmem:[#allocation5 + $0x10f0] sm:$0xff]
    %v614 = vld [vmem:[#allocation5 + $0x10f8] sm:$0xff]
    %v615 = vld [vmem:[#allocation5 + $0x1100] sm:$0xff]
    %v616 = vld [vmem:[#allocation5 + $0x1108] sm:$0xff]
    %v617 = vld [vmem:[#allocation5 + $0x1110] sm:$0xff]
    %v618 = vld [vmem:[#allocation5 + $0x1118] sm:$0xff]
    %v619 = vld [vmem:[#allocation5 + $0x1120] sm:$0xff]
    %v620 = vld [vmem:[#allocation5 + $0x1128] sm:$0xff]
    %v621 = vld [vmem:[#allocation5 + $0x1130] sm:$0xff]
    %v622 = vld [vmem:[#allocation5 + $0x1138] sm:$0xff]
    %v623 = vld [vmem:[#allocation5 + $0x1140] sm:$0xff]
    %v624 = vld [vmem:[#allocation5 + $0x1148] sm:$0xff]
    %v625 = vld [vmem:[#allocation5 + $0x1150] sm:$0xff]
    %v626 = vld [vmem:[#allocation5 + $0x1158] sm:$0xff]
    %v627 = vld [vmem:[#allocation5 + $0x1160] sm:$0xff]
    %v628 = vld [vmem:[#allocation5 + $0x1168] sm:$0xff]
    %v629 = vld [vmem:[#allocation5 + $0x1170] sm:$0xff]
    %v630 = vld [vmem:[#allocation5 + $0x1178] sm:$0xff]
    %v631 = vld [vmem:[#allocation5 + $0x1180] sm:$0xff]
    %v632 = vld [vmem:[#allocation5 + $0x1188] sm:$0xff]
    %v633 = vld [vmem:[#allocation5 + $0x1190] sm:$0xff]
    %v634 = vld [vmem:[#allocation5 + $0x1198] sm:$0xff]
    %v635 = vld [vmem:[#allocation5 + $0x11a0] sm:$0xff]
    %v636 = vld [vmem:[#allocation5 + $0x11a8] sm:$0xff]
    %v637 = vld [vmem:[#allocation5 + $0x11b0] sm:$0xff]
    %v638 = vld [vmem:[#allocation5 + $0x11b8] sm:$0xff]
    %v639 = vld [vmem:[#allocation5 + $0x11c0] sm:$0xff]
    %v640 = vld [vmem:[#allocation5 + $0x11c8] sm:$0xff]
    %v641 = vld [vmem:[#allocation5 + $0x11d0] sm:$0xff]
    %v642 = vld [vmem:[#allocation5 + $0x11d8] sm:$0xff]
    %v643 = vld [vmem:[#allocation5 + $0x11e0] sm:$0xff]
    %v644 = vld [vmem:[#allocation5 + $0x11e8] sm:$0xff]
    %v645 = vld [vmem:[#allocation5 + $0x11f0] sm:$0xff]
    %v646 = vld [vmem:[#allocation5 + $0x11f8] sm:$0xff]
    %v648 = vlaneseq
    %v649 = vshrl.u32 %v648, 7
    %v650 = vsub.s32 0, %v649
    %v651 = vrot.slane %v54, %v650
    %v652 = vlaneseq
    %v653 = vshrl.u32 %v652, 7
    %v654 = vsub.s32 1, %v653
    %v655 = vrot.slane %v54, %v654
    %v656 = vlaneseq
    %v657 = vshrl.u32 %v656, 7
    %v658 = vsub.s32 2, %v657
    %v659 = vrot.slane %v54, %v658
    %v660 = vlaneseq
    %v661 = vshrl.u32 %v660, 7
    %v662 = vsub.s32 3, %v661
    %v663 = vrot.slane %v54, %v662
    %v664 = vlaneseq
    %v665 = vshrl.u32 %v664, 7
    %v666 = vsub.s32 4, %v665
    %v667 = vrot.slane %v54, %v666
    %v668 = vlaneseq
    %v669 = vshrl.u32 %v668, 7
    %v670 = vsub.s32 5, %v669
    %v671 = vrot.slane %v54, %v670
    %678 = vmatprep.subr.mxu0 %v162
    %679 = vmatpush1.msra.mxu0 %v161
    %680 = vmatprep.subr.mxu0 %v156
    %681 = vmatpush1.msra.mxu0 %v155
    %682 = vmatprep.subr.mxu0 %v150
    %683 = vmatpush1.msra.mxu0 %v149
    %684 = vmatprep.subr.mxu0 %v144
    %685 = vmatpush1.msra.mxu0 %v143
    %686 = vmatprep.subr.mxu0 %v138
    %687 = vmatpush1.msra.mxu0 %v137
    %688 = vmatprep.subr.mxu0 %v132
    %689 = vmatpush1.msra.mxu0 %v131
    %690 = vmatprep.subr.mxu0 %v126
    %691 = vmatpush1.msra.mxu0 %v125
    %692 = vmatprep.subr.mxu0 %v120
    %693 = vmatpush1.msra.mxu0 %v119
    %694 = vmatprep.subr.mxu0 %v114
    %695 = vmatpush1.msra.mxu0 %v113
    %696 = vmatprep.subr.mxu0 %v108
    %697 = vmatpush1.msra.mxu0 %v107
    %698 = vmatprep.subr.mxu0 %v102
    %699 = vmatpush1.msra.mxu0 %v101
    %700 = vmatprep.subr.mxu0 %v96
    %701 = vmatpush1.msra.mxu0 %v95
    %702 = vmatprep.subr.mxu0 %v90
    %703 = vmatpush1.msra.mxu0 %v89
    %704 = vmatprep.subr.mxu0 %v84
    %705 = vmatpush1.msra.mxu0 %v83
    %706 = vmatprep.subr.mxu0 %v78
    %707 = vmatpush1.msra.mxu0 %v77
    %708 = vmatprep.subr.mxu0 %v72
    %709 = vmatpush1.msra.mxu0 %v71
    %710 = vmatprep.subr.mxu0 %v258
    %711 = vmatpush2.msra.mxu0 %v257
    %712 = vmatprep.subr.mxu0 %v252
    %713 = vmatpush2.msra.mxu0 %v251
    %714 = vmatprep.subr.mxu0 %v246
    %715 = vmatpush2.msra.mxu0 %v245
    %716 = vmatprep.subr.mxu0 %v240
    %717 = vmatpush2.msra.mxu0 %v239
    %718 = vmatprep.subr.mxu0 %v234
    %719 = vmatpush2.msra.mxu0 %v233
    %720 = vmatprep.subr.mxu0 %v228
    %721 = vmatpush2.msra.mxu0 %v227
    %722 = vmatprep.subr.mxu0 %v222
    %723 = vmatpush2.msra.mxu0 %v221
    %724 = vmatprep.subr.mxu0 %v216
    %725 = vmatpush2.msra.mxu0 %v215
    %726 = vmatprep.subr.mxu0 %v210
    %727 = vmatpush2.msra.mxu0 %v209
    %728 = vmatprep.subr.mxu0 %v204
    %729 = vmatpush2.msra.mxu0 %v203
    %730 = vmatprep.subr.mxu0 %v198
    %731 = vmatpush2.msra.mxu0 %v197
    %732 = vmatprep.subr.mxu0 %v192
    %733 = vmatpush2.msra.mxu0 %v191
    %734 = vmatprep.subr.mxu0 %v186
    %735 = vmatpush2.msra.mxu0 %v185
    %736 = vmatprep.subr.mxu0 %v180
    %737 = vmatpush2.msra.mxu0 %v179
    %738 = vmatprep.subr.mxu0 %v174
    %739 = vmatpush2.msra.mxu0 %v173
    %740 = vmatprep.subr.mxu0 %v168
    %741 = vmatpush2.msra.mxu0 %v167
    %742 = vmatprep.mubr.f32.mxu0 %v60
    %743 = vmatmul.mubr.f32.gmra.mxu0 %v59
    %v744 = vpop.f32.mrf.mxu0
    %v745 = vadd.f32 %v651, %v744
    %v746 = vpop.f32.mrf.mxu0
    %v747 = vadd.f32 %v655, %v746
    %748 = vmatprep.mubr.f32.mxu0 %v66
    %749 = vmatmul.mubr.f32.gmra.mxu0 %v65
    %v750 = vpop.f32.mrf.mxu0
    %v751 = vadd.f32 %v651, %v750
    %v752 = vpop.f32.mrf.mxu0
    %v753 = vadd.f32 %v655, %v752
    %754 = vdwg.mxu0
    %755 = vmatprep.subr.mxu0 %v354
    %756 = vmatpush1.msra.mxu0 %v353
    %757 = vmatprep.subr.mxu0 %v348
    %758 = vmatpush1.msra.mxu0 %v347
    %759 = vmatprep.subr.mxu0 %v342
    %760 = vmatpush1.msra.mxu0 %v341
    %761 = vmatprep.subr.mxu0 %v336
    %762 = vmatpush1.msra.mxu0 %v335
    %763 = vmatprep.subr.mxu0 %v330
    %764 = vmatpush1.msra.mxu0 %v329
    %765 = vmatprep.subr.mxu0 %v324
    %766 = vmatpush1.msra.mxu0 %v323
    %767 = vmatprep.subr.mxu0 %v318
    %768 = vmatpush1.msra.mxu0 %v317
    %769 = vmatprep.subr.mxu0 %v312
    %770 = vmatpush1.msra.mxu0 %v311
    %771 = vmatprep.subr.mxu0 %v306
    %772 = vmatpush1.msra.mxu0 %v305
    %773 = vmatprep.subr.mxu0 %v300
    %774 = vmatpush1.msra.mxu0 %v299
    %775 = vmatprep.subr.mxu0 %v294
    %776 = vmatpush1.msra.mxu0 %v293
    %777 = vmatprep.subr.mxu0 %v288
    %778 = vmatpush1.msra.mxu0 %v287
    %779 = vmatprep.subr.mxu0 %v282
    %780 = vmatpush1.msra.mxu0 %v281
    %781 = vmatprep.subr.mxu0 %v276
    %782 = vmatpush1.msra.mxu0 %v275
    %783 = vmatprep.subr.mxu0 %v270
    %784 = vmatpush1.msra.mxu0 %v269
    %785 = vmatprep.subr.mxu0 %v264
    %786 = vmatpush1.msra.mxu0 %v263
    %787 = vmatprep.subr.mxu0 %v450
    %788 = vmatpush2.msra.mxu0 %v449
    %789 = vmatprep.subr.mxu0 %v444
    %790 = vmatpush2.msra.mxu0 %v443
    %791 = vmatprep.subr.mxu0 %v438
    %792 = vmatpush2.msra.mxu0 %v437
    %793 = vmatprep.subr.mxu0 %v432
    %794 = vmatpush2.msra.mxu0 %v431
    %795 = vmatprep.subr.mxu0 %v426
    %796 = vmatpush2.msra.mxu0 %v425
    %797 = vmatprep.subr.mxu0 %v420
    %798 = vmatpush2.msra.mxu0 %v419
    %799 = vmatprep.subr.mxu0 %v414
    %800 = vmatpush2.msra.mxu0 %v413
    %801 = vmatprep.subr.mxu0 %v408
    %802 = vmatpush2.msra.mxu0 %v407
    %803 = vmatprep.subr.mxu0 %v402
    %804 = vmatpush2.msra.mxu0 %v401
    %805 = vmatprep.subr.mxu0 %v396
    %806 = vmatpush2.msra.mxu0 %v395
    %807 = vmatprep.subr.mxu0 %v390
    %808 = vmatpush2.msra.mxu0 %v389
    %809 = vmatprep.subr.mxu0 %v384
    %810 = vmatpush2.msra.mxu0 %v383
    %811 = vmatprep.subr.mxu0 %v378
    %812 = vmatpush2.msra.mxu0 %v377
    %813 = vmatprep.subr.mxu0 %v372
    %814 = vmatpush2.msra.mxu0 %v371
    %815 = vmatprep.subr.mxu0 %v366
    %816 = vmatpush2.msra.mxu0 %v365
    %817 = vmatprep.subr.mxu0 %v360
    %818 = vmatpush2.msra.mxu0 %v359
    %819 = vmatprep.mubr.f32.mxu0 %v62
    %820 = vmatmul.mubr.f32.gmra.mxu0 %v61
    %v821 = vpop.f32.mrf.mxu0
    %v822 = vadd.f32 %v745, %v821
    %v823 = vpop.f32.mrf.mxu0
    %v824 = vadd.f32 %v747, %v823
    %825 = vmatprep.mubr.f32.mxu0 %v68
    %826 = vmatmul.mubr.f32.gmra.mxu0 %v67
    %v827 = vpop.f32.mrf.mxu0
    %v828 = vadd.f32 %v751, %v827
    %v829 = vpop.f32.mrf.mxu0
    %v830 = vadd.f32 %v753, %v829
    %831 = vdwg.mxu0
    %832 = vmatprep.subr.mxu0 %v546
    %833 = vmatpush1.msra.mxu0 %v545
    %834 = vmatprep.subr.mxu0 %v540
    %835 = vmatpush1.msra.mxu0 %v539
    %836 = vmatprep.subr.mxu0 %v534
    %837 = vmatpush1.msra.mxu0 %v533
    %838 = vmatprep.subr.mxu0 %v528
    %839 = vmatpush1.msra.mxu0 %v527
    %840 = vmatprep.subr.mxu0 %v522
    %841 = vmatpush1.msra.mxu0 %v521
    %842 = vmatprep.subr.mxu0 %v516
    %843 = vmatpush1.msra.mxu0 %v515
    %844 = vmatprep.subr.mxu0 %v510
    %845 = vmatpush1.msra.mxu0 %v509
    %846 = vmatprep.subr.mxu0 %v504
    %847 = vmatpush1.msra.mxu0 %v503
    %848 = vmatprep.subr.mxu0 %v498
    %849 = vmatpush1.msra.mxu0 %v497
    %850 = vmatprep.subr.mxu0 %v492
    %851 = vmatpush1.msra.mxu0 %v491
    %852 = vmatprep.subr.mxu0 %v486
    %853 = vmatpush1.msra.mxu0 %v485
    %854 = vmatprep.subr.mxu0 %v480
    %855 = vmatpush1.msra.mxu0 %v479
    %856 = vmatprep.subr.mxu0 %v474
    %857 = vmatpush1.msra.mxu0 %v473
    %858 = vmatprep.subr.mxu0 %v468
    %859 = vmatpush1.msra.mxu0 %v467
    %860 = vmatprep.subr.mxu0 %v462
    %861 = vmatpush1.msra.mxu0 %v461
    %862 = vmatprep.subr.mxu0 %v456
    %863 = vmatpush1.msra.mxu0 %v455
    %864 = vmatprep.subr.mxu0 %v642
    %865 = vmatpush2.msra.mxu0 %v641
    %866 = vmatprep.subr.mxu0 %v636
    %867 = vmatpush2.msra.mxu0 %v635
    %868 = vmatprep.subr.mxu0 %v630
    %869 = vmatpush2.msra.mxu0 %v629
    %870 = vmatprep.subr.mxu0 %v624
    %871 = vmatpush2.msra.mxu0 %v623
    %872 = vmatprep.subr.mxu0 %v618
    %873 = vmatpush2.msra.mxu0 %v617
    %874 = vmatprep.subr.mxu0 %v612
    %875 = vmatpush2.msra.mxu0 %v611
    %876 = vmatprep.subr.mxu0 %v606
    %877 = vmatpush2.msra.mxu0 %v605
    %878 = vmatprep.subr.mxu0 %v600
    %879 = vmatpush2.msra.mxu0 %v599
    %880 = vmatprep.subr.mxu0 %v594
    %881 = vmatpush2.msra.mxu0 %v593
    %882 = vmatprep.subr.mxu0 %v588
    %883 = vmatpush2.msra.mxu0 %v587
    %884 = vmatprep.subr.mxu0 %v582
    %885 = vmatpush2.msra.mxu0 %v581
    %886 = vmatprep.subr.mxu0 %v576
    %887 = vmatpush2.msra.mxu0 %v575
    %888 = vmatprep.subr.mxu0 %v570
    %889 = vmatpush2.msra.mxu0 %v569
    %890 = vmatprep.subr.mxu0 %v564
    %891 = vmatpush2.msra.mxu0 %v563
    %892 = vmatprep.subr.mxu0 %v558
    %893 = vmatpush2.msra.mxu0 %v557
    %894 = vmatprep.subr.mxu0 %v552
    %895 = vmatpush2.msra.mxu0 %v551
    %896 = vmatprep.mubr.f32.mxu0 %v64
    %897 = vmatmul.mubr.f32.gmra.mxu0 %v63
    %v898 = vpop.f32.mrf.mxu0
    %v899 = vadd.f32 %v822, %v898
    %v900 = vpop.f32.mrf.mxu0
    %v901 = vadd.f32 %v824, %v900
    %902 = vmatprep.mubr.f32.mxu0 %v70
    %903 = vmatmul.mubr.f32.gmra.mxu0 %v69
    %v904 = vpop.f32.mrf.mxu0
    %v905 = vadd.f32 %v828, %v904
    %v906 = vpop.f32.mrf.mxu0
    %v907 = vadd.f32 %v830, %v906
    %908 = vdwg.mxu0
    %909 = vmatprep.subr.mxu0 %v164
    %910 = vmatpush1.msra.mxu0 %v163
    %911 = vmatprep.subr.mxu0 %v158
    %912 = vmatpush1.msra.mxu0 %v157
    %913 = vmatprep.subr.mxu0 %v152
    %914 = vmatpush1.msra.mxu0 %v151
    %915 = vmatprep.subr.mxu0 %v146
    %916 = vmatpush1.msra.mxu0 %v145
    %917 = vmatprep.subr.mxu0 %v140
    %918 = vmatpush1.msra.mxu0 %v139
    %919 = vmatprep.subr.mxu0 %v134
    %920 = vmatpush1.msra.mxu0 %v133
    %921 = vmatprep.subr.mxu0 %v128
    %922 = vmatpush1.msra.mxu0 %v127
    %923 = vmatprep.subr.mxu0 %v122
    %924 = vmatpush1.msra.mxu0 %v121
    %925 = vmatprep.subr.mxu0 %v116
    %926 = vmatpush1.msra.mxu0 %v115
    %927 = vmatprep.subr.mxu0 %v110
    %928 = vmatpush1.msra.mxu0 %v109
    %929 = vmatprep.subr.mxu0 %v104
    %930 = vmatpush1.msra.mxu0 %v103
    %931 = vmatprep.subr.mxu0 %v98
    %932 = vmatpush1.msra.mxu0 %v97
    %933 = vmatprep.subr.mxu0 %v92
    %934 = vmatpush1.msra.mxu0 %v91
    %935 = vmatprep.subr.mxu0 %v86
    %936 = vmatpush1.msra.mxu0 %v85
    %937 = vmatprep.subr.mxu0 %v80
    %938 = vmatpush1.msra.mxu0 %v79
    %939 = vmatprep.subr.mxu0 %v74
    %940 = vmatpush1.msra.mxu0 %v73
    %941 = vmatprep.subr.mxu0 %v260
    %942 = vmatpush2.msra.mxu0 %v259
    %943 = vmatprep.subr.mxu0 %v254
    %944 = vmatpush2.msra.mxu0 %v253
    %945 = vmatprep.subr.mxu0 %v248
    %946 = vmatpush2.msra.mxu0 %v247
    %947 = vmatprep.subr.mxu0 %v242
    %948 = vmatpush2.msra.mxu0 %v241
    %949 = vmatprep.subr.mxu0 %v236
    %950 = vmatpush2.msra.mxu0 %v235
    %951 = vmatprep.subr.mxu0 %v230
    %952 = vmatpush2.msra.mxu0 %v229
    %953 = vmatprep.subr.mxu0 %v224
    %954 = vmatpush2.msra.mxu0 %v223
    %955 = vmatprep.subr.mxu0 %v218
    %956 = vmatpush2.msra.mxu0 %v217
    %957 = vmatprep.subr.mxu0 %v212
    %958 = vmatpush2.msra.mxu0 %v211
    %959 = vmatprep.subr.mxu0 %v206
    %960 = vmatpush2.msra.mxu0 %v205
    %961 = vmatprep.subr.mxu0 %v200
    %962 = vmatpush2.msra.mxu0 %v199
    %963 = vmatprep.subr.mxu0 %v194
    %964 = vmatpush2.msra.mxu0 %v193
    %965 = vmatprep.subr.mxu0 %v188
    %966 = vmatpush2.msra.mxu0 %v187
    %967 = vmatprep.subr.mxu0 %v182
    %968 = vmatpush2.msra.mxu0 %v181
    %969 = vmatprep.subr.mxu0 %v176
    %970 = vmatpush2.msra.mxu0 %v175
    %971 = vmatprep.subr.mxu0 %v170
    %972 = vmatpush2.msra.mxu0 %v169
    %973 = vmatprep.mubr.f32.mxu0 %v60
    %974 = vmatmul.mubr.f32.gmra.mxu0 %v59
    %v975 = vpop.f32.mrf.mxu0
    %v976 = vadd.f32 %v659, %v975
    %v977 = vpop.f32.mrf.mxu0
    %v978 = vadd.f32 %v663, %v977
    %979 = vmatprep.mubr.f32.mxu0 %v66
    %980 = vmatmul.mubr.f32.gmra.mxu0 %v65
    %v981 = vpop.f32.mrf.mxu0
    %v982 = vadd.f32 %v659, %v981
    %v983 = vpop.f32.mrf.mxu0
    %v984 = vadd.f32 %v663, %v983
    %985 = vdwg.mxu0
    %986 = vmatprep.subr.mxu0 %v356
    %987 = vmatpush1.msra.mxu0 %v355
    %988 = vmatprep.subr.mxu0 %v350
    %989 = vmatpush1.msra.mxu0 %v349
    %990 = vmatprep.subr.mxu0 %v344
    %991 = vmatpush1.msra.mxu0 %v343
    %992 = vmatprep.subr.mxu0 %v338
    %993 = vmatpush1.msra.mxu0 %v337
    %994 = vmatprep.subr.mxu0 %v332
    %995 = vmatpush1.msra.mxu0 %v331
    %996 = vmatprep.subr.mxu0 %v326
    %997 = vmatpush1.msra.mxu0 %v325
    %998 = vmatprep.subr.mxu0 %v320
    %999 = vmatpush1.msra.mxu0 %v319
    %1000 = vmatprep.subr.mxu0 %v314
    %1001 = vmatpush1.msra.mxu0 %v313
    %1002 = vmatprep.subr.mxu0 %v308
    %1003 = vmatpush1.msra.mxu0 %v307
    %1004 = vmatprep.subr.mxu0 %v302
    %1005 = vmatpush1.msra.mxu0 %v301
    %1006 = vmatprep.subr.mxu0 %v296
    %1007 = vmatpush1.msra.mxu0 %v295
    %1008 = vmatprep.subr.mxu0 %v290
    %1009 = vmatpush1.msra.mxu0 %v289
    %1010 = vmatprep.subr.mxu0 %v284
    %1011 = vmatpush1.msra.mxu0 %v283
    %1012 = vmatprep.subr.mxu0 %v278
    %1013 = vmatpush1.msra.mxu0 %v277
    %1014 = vmatprep.subr.mxu0 %v272
    %1015 = vmatpush1.msra.mxu0 %v271
    %1016 = vmatprep.subr.mxu0 %v266
    %1017 = vmatpush1.msra.mxu0 %v265
    %1018 = vmatprep.subr.mxu0 %v452
    %1019 = vmatpush2.msra.mxu0 %v451
    %1020 = vmatprep.subr.mxu0 %v446
    %1021 = vmatpush2.msra.mxu0 %v445
    %1022 = vmatprep.subr.mxu0 %v440
    %1023 = vmatpush2.msra.mxu0 %v439
    %1024 = vmatprep.subr.mxu0 %v434
    %1025 = vmatpush2.msra.mxu0 %v433
    %1026 = vmatprep.subr.mxu0 %v428
    %1027 = vmatpush2.msra.mxu0 %v427
    %1028 = vmatprep.subr.mxu0 %v422
    %1029 = vmatpush2.msra.mxu0 %v421
    %1030 = vmatprep.subr.mxu0 %v416
    %1031 = vmatpush2.msra.mxu0 %v415
    %1032 = vmatprep.subr.mxu0 %v410
    %1033 = vmatpush2.msra.mxu0 %v409
    %1034 = vmatprep.subr.mxu0 %v404
    %1035 = vmatpush2.msra.mxu0 %v403
    %1036 = vmatprep.subr.mxu0 %v398
    %1037 = vmatpush2.msra.mxu0 %v397
    %1038 = vmatprep.subr.mxu0 %v392
    %1039 = vmatpush2.msra.mxu0 %v391
    %1040 = vmatprep.subr.mxu0 %v386
    %1041 = vmatpush2.msra.mxu0 %v385
    %1042 = vmatprep.subr.mxu0 %v380
    %1043 = vmatpush2.msra.mxu0 %v379
    %1044 = vmatprep.subr.mxu0 %v374
    %1045 = vmatpush2.msra.mxu0 %v373
    %1046 = vmatprep.subr.mxu0 %v368
    %1047 = vmatpush2.msra.mxu0 %v367
    %1048 = vmatprep.subr.mxu0 %v362
    %1049 = vmatpush2.msra.mxu0 %v361
    %1050 = vmatprep.mubr.f32.mxu0 %v62
    %1051 = vmatmul.mubr.f32.gmra.mxu0 %v61
    %v1052 = vpop.f32.mrf.mxu0
    %v1053 = vadd.f32 %v976, %v1052
    %v1054 = vpop.f32.mrf.mxu0
    %v1055 = vadd.f32 %v978, %v1054
    %1056 = vmatprep.mubr.f32.mxu0 %v68
    %1057 = vmatmul.mubr.f32.gmra.mxu0 %v67
    %v1058 = vpop.f32.mrf.mxu0
    %v1059 = vadd.f32 %v982, %v1058
    %v1060 = vpop.f32.mrf.mxu0
    %v1061 = vadd.f32 %v984, %v1060
    %1062 = vdwg.mxu0
    %1063 = vmatprep.subr.mxu0 %v548
    %1064 = vmatpush1.msra.mxu0 %v547
    %1065 = vmatprep.subr.mxu0 %v542
    %1066 = vmatpush1.msra.mxu0 %v541
    %1067 = vmatprep.subr.mxu0 %v536
    %1068 = vmatpush1.msra.mxu0 %v535
    %1069 = vmatprep.subr.mxu0 %v530
    %1070 = vmatpush1.msra.mxu0 %v529
    %1071 = vmatprep.subr.mxu0 %v524
    %1072 = vmatpush1.msra.mxu0 %v523
    %1073 = vmatprep.subr.mxu0 %v518
    %1074 = vmatpush1.msra.mxu0 %v517
    %1075 = vmatprep.subr.mxu0 %v512
    %1076 = vmatpush1.msra.mxu0 %v511
    %1077 = vmatprep.subr.mxu0 %v506
    %1078 = vmatpush1.msra.mxu0 %v505
    %1079 = vmatprep.subr.mxu0 %v500
    %1080 = vmatpush1.msra.mxu0 %v499
    %1081 = vmatprep.subr.mxu0 %v494
    %1082 = vmatpush1.msra.mxu0 %v493
    %1083 = vmatprep.subr.mxu0 %v488
    %1084 = vmatpush1.msra.mxu0 %v487
    %1085 = vmatprep.subr.mxu0 %v482
    %1086 = vmatpush1.msra.mxu0 %v481
    %1087 = vmatprep.subr.mxu0 %v476
    %1088 = vmatpush1.msra.mxu0 %v475
    %1089 = vmatprep.subr.mxu0 %v470
    %1090 = vmatpush1.msra.mxu0 %v469
    %1091 = vmatprep.subr.mxu0 %v464
    %1092 = vmatpush1.msra.mxu0 %v463
    %1093 = vmatprep.subr.mxu0 %v458
    %1094 = vmatpush1.msra.mxu0 %v457
    %1095 = vmatprep.subr.mxu0 %v644
    %1096 = vmatpush2.msra.mxu0 %v643
    %1097 = vmatprep.subr.mxu0 %v638
    %1098 = vmatpush2.msra.mxu0 %v637
    %1099 = vmatprep.subr.mxu0 %v632
    %1100 = vmatpush2.msra.mxu0 %v631
    %1101 = vmatprep.subr.mxu0 %v626
    %1102 = vmatpush2.msra.mxu0 %v625
    %1103 = vmatprep.subr.mxu0 %v620
    %1104 = vmatpush2.msra.mxu0 %v619
    %1105 = vmatprep.subr.mxu0 %v614
    %1106 = vmatpush2.msra.mxu0 %v613
    %1107 = vmatprep.subr.mxu0 %v608
    %1108 = vmatpush2.msra.mxu0 %v607
    %1109 = vmatprep.subr.mxu0 %v602
    %1110 = vmatpush2.msra.mxu0 %v601
    %1111 = vmatprep.subr.mxu0 %v596
    %1112 = vmatpush2.msra.mxu0 %v595
    %1113 = vmatprep.subr.mxu0 %v590
    %1114 = vmatpush2.msra.mxu0 %v589
    %1115 = vmatprep.subr.mxu0 %v584
    %1116 = vmatpush2.msra.mxu0 %v583
    %1117 = vmatprep.subr.mxu0 %v578
    %1118 = vmatpush2.msra.mxu0 %v577
    %1119 = vmatprep.subr.mxu0 %v572
    %1120 = vmatpush2.msra.mxu0 %v571
    %1121 = vmatprep.subr.mxu0 %v566
    %1122 = vmatpush2.msra.mxu0 %v565
    %1123 = vmatprep.subr.mxu0 %v560
    %1124 = vmatpush2.msra.mxu0 %v559
    %1125 = vmatprep.subr.mxu0 %v554
    %1126 = vmatpush2.msra.mxu0 %v553
    %1127 = vmatprep.mubr.f32.mxu0 %v64
    %1128 = vmatmul.mubr.f32.gmra.mxu0 %v63
    %v1129 = vpop.f32.mrf.mxu0
    %v1130 = vadd.f32 %v1053, %v1129
    %v1131 = vpop.f32.mrf.mxu0
    %v1132 = vadd.f32 %v1055, %v1131
    %1133 = vmatprep.mubr.f32.mxu0 %v70
    %1134 = vmatmul.mubr.f32.gmra.mxu0 %v69
    %v1135 = vpop.f32.mrf.mxu0
    %v1136 = vadd.f32 %v1059, %v1135
    %v1137 = vpop.f32.mrf.mxu0
    %v1138 = vadd.f32 %v1061, %v1137
    %1139 = vdwg.mxu0
    %1140 = vmatprep.subr.mxu0 %v166
    %1141 = vmatpush1.msra.mxu0 %v165
    %1142 = vmatprep.subr.mxu0 %v160
    %1143 = vmatpush1.msra.mxu0 %v159
    %1144 = vmatprep.subr.mxu0 %v154
    %1145 = vmatpush1.msra.mxu0 %v153
    %1146 = vmatprep.subr.mxu0 %v148
    %1147 = vmatpush1.msra.mxu0 %v147
    %1148 = vmatprep.subr.mxu0 %v142
    %1149 = vmatpush1.msra.mxu0 %v141
    %1150 = vmatprep.subr.mxu0 %v136
    %1151 = vmatpush1.msra.mxu0 %v135
    %1152 = vmatprep.subr.mxu0 %v130
    %1153 = vmatpush1.msra.mxu0 %v129
    %1154 = vmatprep.subr.mxu0 %v124
    %1155 = vmatpush1.msra.mxu0 %v123
    %1156 = vmatprep.subr.mxu0 %v118
    %1157 = vmatpush1.msra.mxu0 %v117
    %1158 = vmatprep.subr.mxu0 %v112
    %1159 = vmatpush1.msra.mxu0 %v111
    %1160 = vmatprep.subr.mxu0 %v106
    %1161 = vmatpush1.msra.mxu0 %v105
    %1162 = vmatprep.subr.mxu0 %v100
    %1163 = vmatpush1.msra.mxu0 %v99
    %1164 = vmatprep.subr.mxu0 %v94
    %1165 = vmatpush1.msra.mxu0 %v93
    %1166 = vmatprep.subr.mxu0 %v88
    %1167 = vmatpush1.msra.mxu0 %v87
    %1168 = vmatprep.subr.mxu0 %v82
    %1169 = vmatpush1.msra.mxu0 %v81
    %1170 = vmatprep.subr.mxu0 %v76
    %1171 = vmatpush1.msra.mxu0 %v75
    %1172 = vmatprep.subr.mxu0 %v262
    %1173 = vmatpush2.msra.mxu0 %v261
    %1174 = vmatprep.subr.mxu0 %v256
    %1175 = vmatpush2.msra.mxu0 %v255
    %1176 = vmatprep.subr.mxu0 %v250
    %1177 = vmatpush2.msra.mxu0 %v249
    %1178 = vmatprep.subr.mxu0 %v244
    %1179 = vmatpush2.msra.mxu0 %v243
    %1180 = vmatprep.subr.mxu0 %v238
    %1181 = vmatpush2.msra.mxu0 %v237
    %1182 = vmatprep.subr.mxu0 %v232
    %1183 = vmatpush2.msra.mxu0 %v231
    %1184 = vmatprep.subr.mxu0 %v226
    %1185 = vmatpush2.msra.mxu0 %v225
    %1186 = vmatprep.subr.mxu0 %v220
    %1187 = vmatpush2.msra.mxu0 %v219
    %1188 = vmatprep.subr.mxu0 %v214
    %1189 = vmatpush2.msra.mxu0 %v213
    %1190 = vmatprep.subr.mxu0 %v208
    %1191 = vmatpush2.msra.mxu0 %v207
    %1192 = vmatprep.subr.mxu0 %v202
    %1193 = vmatpush2.msra.mxu0 %v201
    %1194 = vmatprep.subr.mxu0 %v196
    %1195 = vmatpush2.msra.mxu0 %v195
    %1196 = vmatprep.subr.mxu0 %v190
    %1197 = vmatpush2.msra.mxu0 %v189
    %1198 = vmatprep.subr.mxu0 %v184
    %1199 = vmatpush2.msra.mxu0 %v183
    %1200 = vmatprep.subr.mxu0 %v178
    %1201 = vmatpush2.msra.mxu0 %v177
    %1202 = vmatprep.subr.mxu0 %v172
    %1203 = vmatpush2.msra.mxu0 %v171
    %1204 = vmatprep.mubr.f32.mxu0 %v60
    %1205 = vmatmul.mubr.f32.gmra.mxu0 %v59
    %v1206 = vpop.f32.mrf.mxu0
    %v1207 = vadd.f32 %v667, %v1206
    %v1208 = vpop.f32.mrf.mxu0
    %v1209 = vadd.f32 %v671, %v1208
    %1210 = vmatprep.mubr.f32.mxu0 %v66
    %1211 = vmatmul.mubr.f32.gmra.mxu0 %v65
    %v1212 = vpop.f32.mrf.mxu0
    %v1213 = vadd.f32 %v667, %v1212
    %v1214 = vpop.f32.mrf.mxu0
    %v1215 = vadd.f32 %v671, %v1214
    %1216 = vdwg.mxu0
    %1217 = vmatprep.subr.mxu0 %v358
    %1218 = vmatpush1.msra.mxu0 %v357
    %1219 = vmatprep.subr.mxu0 %v352
    %1220 = vmatpush1.msra.mxu0 %v351
    %1221 = vmatprep.subr.mxu0 %v346
    %1222 = vmatpush1.msra.mxu0 %v345
    %1223 = vmatprep.subr.mxu0 %v340
    %1224 = vmatpush1.msra.mxu0 %v339
    %1225 = vmatprep.subr.mxu0 %v334
    %1226 = vmatpush1.msra.mxu0 %v333
    %1227 = vmatprep.subr.mxu0 %v328
    %1228 = vmatpush1.msra.mxu0 %v327
    %1229 = vmatprep.subr.mxu0 %v322
    %1230 = vmatpush1.msra.mxu0 %v321
    %1231 = vmatprep.subr.mxu0 %v316
    %1232 = vmatpush1.msra.mxu0 %v315
    %1233 = vmatprep.subr.mxu0 %v310
    %1234 = vmatpush1.msra.mxu0 %v309
    %1235 = vmatprep.subr.mxu0 %v304
    %1236 = vmatpush1.msra.mxu0 %v303
    %1237 = vmatprep.subr.mxu0 %v298
    %1238 = vmatpush1.msra.mxu0 %v297
    %1239 = vmatprep.subr.mxu0 %v292
    %1240 = vmatpush1.msra.mxu0 %v291
    %1241 = vmatprep.subr.mxu0 %v286
    %1242 = vmatpush1.msra.mxu0 %v285
    %1243 = vmatprep.subr.mxu0 %v280
    %1244 = vmatpush1.msra.mxu0 %v279
    %1245 = vmatprep.subr.mxu0 %v274
    %1246 = vmatpush1.msra.mxu0 %v273
    %1247 = vmatprep.subr.mxu0 %v268
    %1248 = vmatpush1.msra.mxu0 %v267
    %1249 = vmatprep.subr.mxu0 %v454
    %1250 = vmatpush2.msra.mxu0 %v453
    %1251 = vmatprep.subr.mxu0 %v448
    %1252 = vmatpush2.msra.mxu0 %v447
    %1253 = vmatprep.subr.mxu0 %v442
    %1254 = vmatpush2.msra.mxu0 %v441
    %1255 = vmatprep.subr.mxu0 %v436
    %1256 = vmatpush2.msra.mxu0 %v435
    %1257 = vmatprep.subr.mxu0 %v430
    %1258 = vmatpush2.msra.mxu0 %v429
    %1259 = vmatprep.subr.mxu0 %v424
    %1260 = vmatpush2.msra.mxu0 %v423
    %1261 = vmatprep.subr.mxu0 %v418
    %1262 = vmatpush2.msra.mxu0 %v417
    %1263 = vmatprep.subr.mxu0 %v412
    %1264 = vmatpush2.msra.mxu0 %v411
    %1265 = vmatprep.subr.mxu0 %v406
    %1266 = vmatpush2.msra.mxu0 %v405
    %1267 = vmatprep.subr.mxu0 %v400
    %1268 = vmatpush2.msra.mxu0 %v399
    %1269 = vmatprep.subr.mxu0 %v394
    %1270 = vmatpush2.msra.mxu0 %v393
    %1271 = vmatprep.subr.mxu0 %v388
    %1272 = vmatpush2.msra.mxu0 %v387
    %1273 = vmatprep.subr.mxu0 %v382
    %1274 = vmatpush2.msra.mxu0 %v381
    %1275 = vmatprep.subr.mxu0 %v376
    %1276 = vmatpush2.msra.mxu0 %v375
    %1277 = vmatprep.subr.mxu0 %v370
    %1278 = vmatpush2.msra.mxu0 %v369
    %1279 = vmatprep.subr.mxu0 %v364
    %1280 = vmatpush2.msra.mxu0 %v363
    %1281 = vmatprep.mubr.f32.mxu0 %v62
    %1282 = vmatmul.mubr.f32.gmra.mxu0 %v61
    %v1283 = vpop.f32.mrf.mxu0
    %v1284 = vadd.f32 %v1207, %v1283
    %v1285 = vpop.f32.mrf.mxu0
    %v1286 = vadd.f32 %v1209, %v1285
    %1287 = vmatprep.mubr.f32.mxu0 %v68
    %1288 = vmatmul.mubr.f32.gmra.mxu0 %v67
    %v1289 = vpop.f32.mrf.mxu0
    %v1290 = vadd.f32 %v1213, %v1289
    %v1291 = vpop.f32.mrf.mxu0
    %v1292 = vadd.f32 %v1215, %v1291
    %1293 = vdwg.mxu0
    %1294 = vmatprep.subr.mxu0 %v550
    %1295 = vmatpush1.msra.mxu0 %v549
    %1296 = vmatprep.subr.mxu0 %v544
    %1297 = vmatpush1.msra.mxu0 %v543
    %1298 = vmatprep.subr.mxu0 %v538
    %1299 = vmatpush1.msra.mxu0 %v537
    %1300 = vmatprep.subr.mxu0 %v532
    %1301 = vmatpush1.msra.mxu0 %v531
    %1302 = vmatprep.subr.mxu0 %v526
    %1303 = vmatpush1.msra.mxu0 %v525
    %1304 = vmatprep.subr.mxu0 %v520
    %1305 = vmatpush1.msra.mxu0 %v519
    %1306 = vmatprep.subr.mxu0 %v514
    %1307 = vmatpush1.msra.mxu0 %v513
    %1308 = vmatprep.subr.mxu0 %v508
    %1309 = vmatpush1.msra.mxu0 %v507
    %1310 = vmatprep.subr.mxu0 %v502
    %1311 = vmatpush1.msra.mxu0 %v501
    %1312 = vmatprep.subr.mxu0 %v496
    %1313 = vmatpush1.msra.mxu0 %v495
    %1314 = vmatprep.subr.mxu0 %v490
    %1315 = vmatpush1.msra.mxu0 %v489
    %1316 = vmatprep.subr.mxu0 %v484
    %1317 = vmatpush1.msra.mxu0 %v483
    %1318 = vmatprep.subr.mxu0 %v478
    %1319 = vmatpush1.msra.mxu0 %v477
    %1320 = vmatprep.subr.mxu0 %v472
    %1321 = vmatpush1.msra.mxu0 %v471
    %1322 = vmatprep.subr.mxu0 %v466
    %1323 = vmatpush1.msra.mxu0 %v465
    %1324 = vmatprep.subr.mxu0 %v460
    %1325 = vmatpush1.msra.mxu0 %v459
    %1326 = vmatprep.subr.mxu0 %v646
    %1327 = vmatpush2.msra.mxu0 %v645
    %1328 = vmatprep.subr.mxu0 %v640
    %1329 = vmatpush2.msra.mxu0 %v639
    %1330 = vmatprep.subr.mxu0 %v634
    %1331 = vmatpush2.msra.mxu0 %v633
    %1332 = vmatprep.subr.mxu0 %v628
    %1333 = vmatpush2.msra.mxu0 %v627
    %1334 = vmatprep.subr.mxu0 %v622
    %1335 = vmatpush2.msra.mxu0 %v621
    %1336 = vmatprep.subr.mxu0 %v616
    %1337 = vmatpush2.msra.mxu0 %v615
    %1338 = vmatprep.subr.mxu0 %v610
    %1339 = vmatpush2.msra.mxu0 %v609
    %1340 = vmatprep.subr.mxu0 %v604
    %1341 = vmatpush2.msra.mxu0 %v603
    %1342 = vmatprep.subr.mxu0 %v598
    %1343 = vmatpush2.msra.mxu0 %v597
    %1344 = vmatprep.subr.mxu0 %v592
    %1345 = vmatpush2.msra.mxu0 %v591
    %1346 = vmatprep.subr.mxu0 %v586
    %1347 = vmatpush2.msra.mxu0 %v585
    %1348 = vmatprep.subr.mxu0 %v580
    %1349 = vmatpush2.msra.mxu0 %v579
    %1350 = vmatprep.subr.mxu0 %v574
    %1351 = vmatpush2.msra.mxu0 %v573
    %1352 = vmatprep.subr.mxu0 %v568
    %1353 = vmatpush2.msra.mxu0 %v567
    %1354 = vmatprep.subr.mxu0 %v562
    %1355 = vmatpush2.msra.mxu0 %v561
    %1356 = vmatprep.subr.mxu0 %v556
    %1357 = vmatpush2.msra.mxu0 %v555
    %1358 = vmatprep.mubr.f32.mxu0 %v64
    %1359 = vmatmul.mubr.f32.gmra.mxu0 %v63
    %v1360 = vpop.f32.mrf.mxu0
    %v1361 = vadd.f32 %v1284, %v1360
    %v1362 = vpop.f32.mrf.mxu0
    %v1363 = vadd.f32 %v1286, %v1362
    %1364 = vmatprep.mubr.f32.mxu0 %v70
    %1365 = vmatmul.mubr.f32.gmra.mxu0 %v69
    %v1366 = vpop.f32.mrf.mxu0
    %v1367 = vadd.f32 %v1290, %v1366
    %v1368 = vpop.f32.mrf.mxu0
    %v1369 = vadd.f32 %v1292, %v1368
    %1370 = vdwg.mxu0
    %v1371 = vadd.f32 %v899, %v901
    %v1372 = vadd.f32 %v1371, %v1130
    %v1373 = vadd.f32 %v1372, %v1132
    %v1374 = vadd.f32 %v1373, %v1361
    %v1375 = vadd.f32 %v1374, %v1363
    %1376 = vadd.xlane.f32.xlu0 %v1375
    %v1377 = vpop.xlane.xlu0 %1376
    %v1378 = vadd.f32 %v905, %v907
    %v1379 = vadd.f32 %v1378, %v1136
    %v1380 = vadd.f32 %v1379, %v1138
    %v1381 = vadd.f32 %v1380, %v1367
    %v1382 = vadd.f32 %v1381, %v1369
    %1383 = vadd.xlane.f32.xlu0 %v1382
    %v1384 = vpop.xlane.xlu0 %1383
    %v1385 = vrcp.pop 768.0
    %v1386 = vmul.f32 %v1377, %v1385
    %v1387 = vmul.f32 %v1384, %v1385
    %v1388 = vsub.f32 %v899, %v1386
    %v1389 = vsub.f32 %v901, %v1386
    %v1390 = vsub.f32 %v1130, %v1386
    %v1391 = vsub.f32 %v1132, %v1386
    %v1392 = vsub.f32 %v1361, %v1386
    %v1393 = vsub.f32 %v1363, %v1386
    %v1394 = vsub.f32 %v905, %v1387
    %v1395 = vsub.f32 %v907, %v1387
    %v1396 = vsub.f32 %v1136, %v1387
    %v1397 = vsub.f32 %v1138, %v1387
    %v1398 = vsub.f32 %v1367, %v1387
    %v1399 = vsub.f32 %v1369, %v1387
    %v1400 = vmul.f32 %v1388, %v1388
    %v1401 = vmul.f32 %v1389, %v1389
    %v1402 = vmul.f32 %v1390, %v1390
    %v1403 = vmul.f32 %v1391, %v1391
    %v1404 = vmul.f32 %v1392, %v1392
    %v1405 = vmul.f32 %v1393, %v1393
    %v1406 = vmul.f32 %v1394, %v1394
    %v1407 = vmul.f32 %v1395, %v1395
    %v1408 = vmul.f32 %v1396, %v1396
    %v1409 = vmul.f32 %v1397, %v1397
    %v1410 = vmul.f32 %v1398, %v1398
    %v1411 = vmul.f32 %v1399, %v1399
    %v1412 = vadd.f32 %v1400, %v1401
    %v1413 = vadd.f32 %v1412, %v1402
    %v1414 = vadd.f32 %v1413, %v1403
    %v1415 = vadd.f32 %v1414, %v1404
    %v1416 = vadd.f32 %v1415, %v1405
    %1417 = vadd.xlane.f32.xlu0 %v1416
    %v1418 = vpop.xlane.xlu0 %1417
    %v1419 = vadd.f32 %v1406, %v1407
    %v1420 = vadd.f32 %v1419, %v1408
    %v1421 = vadd.f32 %v1420, %v1409
    %v1422 = vadd.f32 %v1421, %v1410
    %v1423 = vadd.f32 %v1422, %v1411
    %1424 = vadd.xlane.f32.xlu0 %v1423
    %v1425 = vpop.xlane.xlu0 %1424
    %v1426 = vmul.f32 %v1418, %v1385
    %v1427 = vmul.f32 %v1425, %v1385
    %v1428 = vadd.f32 %v1426, 1e-05
    %v1429 = vadd.f32 %v1427, 1e-05
    %v1430 = vrsqrt.pop %v1428
    %v1431 = vrsqrt.pop %v1429
    %v1432 = vmul.f32 %v1388, %v1430
    %v1433 = vmul.f32 %v1389, %v1430
    %v1434 = vmul.f32 %v1390, %v1430
    %v1435 = vmul.f32 %v1391, %v1430
    %v1436 = vmul.f32 %v1392, %v1430
    %v1437 = vmul.f32 %v1393, %v1430
    %v1438 = vmul.f32 %v1394, %v1431
    %v1439 = vmul.f32 %v1395, %v1431
    %v1440 = vmul.f32 %v1396, %v1431
    %v1441 = vmul.f32 %v1397, %v1431
    %v1442 = vmul.f32 %v1398, %v1431
    %v1443 = vmul.f32 %v1399, %v1431
    %v1445 = vlaneseq
    %v1446 = vshrl.u32 %v1445, 7
    %v1447 = vsub.s32 0, %v1446
    %v1448 = vrot.slane %v56, %v1447
    %v1449 = vlaneseq
    %v1450 = vshrl.u32 %v1449, 7
    %v1451 = vsub.s32 1, %v1450
    %v1452 = vrot.slane %v56, %v1451
    %v1453 = vlaneseq
    %v1454 = vshrl.u32 %v1453, 7
    %v1455 = vsub.s32 2, %v1454
    %v1456 = vrot.slane %v56, %v1455
    %v1457 = vlaneseq
    %v1458 = vshrl.u32 %v1457, 7
    %v1459 = vsub.s32 3, %v1458
    %v1460 = vrot.slane %v56, %v1459
    %v1461 = vlaneseq
    %v1462 = vshrl.u32 %v1461, 7
    %v1463 = vsub.s32 4, %v1462
    %v1464 = vrot.slane %v56, %v1463
    %v1465 = vlaneseq
    %v1466 = vshrl.u32 %v1465, 7
    %v1467 = vsub.s32 5, %v1466
    %v1468 = vrot.slane %v56, %v1467
    %v1475 = vmul.f32 %v1432, %v1448
    %v1476 = vmul.f32 %v1433, %v1452
    %v1477 = vmul.f32 %v1434, %v1456
    %v1478 = vmul.f32 %v1435, %v1460
    %v1479 = vmul.f32 %v1436, %v1464
    %v1480 = vmul.f32 %v1437, %v1468
    %v1481 = vmul.f32 %v1438, %v1448
    %v1482 = vmul.f32 %v1439, %v1452
    %v1483 = vmul.f32 %v1440, %v1456
    %v1484 = vmul.f32 %v1441, %v1460
    %v1485 = vmul.f32 %v1442, %v1464
    %v1486 = vmul.f32 %v1443, %v1468
    %v1488 = vlaneseq
    %v1489 = vshrl.u32 %v1488, 7
    %v1490 = vsub.s32 0, %v1489
    %v1491 = vrot.slane %v58, %v1490
    %v1492 = vlaneseq
    %v1493 = vshrl.u32 %v1492, 7
    %v1494 = vsub.s32 1, %v1493
    %v1495 = vrot.slane %v58, %v1494
    %v1496 = vlaneseq
    %v1497 = vshrl.u32 %v1496, 7
    %v1498 = vsub.s32 2, %v1497
    %v1499 = vrot.slane %v58, %v1498
    %v1500 = vlaneseq
    %v1501 = vshrl.u32 %v1500, 7
    %v1502 = vsub.s32 3, %v1501
    %v1503 = vrot.slane %v58, %v1502
    %v1504 = vlaneseq
    %v1505 = vshrl.u32 %v1504, 7
    %v1506 = vsub.s32 4, %v1505
    %v1507 = vrot.slane %v58, %v1506
    %v1508 = vlaneseq
    %v1509 = vshrl.u32 %v1508, 7
    %v1510 = vsub.s32 5, %v1509
    %v1511 = vrot.slane %v58, %v1510
    %v1518 = vadd.f32 %v1475, %v1491
    %v1519 = vadd.f32 %v1476, %v1495
    %v1520 = vadd.f32 %v1477, %v1499
    %v1521 = vadd.f32 %v1478, %v1503
    %v1522 = vadd.f32 %v1479, %v1507
    %v1523 = vadd.f32 %v1480, %v1511
    %v1524 = vadd.f32 %v1481, %v1491
    %v1525 = vadd.f32 %v1482, %v1495
    %v1526 = vadd.f32 %v1483, %v1499
    %v1527 = vadd.f32 %v1484, %v1503
    %v1528 = vadd.f32 %v1485, %v1507
    %v1529 = vadd.f32 %v1486, %v1511
    %1530 = vst [vmem:[#allocation8] sm:$0xff] %v1518
    %1531 = vst [vmem:[#allocation8 + $0x8] sm:$0xff] %v1519
    %1532 = vst [vmem:[#allocation8 + $0x10] sm:$0xff] %v1520
    %1533 = vst [vmem:[#allocation8 + $0x18] sm:$0xff] %v1521
    %1534 = vst [vmem:[#allocation8 + $0x20] sm:$0xff] %v1522
    %1535 = vst [vmem:[#allocation8 + $0x28] sm:$0xff] %v1523
    %1536 = vst [vmem:[#allocation8 + $0x30] sm:$0xff] %v1524
    %1537 = vst [vmem:[#allocation8 + $0x38] sm:$0xff] %v1525
    %1538 = vst [vmem:[#allocation8 + $0x40] sm:$0xff] %v1526
    %1539 = vst [vmem:[#allocation8 + $0x48] sm:$0xff] %v1527
    %1540 = vst [vmem:[#allocation8 + $0x50] sm:$0xff] %v1528
    %1541 = vst [vmem:[#allocation8 + $0x58] sm:$0xff] %v1529
    // Predicated region
    $region26: #{tpu_custom_call.1} parent=1 // pred_check
      _
    $region27: #{tpu_custom_call.1} parent=1 // pred_check_branch
      %1543 = sbr.rel (0) target = $region29
    $region28: #{tpu_custom_call.1} parent=1 // pred_region
      %s1545 = ssub.s32 1536, 1536
      %1546 = vsyncadd [#allocation4], %s1545
      %s1547 = sshll.u32 [#allocation8], 4
      %s1548 = int_to_ptr.vmem [resolvable:$true] %s1547
      %1553 = dma.vmem_to_hbm [thread:$0]  %s1548, 1536, %s3, [#allocation4], 768, 768, 48
    $region29: #{tpu_custom_call.1} parent=1 // pred_fallthru
      _
    // Predicated region
    $region30: #{tpu_custom_call.1} parent=1 // pred_check
      _
    $region31: #{tpu_custom_call.1} parent=1 // pred_check_branch
      %1555 = sbr.rel (0) target = $region33
    $region32: #{tpu_custom_call.1} parent=1 // pred_region
      %1556 = dma.done [#allocation4], 1536
    $region33: #{tpu_custom_call.1} parent=1 // pred_fallthru
      _
    %1557 = vsyncpa [#allocation3], 1
    %1558 = vsyncpa [#allocation6], 1
    %1559 = vsyncpa [#allocation4], 1

// kernel: tpu_custom_call.1
$region0: #{tpu_custom_call.1}
  #allocation0 [shape = 'u32[]', space=smem, size = 0x4, offset = 0x4, fixed_abs, tag = 'smem constant byte address 0x4 - core index']
  #allocation1 [shape = 'u32[144,128]{1,0:T(1,128)}', space=vmem, size = 0x12000, scoped, tag = 'internal scratch']
  %s0 = inlined_call_operand.hbm [shape: f32[16,768], index: 0, kind: input, shape index: {}]
  %s1 = inlined_call_operand.hbm [shape: f32[768,768], index: 1, kind: input, shape index: {}]
  %s2 = inlined_call_operand.hbm [shape: f32[3,768], index: 2, kind: input, shape index: {}]
  %s3 = inlined_call_operand.hbm [shape: f32[16,768], index: 3, kind: output, shape index: {}]
  %s4 = sld [smem:[#allocation0]]
  $region34: #{tpu_custom_call.1} parent=0
    _
  %s6 = ssub.s32 1, %s4
  %s7 = scalar_select 0, %s6, %s4
  $region1: #{tpu_custom_call.1} parent=0
    #allocation2 [shape = 'u8[49152]{0}', space=vmem, size = 0xc000, scoped, tag = 'input window, operand 0, single buffered']
    #allocation3 [shape = 's32[1]{0}', space=sflag, size = 0x4, scoped, tag = 'scoped memory for tpu_custom_call.1']
    #allocation4 [shape = 's32[1]{0}', space=sflag, size = 0x4, scoped, tag = 'scoped memory for tpu_custom_call.1']
    #allocation5 [shape = 'u8[2359296]{0}', space=vmem, size = 0x240000, scoped, tag = 'input window, operand 1, single buffered']
    #allocation6 [shape = 's32[1]{0}', space=sflag, size = 0x4, scoped, tag = 'scoped memory for tpu_custom_call.1']
    #allocation7 [shape = 'u8[12288]{0}', space=vmem, size = 0x3000, scoped, tag = 'input window, operand 2, single buffered']
    #allocation8 [shape = 'u8[49152]{0}', space=vmem, size = 0xc000, scoped, tag = 'output window, operand 0, single buffered']
    %8 = vsyncpa [#allocation3], 0
    %9 = vsyncpa [#allocation6], 0
    %10 = vsyncpa [#allocation4], 0
    // Predicated region
    $region2: #{tpu_custom_call.1} parent=1 // pred_check
      _
    $region3: #{tpu_custom_call.1} parent=1 // pred_check_branch
      %12 = sbr.rel (0) target = $region5
    $region4: #{tpu_custom_call.1} parent=1 // pred_region
      %s14 = ssub.s32 1536, 1536
      %15 = vsyncadd [#allocation3], %s14
      %s16 = sshll.u32 [#allocation2], 4
      %s17 = int_to_ptr.vmem [resolvable:$true] %s16
      %22 = dma.hbm_to_vmem [thread:$0]  %s0, 1536, %s17, [#allocation3], 768, 768, 48
    $region5: #{tpu_custom_call.1} parent=1 // pred_fallthru
      _
    // Predicated region
    $region6: #{tpu_custom_call.1} parent=1 // pred_check
      _
    $region7: #{tpu_custom_call.1} parent=1 // pred_check_branch
      %24 = sbr.rel (0) target = $region9
    $region8: #{tpu_custom_call.1} parent=1 // pred_region
      %s26 = ssub.s32 73728, 73728
      %27 = vsyncadd [#allocation6], %s26
      %s28 = sshll.u32 [#allocation5], 4
      %s29 = int_to_ptr.vmem [resolvable:$true] %s28
      %34 = dma.hbm_to_vmem [thread:$0]  %s1, 73728, %s29, [#allocation6], 768, 768, 48
    $region9: #{tpu_custom_call.1} parent=1 // pred_fallthru
      _
    // Predicated region
    $region10: #{tpu_custom_call.1} parent=1 // pred_check
      _
    $region11: #{tpu_custom_call.1} parent=1 // pred_check_branch
      %36 = sbr.rel (0) target = $region13
    $region12: #{tpu_custom_call.1} parent=1 // pred_region
      %s38 = ssub.s32 384, 384
      %39 = vsyncadd [#allocation6], %s38
      %s41 = sshll.u32 [#allocation7], 4
      %s42 = int_to_ptr.vmem [resolvable:$true] %s41
      %44 = dma.hbm_to_vmem [thread:$0]  %s2, 384, %s42, [#allocation6]
    $region13: #{tpu_custom_call.1} parent=1 // pred_fallthru
      _
    // Predicated region
    $region14: #{tpu_custom_call.1} parent=1 // pred_check
      _
    $region15: #{tpu_custom_call.1} parent=1 // pred_check_branch
      %46 = sbr.rel (0) target = $region17
    $region16: #{tpu_custom_call.1} parent=1 // pred_region
      %47 = dma.done [#allocation3], 1536
    $region17: #{tpu_custom_call.1} parent=1 // pred_fallthru
      _
    // Predicated region
    $region18: #{tpu_custom_call.1} parent=1 // pred_check
      _
    $region19: #{tpu_custom_call.1} parent=1 // pred_check_branch
      %49 = sbr.rel (0) target = $region21
    $region20: #{tpu_custom_call.1} parent=1 // pred_region
      %50 = dma.done [#allocation6], 73728
    $region21: #{tpu_custom_call.1} parent=1 // pred_fallthru
      _
    // Predicated region
    $region22: #{tpu_custom_call.1} parent=1 // pred_check
      _
    $region23: #{tpu_custom_call.1} parent=1 // pred_check_branch
      %52 = sbr.rel (0) target = $region25
    $region24: #{tpu_custom_call.1} parent=1 // pred_region
      %53 = dma.done [#allocation6], 384
    $region25: #{tpu_custom_call.1} parent=1 // pred_fallthru
      _
    %v54 = vld [vmem:[#allocation7] ss:$4 sm:$0x3f]
    %s55 = scalar_lea.vmem [#allocation7], 1
    %v56 = vld [vmem:[%s55] ss:$4 sm:$0x3f]
    %s57 = scalar_lea.vmem [#allocation7], 2
    %v58 = vld [vmem:[%s57] ss:$4 sm:$0x3f]
    %v59 = vld [vmem:[#allocation2] sm:$0xff]
    %v60 = vld [vmem:[#allocation2 + $0x8] sm:$0xff]
    %v61 = vld [vmem:[#allocation2 + $0x10] sm:$0xff]
    %v62 = vld [vmem:[#allocation2 + $0x18] sm:$0xff]
    %v63 = vld [vmem:[#allocation2 + $0x20] sm:$0xff]
    %v64 = vld [vmem:[#allocation2 + $0x28] sm:$0xff]
    %v65 = vld [vmem:[#allocation2 + $0x30] sm:$0xff]
    %v66 = vld [vmem:[#allocation2 + $0x38] sm:$0xff]
    %v67 = vld [vmem:[#allocation2 + $0x40] sm:$0xff]
    %v68 = vld [vmem:[#allocation2 + $0x48] sm:$0xff]
    %v69 = vld [vmem:[#allocation2 + $0x50] sm:$0xff]
    %v70 = vld [vmem:[#allocation2 + $0x58] sm:$0xff]
    %v71 = vld [vmem:[#allocation5] sm:$0xff]
    %v72 = vld [vmem:[#allocation5 + $0x8] sm:$0xff]
    %v73 = vld [vmem:[#allocation5 + $0x10] sm:$0xff]
    %v74 = vld [vmem:[#allocation5 + $0x18] sm:$0xff]
    %v75 = vld [vmem:[#allocation5 + $0x20] sm:$0xff]
    %v76 = vld [vmem:[#allocation5 + $0x28] sm:$0xff]
    %v77 = vld [vmem:[#allocation5 + $0x30] sm:$0xff]
    %v78 = vld [vmem:[#allocation5 + $0x38] sm:$0xff]
    %v79 = vld [vmem:[#allocation5 + $0x40] sm:$0xff]
    %v80 = vld [vmem:[#allocation5 + $0x48] sm:$0xff]
    %v81 = vld [vmem:[#allocation5 + $0x50] sm:$0xff]
    %v82 = vld [vmem:[#allocation5 + $0x58] sm:$0xff]
    %v83 = vld [vmem:[#allocation5 + $0x60] sm:$0xff]
    %v84 = vld [vmem:[#allocation5 + $0x68] sm:$0xff]
    %v85 = vld [vmem:[#allocation5 + $0x70] sm:$0xff]
    %v86 = vld [vmem:[#allocation5 + $0x78] sm:$0xff]
    %v87 = vld [vmem:[#allocation5 + $0x80] sm:$0xff]
    %v88 = vld [vmem:[#allocation5 + $0x88] sm:$0xff]
    %v89 = vld [vmem:[#allocation5 + $0x90] sm:$0xff]
    %v90 = vld [vmem:[#allocation5 + $0x98] sm:$0xff]
    %v91 = vld [vmem:[#allocation5 + $0xa0] sm:$0xff]
    %v92 = vld [vmem:[#allocation5 + $0xa8] sm:$0xff]
    %v93 = vld [vmem:[#allocation5 + $0xb0] sm:$0xff]
    %v94 = vld [vmem:[#allocation5 + $0xb8] sm:$0xff]
    %v95 = vld [vmem:[#allocation5 + $0xc0] sm:$0xff]
    %v96 = vld [vmem:[#allocation5 + $0xc8] sm:$0xff]
    %v97 = vld [vmem:[#allocation5 + $0xd0] sm:$0xff]
    %v98 = vld [vmem:[#allocation5 + $0xd8] sm:$0xff]
    %v99 = vld [vmem:[#allocation5 + $0xe0] sm:$0xff]
    %v100 = vld [vmem:[#allocation5 + $0xe8] sm:$0xff]
    %v101 = vld [vmem:[#allocation5 + $0xf0] sm:$0xff]
    %v102 = vld [vmem:[#allocation5 + $0xf8] sm:$0xff]
    %v103 = vld [vmem:[#allocation5 + $0x100] sm:$0xff]
    %v104 = vld [vmem:[#allocation5 + $0x108] sm:$0xff]
    %v105 = vld [vmem:[#allocation5 + $0x110] sm:$0xff]
    %v106 = vld [vmem:[#allocation5 + $0x118] sm:$0xff]
    %v107 = vld [vmem:[#allocation5 + $0x120] sm:$0xff]
    %v108 = vld [vmem:[#allocation5 + $0x128] sm:$0xff]
    %v109 = vld [vmem:[#allocation5 + $0x130] sm:$0xff]
    %v110 = vld [vmem:[#allocation5 + $0x138] sm:$0xff]
    %v111 = vld [vmem:[#allocation5 + $0x140] sm:$0xff]
    %v112 = vld [vmem:[#allocation5 + $0x148] sm:$0xff]
    %v113 = vld [vmem:[#allocation5 + $0x150] sm:$0xff]
    %v114 = vld [vmem:[#allocation5 + $0x158] sm:$0xff]
    %v115 = vld [vmem:[#allocation5 + $0x160] sm:$0xff]
    %v116 = vld [vmem:[#allocation5 + $0x168] sm:$0xff]
    %v117 = vld [vmem:[#allocation5 + $0x170] sm:$0xff]
    %v118 = vld [vmem:[#allocation5 + $0x178] sm:$0xff]
    %v119 = vld [vmem:[#allocation5 + $0x180] sm:$0xff]
    %v120 = vld [vmem:[#allocation5 + $0x188] sm:$0xff]
    %v121 = vld [vmem:[#allocation5 + $0x190] sm:$0xff]
    %v122 = vld [vmem:[#allocation5 + $0x198] sm:$0xff]
    %v123 = vld [vmem:[#allocation5 + $0x1a0] sm:$0xff]
    %v124 = vld [vmem:[#allocation5 + $0x1a8] sm:$0xff]
    %v125 = vld [vmem:[#allocation5 + $0x1b0] sm:$0xff]
    %v126 = vld [vmem:[#allocation5 + $0x1b8] sm:$0xff]
    %v127 = vld [vmem:[#allocation5 + $0x1c0] sm:$0xff]
    %v128 = vld [vmem:[#allocation5 + $0x1c8] sm:$0xff]
    %v129 = vld [vmem:[#allocation5 + $0x1d0] sm:$0xff]
    %v130 = vld [vmem:[#allocation5 + $0x1d8] sm:$0xff]
    %v131 = vld [vmem:[#allocation5 + $0x1e0] sm:$0xff]
    %v132 = vld [vmem:[#allocation5 + $0x1e8] sm:$0xff]
    %v133 = vld [vmem:[#allocation5 + $0x1f0] sm:$0xff]
    %v134 = vld [vmem:[#allocation5 + $0x1f8] sm:$0xff]
    %v135 = vld [vmem:[#allocation5 + $0x200] sm:$0xff]
    %v136 = vld [vmem:[#allocation5 + $0x208] sm:$0xff]
    %v137 = vld [vmem:[#allocation5 + $0x210] sm:$0xff]
    %v138 = vld [vmem:[#allocation5 + $0x218] sm:$0xff]
    %v139 = vld [vmem:[#allocation5 + $0x220] sm:$0xff]
    %v140 = vld [vmem:[#allocation5 + $0x228] sm:$0xff]
    %v141 = vld [vmem:[#allocation5 + $0x230] sm:$0xff]
    %v142 = vld [vmem:[#allocation5 + $0x238] sm:$0xff]
    %v143 = vld [vmem:[#allocation5 + $0x240] sm:$0xff]
    %v144 = vld [vmem:[#allocation5 + $0x248] sm:$0xff]
    %v145 = vld [vmem:[#allocation5 + $0x250] sm:$0xff]
    %v146 = vld [vmem:[#allocation5 + $0x258] sm:$0xff]
    %v147 = vld [vmem:[#allocation5 + $0x260] sm:$0xff]
    %v148 = vld [vmem:[#allocation5 + $0x268] sm:$0xff]
    %v149 = vld [vmem:[#allocation5 + $0x270] sm:$0xff]
    %v150 = vld [vmem:[#allocation5 + $0x278] sm:$0xff]
    %v151 = vld [vmem:[#allocation5 + $0x280] sm:$0xff]
    %v152 = vld [vmem:[#allocation5 + $0x288] sm:$0xff]
    %v153 = vld [vmem:[#allocation5 + $0x290] sm:$0xff]
    %v154 = vld [vmem:[#allocation5 + $0x298] sm:$0xff]
    %v155 = vld [vmem:[#allocation5 + $0x2a0] sm:$0xff]
    %v156 = vld [vmem:[#allocation5 + $0x2a8] sm:$0xff]
    %v157 = vld [vmem:[#allocation5 + $0x2b0] sm:$0xff]
    %v158 = vld [vmem:[#allocation5 + $0x2b8] sm:$0xff]
    %v159 = vld [vmem:[#allocation5 + $0x2c0] sm:$0xff]
    %v160 = vld [vmem:[#allocation5 + $0x2c8] sm:$0xff]
    %v161 = vld [vmem:[#allocation5 + $0x2d0] sm:$0xff]
    %v162 = vld [vmem:[#allocation5 + $0x2d8] sm:$0xff]
    %v163 = vld [vmem:[#allocation5 + $0x2e0] sm:$0xff]
    %v164 = vld [vmem:[#allocation5 + $0x2e8] sm:$0xff]
    %v165 = vld [vmem:[#allocation5 + $0x2f0] sm:$0xff]
    %v166 = vld [vmem:[#allocation5 + $0x2f8] sm:$0xff]
    %v167 = vld [vmem:[#allocation5 + $0x300] sm:$0xff]
    %v168 = vld [vmem:[#allocation5 + $0x308] sm:$0xff]
    %v169 = vld [vmem:[#allocation5 + $0x310] sm:$0xff]
    %v170 = vld [vmem:[#allocation5 + $0x318] sm:$0xff]
    %v171 = vld [vmem:[#allocation5 + $0x320] sm:$0xff]
    %v172 = vld [vmem:[#allocation5 + $0x328] sm:$0xff]
    %v173 = vld [vmem:[#allocation5 + $0x330] sm:$0xff]
    %v174 = vld [vmem:[#allocation5 + $0x338] sm:$0xff]
    %v175 = vld [vmem:[#allocation5 + $0x340] sm:$0xff]
    %v176 = vld [vmem:[#allocation5 + $0x348] sm:$0xff]
    %v177 = vld [vmem:[#allocation5 + $0x350] sm:$0xff]
    %v178 = vld [vmem:[#allocation5 + $0x358] sm:$0xff]
    %v179 = vld [vmem:[#allocation5 + $0x360] sm:$0xff]
    %v180 = vld [vmem:[#allocation5 + $0x368] sm:$0xff]
    %v181 = vld [vmem:[#allocation5 + $0x370] sm:$0xff]
    %v182 = vld [vmem:[#allocation5 + $0x378] sm:$0xff]
    %v183 = vld [vmem:[#allocation5 + $0x380] sm:$0xff]
    %v184 = vld [vmem:[#allocation5 + $0x388] sm:$0xff]
    %v185 = vld [vmem:[#allocation5 + $0x390] sm:$0xff]
    %v186 = vld [vmem:[#allocation5 + $0x398] sm:$0xff]
    %v187 = vld [vmem:[#allocation5 + $0x3a0] sm:$0xff]
    %v188 = vld [vmem:[#allocation5 + $0x3a8] sm:$0xff]
    %v189 = vld [vmem:[#allocation5 + $0x3b0] sm:$0xff]
    %v190 = vld [vmem:[#allocation5 + $0x3b8] sm:$0xff]
    %v191 = vld [vmem:[#allocation5 + $0x3c0] sm:$0xff]
    %v192 = vld [vmem:[#allocation5 + $0x3c8] sm:$0xff]
    %v193 = vld [vmem:[#allocation5 + $0x3d0] sm:$0xff]
    %v194 = vld [vmem:[#allocation5 + $0x3d8] sm:$0xff]
    %v195 = vld [vmem:[#allocation5 + $0x3e0] sm:$0xff]
    %v196 = vld [vmem:[#allocation5 + $0x3e8] sm:$0xff]
    %v197 = vld [vmem:[#allocation5 + $0x3f0] sm:$0xff]
    %v198 = vld [vmem:[#allocation5 + $0x3f8] sm:$0xff]
    %v199 = vld [vmem:[#allocation5 + $0x400] sm:$0xff]
    %v200 = vld [vmem:[#allocation5 + $0x408] sm:$0xff]
    %v201 = vld [vmem:[#allocation5 + $0x410] sm:$0xff]
    %v202 = vld [vmem:[#allocation5 + $0x418] sm:$0xff]
    %v203 = vld [vmem:[#allocation5 + $0x420] sm:$0xff]
    %v204 = vld [vmem:[#allocation5 + $0x428] sm:$0xff]
    %v205 = vld [vmem:[#allocation5 + $0x430] sm:$0xff]
    %v206 = vld [vmem:[#allocation5 + $0x438] sm:$0xff]
    %v207 = vld [vmem:[#allocation5 + $0x440] sm:$0xff]
    %v208 = vld [vmem:[#allocation5 + $0x448] sm:$0xff]
    %v209 = vld [vmem:[#allocation5 + $0x450] sm:$0xff]
    %v210 = vld [vmem:[#allocation5 + $0x458] sm:$0xff]
    %v211 = vld [vmem:[#allocation5 + $0x460] sm:$0xff]
    %v212 = vld [vmem:[#allocation5 + $0x468] sm:$0xff]
    %v213 = vld [vmem:[#allocation5 + $0x470] sm:$0xff]
    %v214 = vld [vmem:[#allocation5 + $0x478] sm:$0xff]
    %v215 = vld [vmem:[#allocation5 + $0x480] sm:$0xff]
    %v216 = vld [vmem:[#allocation5 + $0x488] sm:$0xff]
    %v217 = vld [vmem:[#allocation5 + $0x490] sm:$0xff]
    %v218 = vld [vmem:[#allocation5 + $0x498] sm:$0xff]
    %v219 = vld [vmem:[#allocation5 + $0x4a0] sm:$0xff]
    %v220 = vld [vmem:[#allocation5 + $0x4a8] sm:$0xff]
    %v221 = vld [vmem:[#allocation5 + $0x4b0] sm:$0xff]
    %v222 = vld [vmem:[#allocation5 + $0x4b8] sm:$0xff]
    %v223 = vld [vmem:[#allocation5 + $0x4c0] sm:$0xff]
    %v224 = vld [vmem:[#allocation5 + $0x4c8] sm:$0xff]
    %v225 = vld [vmem:[#allocation5 + $0x4d0] sm:$0xff]
    %v226 = vld [vmem:[#allocation5 + $0x4d8] sm:$0xff]
    %v227 = vld [vmem:[#allocation5 + $0x4e0] sm:$0xff]
    %v228 = vld [vmem:[#allocation5 + $0x4e8] sm:$0xff]
    %v229 = vld [vmem:[#allocation5 + $0x4f0] sm:$0xff]
    %v230 = vld [vmem:[#allocation5 + $0x4f8] sm:$0xff]
    %v231 = vld [vmem:[#allocation5 + $0x500] sm:$0xff]
    %v232 = vld [vmem:[#allocation5 + $0x508] sm:$0xff]
    %v233 = vld [vmem:[#allocation5 + $0x510] sm:$0xff]
    %v234 = vld [vmem:[#allocation5 + $0x518] sm:$0xff]
    %v235 = vld [vmem:[#allocation5 + $0x520] sm:$0xff]
    %v236 = vld [vmem:[#allocation5 + $0x528] sm:$0xff]
    %v237 = vld [vmem:[#allocation5 + $0x530] sm:$0xff]
    %v238 = vld [vmem:[#allocation5 + $0x538] sm:$0xff]
    %v239 = vld [vmem:[#allocation5 + $0x540] sm:$0xff]
    %v240 = vld [vmem:[#allocation5 + $0x548] sm:$0xff]
    %v241 = vld [vmem:[#allocation5 + $0x550] sm:$0xff]
    %v242 = vld [vmem:[#allocation5 + $0x558] sm:$0xff]
    %v243 = vld [vmem:[#allocation5 + $0x560] sm:$0xff]
    %v244 = vld [vmem:[#allocation5 + $0x568] sm:$0xff]
    %v245 = vld [vmem:[#allocation5 + $0x570] sm:$0xff]
    %v246 = vld [vmem:[#allocation5 + $0x578] sm:$0xff]
    %v247 = vld [vmem:[#allocation5 + $0x580] sm:$0xff]
    %v248 = vld [vmem:[#allocation5 + $0x588] sm:$0xff]
    %v249 = vld [vmem:[#allocation5 + $0x590] sm:$0xff]
    %v250 = vld [vmem:[#allocation5 + $0x598] sm:$0xff]
    %v251 = vld [vmem:[#allocation5 + $0x5a0] sm:$0xff]
    %v252 = vld [vmem:[#allocation5 + $0x5a8] sm:$0xff]
    %v253 = vld [vmem:[#allocation5 + $0x5b0] sm:$0xff]
    %v254 = vld [vmem:[#allocation5 + $0x5b8] sm:$0xff]
    %v255 = vld [vmem:[#allocation5 + $0x5c0] sm:$0xff]
    %v256 = vld [vmem:[#allocation5 + $0x5c8] sm:$0xff]
    %v257 = vld [vmem:[#allocation5 + $0x5d0] sm:$0xff]
    %v258 = vld [vmem:[#allocation5 + $0x5d8] sm:$0xff]
    %v259 = vld [vmem:[#allocation5 + $0x5e0] sm:$0xff]
    %v260 = vld [vmem:[#allocation5 + $0x5e8] sm:$0xff]
    %v261 = vld [vmem:[#allocation5 + $0x5f0] sm:$0xff]
    %v262 = vld [vmem:[#allocation5 + $0x5f8] sm:$0xff]
    %v263 = vld [vmem:[#allocation5 + $0x600] sm:$0xff]
    %v264 = vld [vmem:[#allocation5 + $0x608] sm:$0xff]
    %v265 = vld [vmem:[#allocation5 + $0x610] sm:$0xff]
    %v266 = vld [vmem:[#allocation5 + $0x618] sm:$0xff]
    %v267 = vld [vmem:[#allocation5 + $0x620] sm:$0xff]
    %v268 = vld [vmem:[#allocation5 + $0x628] sm:$0xff]
    %v269 = vld [vmem:[#allocation5 + $0x630] sm:$0xff]
    %v270 = vld [vmem:[#allocation5 + $0x638] sm:$0xff]
    %v271 = vld [vmem:[#allocation5 + $0x640] sm:$0xff]
    %v272 = vld [vmem:[#allocation5 + $0x648] sm:$0xff]
    %v273 = vld [vmem:[#allocation5 + $0x650] sm:$0xff]
    %v274 = vld [vmem:[#allocation5 + $0x658] sm:$0xff]
    %v275 = vld [vmem:[#allocation5 + $0x660] sm:$0xff]
    %v276 = vld [vmem:[#allocation5 + $0x668] sm:$0xff]
    %v277 = vld [vmem:[#allocation5 + $0x670] sm:$0xff]
    %v278 = vld [vmem:[#allocation5 + $0x678] sm:$0xff]
    %v279 = vld [vmem:[#allocation5 + $0x680] sm:$0xff]
    %v280 = vld [vmem:[#allocation5 + $0x688] sm:$0xff]
    %v281 = vld [vmem:[#allocation5 + $0x690] sm:$0xff]
    %v282 = vld [vmem:[#allocation5 + $0x698] sm:$0xff]
    %v283 = vld [vmem:[#allocation5 + $0x6a0] sm:$0xff]
    %v284 = vld [vmem:[#allocation5 + $0x6a8] sm:$0xff]
    %v285 = vld [vmem:[#allocation5 + $0x6b0] sm:$0xff]
    %v286 = vld [vmem:[#allocation5 + $0x6b8] sm:$0xff]
    %v287 = vld [vmem:[#allocation5 + $0x6c0] sm:$0xff]
    %v288 = vld [vmem:[#allocation5 + $0x6c8] sm:$0xff]
    %v289 = vld [vmem:[#allocation5 + $0x6d0] sm:$0xff]
    %v290 = vld [vmem:[#allocation5 + $0x6d8] sm:$0xff]
    %v291 = vld [vmem:[#allocation5 + $0x6e0] sm:$0xff]
    %v292 = vld [vmem:[#allocation5 + $0x6e8] sm:$0xff]
    %v293 = vld [vmem:[#allocation5 + $0x6f0] sm:$0xff]
    %v294 = vld [vmem:[#allocation5 + $0x6f8] sm:$0xff]
    %v295 = vld [vmem:[#allocation5 + $0x700] sm:$0xff]
    %v296 = vld [vmem:[#allocation5 + $0x708] sm:$0xff]
    %v297 = vld [vmem:[#allocation5 + $0x710] sm:$0xff]
    %v298 = vld [vmem:[#allocation5 + $0x718] sm:$0xff]
    %v299 = vld [vmem:[#allocation5 + $0x720] sm:$0xff]
    %v300 = vld [vmem:[#allocation5 + $0x728] sm:$0xff]
    %v301 = vld [vmem:[#allocation5 + $0x730] sm:$0xff]
    %v302 = vld [vmem:[#allocation5 + $0x738] sm:$0xff]
    %v303 = vld [vmem:[#allocation5 + $0x740] sm:$0xff]
    %v304 = vld [vmem:[#allocation5 + $0x748] sm:$0xff]
    %v305 = vld [vmem:[#allocation5 + $0x750] sm:$0xff]
    %v306 = vld [vmem:[#allocation5 + $0x758] sm:$0xff]
    %v307 = vld [vmem:[#allocation5 + $0x760] sm:$0xff]
    %v308 = vld [vmem:[#allocation5 + $0x768] sm:$0xff]
    %v309 = vld [vmem:[#allocation5 + $0x770] sm:$0xff]
    %v310 = vld [vmem:[#allocation5 + $0x778] sm:$0xff]
    %v311 = vld [vmem:[#allocation5 + $0x780] sm:$0xff]
    %v312 = vld [vmem:[#allocation5 + $0x788] sm:$0xff]
    %v313 = vld [vmem:[#allocation5 + $0x790] sm:$0xff]
    %v314 = vld [vmem:[#allocation5 + $0x798] sm:$0xff]
    %v315 = vld [vmem:[#allocation5 + $0x7a0] sm:$0xff]
    %v316 = vld [vmem:[#allocation5 + $0x7a8] sm:$0xff]
    %v317 = vld [vmem:[#allocation5 + $0x7b0] sm:$0xff]
    %v318 = vld [vmem:[#allocation5 + $0x7b8] sm:$0xff]
    %v319 = vld [vmem:[#allocation5 + $0x7c0] sm:$0xff]
    %v320 = vld [vmem:[#allocation5 + $0x7c8] sm:$0xff]
    %v321 = vld [vmem:[#allocation5 + $0x7d0] sm:$0xff]
    %v322 = vld [vmem:[#allocation5 + $0x7d8] sm:$0xff]
    %v323 = vld [vmem:[#allocation5 + $0x7e0] sm:$0xff]
    %v324 = vld [vmem:[#allocation5 + $0x7e8] sm:$0xff]
    %v325 = vld [vmem:[#allocation5 + $0x7f0] sm:$0xff]
    %v326 = vld [vmem:[#allocation5 + $0x7f8] sm:$0xff]
    %v327 = vld [vmem:[#allocation5 + $0x800] sm:$0xff]
    %v328 = vld [vmem:[#allocation5 + $0x808] sm:$0xff]
    %v329 = vld [vmem:[#allocation5 + $0x810] sm:$0xff]
    %v330 = vld [vmem:[#allocation5 + $0x818] sm:$0xff]
    %v331 = vld [vmem:[#allocation5 + $0x820] sm:$0xff]
    %v332 = vld [vmem:[#allocation5 + $0x828] sm:$0xff]
    %v333 = vld [vmem:[#allocation5 + $0x830] sm:$0xff]
    %v334 = vld [vmem:[#allocation5 + $0x838] sm:$0xff]
    %v335 = vld [vmem:[#allocation5 + $0x840] sm:$0xff]
    %v336 = vld [vmem:[#allocation5 + $0x848] sm:$0xff]
    %v337 = vld [vmem:[#allocation5 + $0x850] sm:$0xff]
    %v338 = vld [vmem:[#allocation5 + $0x858] sm:$0xff]
    %v339 = vld [vmem:[#allocation5 + $0x860] sm:$0xff]
    %v340 = vld [vmem:[#allocation5 + $0x868] sm:$0xff]
    %v341 = vld [vmem:[#allocation5 + $0x870] sm:$0xff]
    %v342 = vld [vmem:[#allocation5 + $0x878] sm:$0xff]
    %v343 = vld [vmem:[#allocation5 + $0x880] sm:$0xff]
    %v344 = vld [vmem:[#allocation5 + $0x888] sm:$0xff]
    %v345 = vld [vmem:[#allocation5 + $0x890] sm:$0xff]
    %v346 = vld [vmem:[#allocation5 + $0x898] sm:$0xff]
    %v347 = vld [vmem:[#allocation5 + $0x8a0] sm:$0xff]
    %v348 = vld [vmem:[#allocation5 + $0x8a8] sm:$0xff]
    %v349 = vld [vmem:[#allocation5 + $0x8b0] sm:$0xff]
    %v350 = vld [vmem:[#allocation5 + $0x8b8] sm:$0xff]
    %v351 = vld [vmem:[#allocation5 + $0x8c0] sm:$0xff]
    %v352 = vld [vmem:[#allocation5 + $0x8c8] sm:$0xff]
    %v353 = vld [vmem:[#allocation5 + $0x8d0] sm:$0xff]
    %v354 = vld [vmem:[#allocation5 + $0x8d8] sm:$0xff]
    %v355 = vld [vmem:[#allocation5 + $0x8e0] sm:$0xff]
    %v356 = vld [vmem:[#allocation5 + $0x8e8] sm:$0xff]
    %v357 = vld [vmem:[#allocation5 + $0x8f0] sm:$0xff]
    %v358 = vld [vmem:[#allocation5 + $0x8f8] sm:$0xff]
    %v359 = vld [vmem:[#allocation5 + $0x900] sm:$0xff]
    %v360 = vld [vmem:[#allocation5 + $0x908] sm:$0xff]
    %v361 = vld [vmem:[#allocation5 + $0x910] sm:$0xff]
    %v362 = vld [vmem:[#allocation5 + $0x918] sm:$0xff]
    %v363 = vld [vmem:[#allocation5 + $0x920] sm:$0xff]
    %v364 = vld [vmem:[#allocation5 + $0x928] sm:$0xff]
    %v365 = vld [vmem:[#allocation5 + $0x930] sm:$0xff]
    %v366 = vld [vmem:[#allocation5 + $0x938] sm:$0xff]
    %v367 = vld [vmem:[#allocation5 + $0x940] sm:$0xff]
    %v368 = vld [vmem:[#allocation5 + $0x948] sm:$0xff]
    %v369 = vld [vmem:[#allocation5 + $0x950] sm:$0xff]
    %v370 = vld [vmem:[#allocation5 + $0x958] sm:$0xff]
    %v371 = vld [vmem:[#allocation5 + $0x960] sm:$0xff]
    %v372 = vld [vmem:[#allocation5 + $0x968] sm:$0xff]
    %v373 = vld [vmem:[#allocation5 + $0x970] sm:$0xff]
    %v374 = vld [vmem:[#allocation5 + $0x978] sm:$0xff]
    %v375 = vld [vmem:[#allocation5 + $0x980] sm:$0xff]
    %v376 = vld [vmem:[#allocation5 + $0x988] sm:$0xff]
    %v377 = vld [vmem:[#allocation5 + $0x990] sm:$0xff]
    %v378 = vld [vmem:[#allocation5 + $0x998] sm:$0xff]
    %v379 = vld [vmem:[#allocation5 + $0x9a0] sm:$0xff]
    %v380 = vld [vmem:[#allocation5 + $0x9a8] sm:$0xff]
    %v381 = vld [vmem:[#allocation5 + $0x9b0] sm:$0xff]
    %v382 = vld [vmem:[#allocation5 + $0x9b8] sm:$0xff]
    %v383 = vld [vmem:[#allocation5 + $0x9c0] sm:$0xff]
    %v384 = vld [vmem:[#allocation5 + $0x9c8] sm:$0xff]
    %v385 = vld [vmem:[#allocation5 + $0x9d0] sm:$0xff]
    %v386 = vld [vmem:[#allocation5 + $0x9d8] sm:$0xff]
    %v387 = vld [vmem:[#allocation5 + $0x9e0] sm:$0xff]
    %v388 = vld [vmem:[#allocation5 + $0x9e8] sm:$0xff]
    %v389 = vld [vmem:[#allocation5 + $0x9f0] sm:$0xff]
    %v390 = vld [vmem:[#allocation5 + $0x9f8] sm:$0xff]
    %v391 = vld [vmem:[#allocation5 + $0xa00] sm:$0xff]
    %v392 = vld [vmem:[#allocation5 + $0xa08] sm:$0xff]
    %v393 = vld [vmem:[#allocation5 + $0xa10] sm:$0xff]
    %v394 = vld [vmem:[#allocation5 + $0xa18] sm:$0xff]
    %v395 = vld [vmem:[#allocation5 + $0xa20] sm:$0xff]
    %v396 = vld [vmem:[#allocation5 + $0xa28] sm:$0xff]
    %v397 = vld [vmem:[#allocation5 + $0xa30] sm:$0xff]
    %v398 = vld [vmem:[#allocation5 + $0xa38] sm:$0xff]
    %v399 = vld [vmem:[#allocation5 + $0xa40] sm:$0xff]
    %v400 = vld [vmem:[#allocation5 + $0xa48] sm:$0xff]
    %v401 = vld [vmem:[#allocation5 + $0xa50] sm:$0xff]
    %v402 = vld [vmem:[#allocation5 + $0xa58] sm:$0xff]
    %v403 = vld [vmem:[#allocation5 + $0xa60] sm:$0xff]
    %v404 = vld [vmem:[#allocation5 + $0xa68] sm:$0xff]
    %v405 = vld [vmem:[#allocation5 + $0xa70] sm:$0xff]
    %v406 = vld [vmem:[#allocation5 + $0xa78] sm:$0xff]
    %v407 = vld [vmem:[#allocation5 + $0xa80] sm:$0xff]
    %v408 = vld [vmem:[#allocation5 + $0xa88] sm:$0xff]
    %v409 = vld [vmem:[#allocation5 + $0xa90] sm:$0xff]
    %v410 = vld [vmem:[#allocation5 + $0xa98] sm:$0xff]
    %v411 = vld [vmem:[#allocation5 + $0xaa0] sm:$0xff]
    %v412 = vld [vmem:[#allocation5 + $0xaa8] sm:$0xff]
    %v413 = vld [vmem:[#allocation5 + $0xab0] sm:$0xff]
    %v414 = vld [vmem:[#allocation5 + $0xab8] sm:$0xff]
    %v415 = vld [vmem:[#allocation5 + $0xac0] sm:$0xff]
    %v416 = vld [vmem:[#allocation5 + $0xac8] sm:$0xff]
    %v417 = vld [vmem:[#allocation5 + $0xad0] sm:$0xff]
    %v418 = vld [vmem:[#allocation5 + $0xad8] sm:$0xff]
    %v419 = vld [vmem:[#allocation5 + $0xae0] sm:$0xff]
    %v420 = vld [vmem:[#allocation5 + $0xae8] sm:$0xff]
    %v421 = vld [vmem:[#allocation5 + $0xaf0] sm:$0xff]
    %v422 = vld [vmem:[#allocation5 + $0xaf8] sm:$0xff]
    %v423 = vld [vmem:[#allocation5 + $0xb00] sm:$0xff]
    %v424 = vld [vmem:[#allocation5 + $0xb08] sm:$0xff]
    %v425 = vld [vmem:[#allocation5 + $0xb10] sm:$0xff]
    %v426 = vld [vmem:[#allocation5 + $0xb18] sm:$0xff]
    %v427 = vld [vmem:[#allocation5 + $0xb20] sm:$0xff]
    %v428 = vld [vmem:[#allocation5 + $0xb28] sm:$0xff]
    %v429 = vld [vmem:[#allocation5 + $0xb30] sm:$0xff]
    %v430 = vld [vmem:[#allocation5 + $0xb38] sm:$0xff]
    %v431 = vld [vmem:[#allocation5 + $0xb40] sm:$0xff]
    %v432 = vld [vmem:[#allocation5 + $0xb48] sm:$0xff]
    %v433 = vld [vmem:[#allocation5 + $0xb50] sm:$0xff]
    %v434 = vld [vmem:[#allocation5 + $0xb58] sm:$0xff]
    %v435 = vld [vmem:[#allocation5 + $0xb60] sm:$0xff]
    %v436 = vld [vmem:[#allocation5 + $0xb68] sm:$0xff]
    %v437 = vld [vmem:[#allocation5 + $0xb70] sm:$0xff]
    %v438 = vld [vmem:[#allocation5 + $0xb78] sm:$0xff]
    %v439 = vld [vmem:[#allocation5 + $0xb80] sm:$0xff]
    %v440 = vld [vmem:[#allocation5 + $0xb88] sm:$0xff]
    %v441 = vld [vmem:[#allocation5 + $0xb90] sm:$0xff]
    %v442 = vld [vmem:[#allocation5 + $0xb98] sm:$0xff]
    %v443 = vld [vmem:[#allocation5 + $0xba0] sm:$0xff]
    %v444 = vld [vmem:[#allocation5 + $0xba8] sm:$0xff]
    %v445 = vld [vmem:[#allocation5 + $0xbb0] sm:$0xff]
    %v446 = vld [vmem:[#allocation5 + $0xbb8] sm:$0xff]
    %v447 = vld [vmem:[#allocation5 + $0xbc0] sm:$0xff]
    %v448 = vld [vmem:[#allocation5 + $0xbc8] sm:$0xff]
    %v449 = vld [vmem:[#allocation5 + $0xbd0] sm:$0xff]
    %v450 = vld [vmem:[#allocation5 + $0xbd8] sm:$0xff]
    %v451 = vld [vmem:[#allocation5 + $0xbe0] sm:$0xff]
    %v452 = vld [vmem:[#allocation5 + $0xbe8] sm:$0xff]
    %v453 = vld [vmem:[#allocation5 + $0xbf0] sm:$0xff]
    %v454 = vld [vmem:[#allocation5 + $0xbf8] sm:$0xff]
    %v455 = vld [vmem:[#allocation5 + $0xc00] sm:$0xff]
    %v456 = vld [vmem:[#allocation5 + $0xc08] sm:$0xff]
    %v457 = vld [vmem:[#allocation5 + $0xc10] sm:$0xff]
    %v458 = vld [vmem:[#allocation5 + $0xc18] sm:$0xff]
    %v459 = vld [vmem:[#allocation5 + $0xc20] sm:$0xff]
    %v460 = vld [vmem:[#allocation5 + $0xc28] sm:$0xff]
    %v461 = vld [vmem:[#allocation5 + $0xc30] sm:$0xff]
    %v462 = vld [vmem:[#allocation5 + $0xc38] sm:$0xff]
    %v463 = vld [vmem:[#allocation5 + $0xc40] sm:$0xff]
    %v464 = vld [vmem:[#allocation5 + $0xc48] sm:$0xff]
    %v465 = vld [vmem:[#allocation5 + $0xc50] sm:$0xff]
    %v466 = vld [vmem:[#allocation5 + $0xc58] sm:$0xff]
    %v467 = vld [vmem:[#allocation5 + $0xc60] sm:$0xff]
    %v468 = vld [vmem:[#allocation5 + $0xc68] sm:$0xff]
    %v469 = vld [vmem:[#allocation5 + $0xc70] sm:$0xff]
    %v470 = vld [vmem:[#allocation5 + $0xc78] sm:$0xff]
    %v471 = vld [vmem:[#allocation5 + $0xc80] sm:$0xff]
    %v472 = vld [vmem:[#allocation5 + $0xc88] sm:$0xff]
    %v473 = vld [vmem:[#allocation5 + $0xc90] sm:$0xff]
    %v474 = vld [vmem:[#allocation5 + $0xc98] sm:$0xff]
    %v475 = vld [vmem:[#allocation5 + $0xca0] sm:$0xff]
    %v476 = vld [vmem:[#allocation5 + $0xca8] sm:$0xff]
    %v477 = vld [vmem:[#allocation5 + $0xcb0] sm:$0xff]
    %v478 = vld [vmem:[#allocation5 + $0xcb8] sm:$0xff]
    %v479 = vld [vmem:[#allocation5 + $0xcc0] sm:$0xff]
    %v480 = vld [vmem:[#allocation5 + $0xcc8] sm:$0xff]
    %v481 = vld [vmem:[#allocation5 + $0xcd0] sm:$0xff]
    %v482 = vld [vmem:[#allocation5 + $0xcd8] sm:$0xff]
    %v483 = vld [vmem:[#allocation5 + $0xce0] sm:$0xff]
    %v484 = vld [vmem:[#allocation5 + $0xce8] sm:$0xff]
    %v485 = vld [vmem:[#allocation5 + $0xcf0] sm:$0xff]
    %v486 = vld [vmem:[#allocation5 + $0xcf8] sm:$0xff]
    %v487 = vld [vmem:[#allocation5 + $0xd00] sm:$0xff]
    %v488 = vld [vmem:[#allocation5 + $0xd08] sm:$0xff]
    %v489 = vld [vmem:[#allocation5 + $0xd10] sm:$0xff]
    %v490 = vld [vmem:[#allocation5 + $0xd18] sm:$0xff]
    %v491 = vld [vmem:[#allocation5 + $0xd20] sm:$0xff]
    %v492 = vld [vmem:[#allocation5 + $0xd28] sm:$0xff]
    %v493 = vld [vmem:[#allocation5 + $0xd30] sm:$0xff]
    %v494 = vld [vmem:[#allocation5 + $0xd38] sm:$0xff]
    %v495 = vld [vmem:[#allocation5 + $0xd40] sm:$0xff]
    %v496 = vld [vmem:[#allocation5 + $0xd48] sm:$0xff]
    %v497 = vld [vmem:[#allocation5 + $0xd50] sm:$0xff]
    %v498 = vld [vmem:[#allocation5 + $0xd58] sm:$0xff]
    %v499 = vld [vmem:[#allocation5 + $0xd60] sm:$0xff]
    %v500 = vld [vmem:[#allocation5 + $0xd68] sm:$0xff]
    %v501 = vld [vmem:[#allocation5 + $0xd70] sm:$0xff]
    %v502 = vld [vmem:[#allocation5 + $0xd78] sm:$0xff]
    %v503 = vld [vmem:[#allocation5 + $0xd80] sm:$0xff]
    %v504 = vld [vmem:[#allocation5 + $0xd88] sm:$0xff]
    %v505 = vld [vmem:[#allocation5 + $0xd90] sm:$0xff]
    %v506 = vld [vmem:[#allocation5 + $0xd98] sm:$0xff]
    %v507 = vld [vmem:[#allocation5 + $0xda0] sm:$0xff]
    %v508 = vld [vmem:[#allocation5 + $0xda8] sm:$0xff]
    %v509 = vld [vmem:[#allocation5 + $0xdb0] sm:$0xff]
    %v510 = vld [vmem:[#allocation5 + $0xdb8] sm:$0xff]
    %v511 = vld [vmem:[#allocation5 + $0xdc0] sm:$0xff]
    %v512 = vld [vmem:[#allocation5 + $0xdc8] sm:$0xff]
    %v513 = vld [vmem:[#allocation5 + $0xdd0] sm:$0xff]
    %v514 = vld [vmem:[#allocation5 + $0xdd8] sm:$0xff]
    %v515 = vld [vmem:[#allocation5 + $0xde0] sm:$0xff]
    %v516 = vld [vmem:[#allocation5 + $0xde8] sm:$0xff]
    %v517 = vld [vmem:[#allocation5 + $0xdf0] sm:$0xff]
    %v518 = vld [vmem:[#allocation5 + $0xdf8] sm:$0xff]
    %v519 = vld [vmem:[#allocation5 + $0xe00] sm:$0xff]
    %v520 = vld [vmem:[#allocation5 + $0xe08] sm:$0xff]
    %v521 = vld [vmem:[#allocation5 + $0xe10] sm:$0xff]
    %v522 = vld [vmem:[#allocation5 + $0xe18] sm:$0xff]
    %v523 = vld [vmem:[#allocation5 + $0xe20] sm:$0xff]
    %v524 = vld [vmem:[#allocation5 + $0xe28] sm:$0xff]
    %v525 = vld [vmem:[#allocation5 + $0xe30] sm:$0xff]
    %v526 = vld [vmem:[#allocation5 + $0xe38] sm:$0xff]
    %v527 = vld [vmem:[#allocation5 + $0xe40] sm:$0xff]
    %v528 = vld [vmem:[#allocation5 + $0xe48] sm:$0xff]
    %v529 = vld [vmem:[#allocation5 + $0xe50] sm:$0xff]
    %v530 = vld [vmem:[#allocation5 + $0xe58] sm:$0xff]
    %v531 = vld [vmem:[#allocation5 + $0xe60] sm:$0xff]
    %v532 = vld [vmem:[#allocation5 + $0xe68] sm:$0xff]
    %v533 = vld [vmem:[#allocation5 + $0xe70] sm:$0xff]
    %v534 = vld [vmem:[#allocation5 + $0xe78] sm:$0xff]
    %v535 = vld [vmem:[#allocation5 + $0xe80] sm:$0xff]
    %v536 = vld [vmem:[#allocation5 + $0xe88] sm:$0xff]
    %v537 = vld [vmem:[#allocation5 + $0xe90] sm:$0xff]
    %v538 = vld [vmem:[#allocation5 + $0xe98] sm:$0xff]
    %v539 = vld [vmem:[#allocation5 + $0xea0] sm:$0xff]
    %v540 = vld [vmem:[#allocation5 + $0xea8] sm:$0xff]
    %v541 = vld [vmem:[#allocation5 + $0xeb0] sm:$0xff]
    %v542 = vld [vmem:[#allocation5 + $0xeb8] sm:$0xff]
    %v543 = vld [vmem:[#allocation5 + $0xec0] sm:$0xff]
    %v544 = vld [vmem:[#allocation5 + $0xec8] sm:$0xff]
    %v545 = vld [vmem:[#allocation5 + $0xed0] sm:$0xff]
    %v546 = vld [vmem:[#allocation5 + $0xed8] sm:$0xff]
    %v547 = vld [vmem:[#allocation5 + $0xee0] sm:$0xff]
    %v548 = vld [vmem:[#allocation5 + $0xee8] sm:$0xff]
    %v549 = vld [vmem:[#allocation5 + $0xef0] sm:$0xff]
    %v550 = vld [vmem:[#allocation5 + $0xef8] sm:$0xff]
    %v551 = vld [vmem:[#allocation5 + $0xf00] sm:$0xff]
    %v552 = vld [vmem:[#allocation5 + $0xf08] sm:$0xff]
    %v553 = vld [vmem:[#allocation5 + $0xf10] sm:$0xff]
    %v554 = vld [vmem:[#allocation5 + $0xf18] sm:$0xff]
    %v555 = vld [vmem:[#allocation5 + $0xf20] sm:$0xff]
    %v556 = vld [vmem:[#allocation5 + $0xf28] sm:$0xff]
    %v557 = vld [vmem:[#allocation5 + $0xf30] sm:$0xff]
    %v558 = vld [vmem:[#allocation5 + $0xf38] sm:$0xff]
    %v559 = vld [vmem:[#allocation5 + $0xf40] sm:$0xff]
    %v560 = vld [vmem:[#allocation5 + $0xf48] sm:$0xff]
    %v561 = vld [vmem:[#allocation5 + $0xf50] sm:$0xff]
    %v562 = vld [vmem:[#allocation5 + $0xf58] sm:$0xff]
    %v563 = vld [vmem:[#allocation5 + $0xf60] sm:$0xff]
    %v564 = vld [vmem:[#allocation5 + $0xf68] sm:$0xff]
    %v565 = vld [vmem:[#allocation5 + $0xf70] sm:$0xff]
    %v566 = vld [vmem:[#allocation5 + $0xf78] sm:$0xff]
    %v567 = vld [vmem:[#allocation5 + $0xf80] sm:$0xff]
    %v568 = vld [vmem:[#allocation5 + $0xf88] sm:$0xff]
    %v569 = vld [vmem:[#allocation5 + $0xf90] sm:$0xff]
    %v570 = vld [vmem:[#allocation5 + $0xf98] sm:$0xff]
    %v571 = vld [vmem:[#allocation5 + $0xfa0] sm:$0xff]
    %v572 = vld [vmem:[#allocation5 + $0xfa8] sm:$0xff]
    %v573 = vld [vmem:[#allocation5 + $0xfb0] sm:$0xff]
    %v574 = vld [vmem:[#allocation5 + $0xfb8] sm:$0xff]
    %v575 = vld [vmem:[#allocation5 + $0xfc0] sm:$0xff]
    %v576 = vld [vmem:[#allocation5 + $0xfc8] sm:$0xff]
    %v577 = vld [vmem:[#allocation5 + $0xfd0] sm:$0xff]
    %v578 = vld [vmem:[#allocation5 + $0xfd8] sm:$0xff]
    %v579 = vld [vmem:[#allocation5 + $0xfe0] sm:$0xff]
    %v580 = vld [vmem:[#allocation5 + $0xfe8] sm:$0xff]
    %v581 = vld [vmem:[#allocation5 + $0xff0] sm:$0xff]
    %v582 = vld [vmem:[#allocation5 + $0xff8] sm:$0xff]
    %v583 = vld [vmem:[#allocation5 + $0x1000] sm:$0xff]
    %v584 = vld [vmem:[#allocation5 + $0x1008] sm:$0xff]
    %v585 = vld [vmem:[#allocation5 + $0x1010] sm:$0xff]
    %v586 = vld [vmem:[#allocation5 + $0x1018] sm:$0xff]
    %v587 = vld [vmem:[#allocation5 + $0x1020] sm:$0xff]
    %v588 = vld [vmem:[#allocation5 + $0x1028] sm:$0xff]
    %v589 = vld [vmem:[#allocation5 + $0x1030] sm:$0xff]
    %v590 = vld [vmem:[#allocation5 + $0x1038] sm:$0xff]
    %v591 = vld [vmem:[#allocation5 + $0x1040] sm:$0xff]
    %v592 = vld [vmem:[#allocation5 + $0x1048] sm:$0xff]
    %v593 = vld [vmem:[#allocation5 + $0x1050] sm:$0xff]
    %v594 = vld [vmem:[#allocation5 + $0x1058] sm:$0xff]
    %v595 = vld [vmem:[#allocation5 + $0x1060] sm:$0xff]
    %v596 = vld [vmem:[#allocation5 + $0x1068] sm:$0xff]
    %v597 = vld [vmem:[#allocation5 + $0x1070] sm:$0xff]
    %v598 = vld [vmem:[#allocation5 + $0x1078] sm:$0xff]
    %v599 = vld [vmem:[#allocation5 + $0x1080] sm:$0xff]
    %v600 = vld [vmem:[#allocation5 + $0x1088] sm:$0xff]
    %v601 = vld [vmem:[#allocation5 + $0x1090] sm:$0xff]
    %v602 = vld [vmem:[#allocation5 + $0x1098] sm:$0xff]
    %v603 = vld [vmem:[#allocation5 + $0x10a0] sm:$0xff]
    %v604 = vld [vmem:[#allocation5 + $0x10a8] sm:$0xff]
    %v605 = vld [vmem:[#allocation5 + $0x10b0] sm:$0xff]
    %v606 = vld [vmem:[#allocation5 + $0x10b8] sm:$0xff]
    %v607 = vld [vmem:[#allocation5 + $0x10c0] sm:$0xff]
    %v608 = vld [vmem:[#allocation5 + $0x10c8] sm:$0xff]
    %v609 = vld [vmem:[#allocation5 + $0x10d0] sm:$0xff]
    %v610 = vld [vmem:[#allocation5 + $0x10d8] sm:$0xff]
    %v611 = vld [vmem:[#allocation5 + $0x10e0] sm:$0xff]
    %v612 = vld [vmem:[#allocation5 + $0x10e8] sm:$0xff]
    %v613 = vld [vmem:[#allocation5 + $0x10f0] sm:$0xff]
    %v614 = vld [vmem:[#allocation5 + $0x10f8] sm:$0xff]
    %v615 = vld [vmem:[#allocation5 + $0x1100] sm:$0xff]
    %v616 = vld [vmem:[#allocation5 + $0x1108] sm:$0xff]
    %v617 = vld [vmem:[#allocation5 + $0x1110] sm:$0xff]
    %v618 = vld [vmem:[#allocation5 + $0x1118] sm:$0xff]
    %v619 = vld [vmem:[#allocation5 + $0x1120] sm:$0xff]
    %v620 = vld [vmem:[#allocation5 + $0x1128] sm:$0xff]
    %v621 = vld [vmem:[#allocation5 + $0x1130] sm:$0xff]
    %v622 = vld [vmem:[#allocation5 + $0x1138] sm:$0xff]
    %v623 = vld [vmem:[#allocation5 + $0x1140] sm:$0xff]
    %v624 = vld [vmem:[#allocation5 + $0x1148] sm:$0xff]
    %v625 = vld [vmem:[#allocation5 + $0x1150] sm:$0xff]
    %v626 = vld [vmem:[#allocation5 + $0x1158] sm:$0xff]
    %v627 = vld [vmem:[#allocation5 + $0x1160] sm:$0xff]
    %v628 = vld [vmem:[#allocation5 + $0x1168] sm:$0xff]
    %v629 = vld [vmem:[#allocation5 + $0x1170] sm:$0xff]
    %v630 = vld [vmem:[#allocation5 + $0x1178] sm:$0xff]
    %v631 = vld [vmem:[#allocation5 + $0x1180] sm:$0xff]
    %v632 = vld [vmem:[#allocation5 + $0x1188] sm:$0xff]
    %v633 = vld [vmem:[#allocation5 + $0x1190] sm:$0xff]
    %v634 = vld [vmem:[#allocation5 + $0x1198] sm:$0xff]
    %v635 = vld [vmem:[#allocation5 + $0x11a0] sm:$0xff]
    %v636 = vld [vmem:[#allocation5 + $0x11a8] sm:$0xff]
    %v637 = vld [vmem:[#allocation5 + $0x11b0] sm:$0xff]
    %v638 = vld [vmem:[#allocation5 + $0x11b8] sm:$0xff]
    %v639 = vld [vmem:[#allocation5 + $0x11c0] sm:$0xff]
    %v640 = vld [vmem:[#allocation5 + $0x11c8] sm:$0xff]
    %v641 = vld [vmem:[#allocation5 + $0x11d0] sm:$0xff]
    %v642 = vld [vmem:[#allocation5 + $0x11d8] sm:$0xff]
    %v643 = vld [vmem:[#allocation5 + $0x11e0] sm:$0xff]
    %v644 = vld [vmem:[#allocation5 + $0x11e8] sm:$0xff]
    %v645 = vld [vmem:[#allocation5 + $0x11f0] sm:$0xff]
    %v646 = vld [vmem:[#allocation5 + $0x11f8] sm:$0xff]
    %v648 = vlaneseq
    %v649 = vshrl.u32 %v648, 7
    %v650 = vsub.s32 0, %v649
    %v651 = vrot.slane %v54, %v650
    %v652 = vlaneseq
    %v653 = vshrl.u32 %v652, 7
    %v654 = vsub.s32 1, %v653
    %v655 = vrot.slane %v54, %v654
    %v656 = vlaneseq
    %v657 = vshrl.u32 %v656, 7
    %v658 = vsub.s32 2, %v657
    %v659 = vrot.slane %v54, %v658
    %v660 = vlaneseq
    %v661 = vshrl.u32 %v660, 7
    %v662 = vsub.s32 3, %v661
    %v663 = vrot.slane %v54, %v662
    %v664 = vlaneseq
    %v665 = vshrl.u32 %v664, 7
    %v666 = vsub.s32 4, %v665
    %v667 = vrot.slane %v54, %v666
    %v668 = vlaneseq
    %v669 = vshrl.u32 %v668, 7
    %v670 = vsub.s32 5, %v669
    %v671 = vrot.slane %v54, %v670
    %678 = vmatprep.subr.mxu0 %v162
    %679 = vmatpush1.msra.mxu0 %v161
    %680 = vmatprep.subr.mxu0 %v156
    %681 = vmatpush1.msra.mxu0 %v155
    %682 = vmatprep.subr.mxu0 %v150
    %683 = vmatpush1.msra.mxu0 %v149
    %684 = vmatprep.subr.mxu0 %v144
    %685 = vmatpush1.msra.mxu0 %v143
    %686 = vmatprep.subr.mxu0 %v138
    %687 = vmatpush1.msra.mxu0 %v137
    %688 = vmatprep.subr.mxu0 %v132
    %689 = vmatpush1.msra.mxu0 %v131
    %690 = vmatprep.subr.mxu0 %v126
    %691 = vmatpush1.msra.mxu0 %v125
    %692 = vmatprep.subr.mxu0 %v120
    %693 = vmatpush1.msra.mxu0 %v119
    %694 = vmatprep.subr.mxu0 %v114
    %695 = vmatpush1.msra.mxu0 %v113
    %696 = vmatprep.subr.mxu0 %v108
    %697 = vmatpush1.msra.mxu0 %v107
    %698 = vmatprep.subr.mxu0 %v102
    %699 = vmatpush1.msra.mxu0 %v101
    %700 = vmatprep.subr.mxu0 %v96
    %701 = vmatpush1.msra.mxu0 %v95
    %702 = vmatprep.subr.mxu0 %v90
    %703 = vmatpush1.msra.mxu0 %v89
    %704 = vmatprep.subr.mxu0 %v84
    %705 = vmatpush1.msra.mxu0 %v83
    %706 = vmatprep.subr.mxu0 %v78
    %707 = vmatpush1.msra.mxu0 %v77
    %708 = vmatprep.subr.mxu0 %v72
    %709 = vmatpush1.msra.mxu0 %v71
    %710 = vmatprep.subr.mxu0 %v258
    %711 = vmatpush2.msra.mxu0 %v257
    %712 = vmatprep.subr.mxu0 %v252
    %713 = vmatpush2.msra.mxu0 %v251
    %714 = vmatprep.subr.mxu0 %v246
    %715 = vmatpush2.msra.mxu0 %v245
    %716 = vmatprep.subr.mxu0 %v240
    %717 = vmatpush2.msra.mxu0 %v239
    %718 = vmatprep.subr.mxu0 %v234
    %719 = vmatpush2.msra.mxu0 %v233
    %720 = vmatprep.subr.mxu0 %v228
    %721 = vmatpush2.msra.mxu0 %v227
    %722 = vmatprep.subr.mxu0 %v222
    %723 = vmatpush2.msra.mxu0 %v221
    %724 = vmatprep.subr.mxu0 %v216
    %725 = vmatpush2.msra.mxu0 %v215
    %726 = vmatprep.subr.mxu0 %v210
    %727 = vmatpush2.msra.mxu0 %v209
    %728 = vmatprep.subr.mxu0 %v204
    %729 = vmatpush2.msra.mxu0 %v203
    %730 = vmatprep.subr.mxu0 %v198
    %731 = vmatpush2.msra.mxu0 %v197
    %732 = vmatprep.subr.mxu0 %v192
    %733 = vmatpush2.msra.mxu0 %v191
    %734 = vmatprep.subr.mxu0 %v186
    %735 = vmatpush2.msra.mxu0 %v185
    %736 = vmatprep.subr.mxu0 %v180
    %737 = vmatpush2.msra.mxu0 %v179
    %738 = vmatprep.subr.mxu0 %v174
    %739 = vmatpush2.msra.mxu0 %v173
    %740 = vmatprep.subr.mxu0 %v168
    %741 = vmatpush2.msra.mxu0 %v167
    %742 = vmatprep.mubr.f32.mxu0 %v60
    %743 = vmatmul.mubr.f32.gmra.mxu0 %v59
    %v744 = vpop.f32.mrf.mxu0
    %v745 = vadd.f32 %v651, %v744
    %v746 = vpop.f32.mrf.mxu0
    %v747 = vadd.f32 %v655, %v746
    %748 = vmatprep.mubr.f32.mxu0 %v66
    %749 = vmatmul.mubr.f32.gmra.mxu0 %v65
    %v750 = vpop.f32.mrf.mxu0
    %v751 = vadd.f32 %v651, %v750
    %v752 = vpop.f32.mrf.mxu0
    %v753 = vadd.f32 %v655, %v752
    %754 = vdwg.mxu0
    %755 = vmatprep.subr.mxu0 %v354
    %756 = vmatpush1.msra.mxu0 %v353
    %757 = vmatprep.subr.mxu0 %v348
    %758 = vmatpush1.msra.mxu0 %v347
    %759 = vmatprep.subr.mxu0 %v342
    %760 = vmatpush1.msra.mxu0 %v341
    %761 = vmatprep.subr.mxu0 %v336
    %762 = vmatpush1.msra.mxu0 %v335
    %763 = vmatprep.subr.mxu0 %v330
    %764 = vmatpush1.msra.mxu0 %v329
    %765 = vmatprep.subr.mxu0 %v324
    %766 = vmatpush1.msra.mxu0 %v323
    %767 = vmatprep.subr.mxu0 %v318
    %768 = vmatpush1.msra.mxu0 %v317
    %769 = vmatprep.subr.mxu0 %v312
    %770 = vmatpush1.msra.mxu0 %v311
    %771 = vmatprep.subr.mxu0 %v306
    %772 = vmatpush1.msra.mxu0 %v305
    %773 = vmatprep.subr.mxu0 %v300
    %774 = vmatpush1.msra.mxu0 %v299
    %775 = vmatprep.subr.mxu0 %v294
    %776 = vmatpush1.msra.mxu0 %v293
    %777 = vmatprep.subr.mxu0 %v288
    %778 = vmatpush1.msra.mxu0 %v287
    %779 = vmatprep.subr.mxu0 %v282
    %780 = vmatpush1.msra.mxu0 %v281
    %781 = vmatprep.subr.mxu0 %v276
    %782 = vmatpush1.msra.mxu0 %v275
    %783 = vmatprep.subr.mxu0 %v270
    %784 = vmatpush1.msra.mxu0 %v269
    %785 = vmatprep.subr.mxu0 %v264
    %786 = vmatpush1.msra.mxu0 %v263
    %787 = vmatprep.subr.mxu0 %v450
    %788 = vmatpush2.msra.mxu0 %v449
    %789 = vmatprep.subr.mxu0 %v444
    %790 = vmatpush2.msra.mxu0 %v443
    %791 = vmatprep.subr.mxu0 %v438
    %792 = vmatpush2.msra.mxu0 %v437
    %793 = vmatprep.subr.mxu0 %v432
    %794 = vmatpush2.msra.mxu0 %v431
    %795 = vmatprep.subr.mxu0 %v426
    %796 = vmatpush2.msra.mxu0 %v425
    %797 = vmatprep.subr.mxu0 %v420
    %798 = vmatpush2.msra.mxu0 %v419
    %799 = vmatprep.subr.mxu0 %v414
    %800 = vmatpush2.msra.mxu0 %v413
    %801 = vmatprep.subr.mxu0 %v408
    %802 = vmatpush2.msra.mxu0 %v407
    %803 = vmatprep.subr.mxu0 %v402
    %804 = vmatpush2.msra.mxu0 %v401
    %805 = vmatprep.subr.mxu0 %v396
    %806 = vmatpush2.msra.mxu0 %v395
    %807 = vmatprep.subr.mxu0 %v390
    %808 = vmatpush2.msra.mxu0 %v389
    %809 = vmatprep.subr.mxu0 %v384
    %810 = vmatpush2.msra.mxu0 %v383
    %811 = vmatprep.subr.mxu0 %v378
    %812 = vmatpush2.msra.mxu0 %v377
    %813 = vmatprep.subr.mxu0 %v372
    %814 = vmatpush2.msra.mxu0 %v371
    %815 = vmatprep.subr.mxu0 %v366
    %816 = vmatpush2.msra.mxu0 %v365
    %817 = vmatprep.subr.mxu0 %v360
    %818 = vmatpush2.msra.mxu0 %v359
    %819 = vmatprep.mubr.f32.mxu0 %v62
    %820 = vmatmul.mubr.f32.gmra.mxu0 %v61
    %v821 = vpop.f32.mrf.mxu0
    %v822 = vadd.f32 %v745, %v821
    %v823 = vpop.f32.mrf.mxu0
    %v824 = vadd.f32 %v747, %v823
    %825 = vmatprep.mubr.f32.mxu0 %v68
    %826 = vmatmul.mubr.f32.gmra.mxu0 %v67
    %v827 = vpop.f32.mrf.mxu0
    %v828 = vadd.f32 %v751, %v827
    %v829 = vpop.f32.mrf.mxu0
    %v830 = vadd.f32 %v753, %v829
    %831 = vdwg.mxu0
    %832 = vmatprep.subr.mxu0 %v546
    %833 = vmatpush1.msra.mxu0 %v545
    %834 = vmatprep.subr.mxu0 %v540
    %835 = vmatpush1.msra.mxu0 %v539
    %836 = vmatprep.subr.mxu0 %v534
    %837 = vmatpush1.msra.mxu0 %v533
    %838 = vmatprep.subr.mxu0 %v528
    %839 = vmatpush1.msra.mxu0 %v527
    %840 = vmatprep.subr.mxu0 %v522
    %841 = vmatpush1.msra.mxu0 %v521
    %842 = vmatprep.subr.mxu0 %v516
    %843 = vmatpush1.msra.mxu0 %v515
    %844 = vmatprep.subr.mxu0 %v510
    %845 = vmatpush1.msra.mxu0 %v509
    %846 = vmatprep.subr.mxu0 %v504
    %847 = vmatpush1.msra.mxu0 %v503
    %848 = vmatprep.subr.mxu0 %v498
    %849 = vmatpush1.msra.mxu0 %v497
    %850 = vmatprep.subr.mxu0 %v492
    %851 = vmatpush1.msra.mxu0 %v491
    %852 = vmatprep.subr.mxu0 %v486
    %853 = vmatpush1.msra.mxu0 %v485
    %854 = vmatprep.subr.mxu0 %v480
    %855 = vmatpush1.msra.mxu0 %v479
    %856 = vmatprep.subr.mxu0 %v474
    %857 = vmatpush1.msra.mxu0 %v473
    %858 = vmatprep.subr.mxu0 %v468
    %859 = vmatpush1.msra.mxu0 %v467
    %860 = vmatprep.subr.mxu0 %v462
    %861 = vmatpush1.msra.mxu0 %v461
    %862 = vmatprep.subr.mxu0 %v456
    %863 = vmatpush1.msra.mxu0 %v455
    %864 = vmatprep.subr.mxu0 %v642
    %865 = vmatpush2.msra.mxu0 %v641
    %866 = vmatprep.subr.mxu0 %v636
    %867 = vmatpush2.msra.mxu0 %v635
    %868 = vmatprep.subr.mxu0 %v630
    %869 = vmatpush2.msra.mxu0 %v629
    %870 = vmatprep.subr.mxu0 %v624
    %871 = vmatpush2.msra.mxu0 %v623
    %872 = vmatprep.subr.mxu0 %v618
    %873 = vmatpush2.msra.mxu0 %v617
    %874 = vmatprep.subr.mxu0 %v612
    %875 = vmatpush2.msra.mxu0 %v611
    %876 = vmatprep.subr.mxu0 %v606
    %877 = vmatpush2.msra.mxu0 %v605
    %878 = vmatprep.subr.mxu0 %v600
    %879 = vmatpush2.msra.mxu0 %v599
    %880 = vmatprep.subr.mxu0 %v594
    %881 = vmatpush2.msra.mxu0 %v593
    %882 = vmatprep.subr.mxu0 %v588
    %883 = vmatpush2.msra.mxu0 %v587
    %884 = vmatprep.subr.mxu0 %v582
    %885 = vmatpush2.msra.mxu0 %v581
    %886 = vmatprep.subr.mxu0 %v576
    %887 = vmatpush2.msra.mxu0 %v575
    %888 = vmatprep.subr.mxu0 %v570
    %889 = vmatpush2.msra.mxu0 %v569
    %890 = vmatprep.subr.mxu0 %v564
    %891 = vmatpush2.msra.mxu0 %v563
    %892 = vmatprep.subr.mxu0 %v558
    %893 = vmatpush2.msra.mxu0 %v557
    %894 = vmatprep.subr.mxu0 %v552
    %895 = vmatpush2.msra.mxu0 %v551
    %896 = vmatprep.mubr.f32.mxu0 %v64
    %897 = vmatmul.mubr.f32.gmra.mxu0 %v63
    %v898 = vpop.f32.mrf.mxu0
    %v899 = vadd.f32 %v822, %v898
    %v900 = vpop.f32.mrf.mxu0
    %v901 = vadd.f32 %v824, %v900
    %902 = vmatprep.mubr.f32.mxu0 %v70
    %903 = vmatmul.mubr.f32.gmra.mxu0 %v69
    %v904 = vpop.f32.mrf.mxu0
    %v905 = vadd.f32 %v828, %v904
    %v906 = vpop.f32.mrf.mxu0
    %v907 = vadd.f32 %v830, %v906
    %908 = vdwg.mxu0
    %909 = vmatprep.subr.mxu0 %v164
    %910 = vmatpush1.msra.mxu0 %v163
    %911 = vmatprep.subr.mxu0 %v158
    %912 = vmatpush1.msra.mxu0 %v157
    %913 = vmatprep.subr.mxu0 %v152
    %914 = vmatpush1.msra.mxu0 %v151
    %915 = vmatprep.subr.mxu0 %v146
    %916 = vmatpush1.msra.mxu0 %v145
    %917 = vmatprep.subr.mxu0 %v140
    %918 = vmatpush1.msra.mxu0 %v139
    %919 = vmatprep.subr.mxu0 %v134
    %920 = vmatpush1.msra.mxu0 %v133
    %921 = vmatprep.subr.mxu0 %v128
    %922 = vmatpush1.msra.mxu0 %v127
    %923 = vmatprep.subr.mxu0 %v122
    %924 = vmatpush1.msra.mxu0 %v121
    %925 = vmatprep.subr.mxu0 %v116
    %926 = vmatpush1.msra.mxu0 %v115
    %927 = vmatprep.subr.mxu0 %v110
    %928 = vmatpush1.msra.mxu0 %v109
    %929 = vmatprep.subr.mxu0 %v104
    %930 = vmatpush1.msra.mxu0 %v103
    %931 = vmatprep.subr.mxu0 %v98
    %932 = vmatpush1.msra.mxu0 %v97
    %933 = vmatprep.subr.mxu0 %v92
    %934 = vmatpush1.msra.mxu0 %v91
    %935 = vmatprep.subr.mxu0 %v86
    %936 = vmatpush1.msra.mxu0 %v85
    %937 = vmatprep.subr.mxu0 %v80
    %938 = vmatpush1.msra.mxu0 %v79
    %939 = vmatprep.subr.mxu0 %v74
    %940 = vmatpush1.msra.mxu0 %v73
    %941 = vmatprep.subr.mxu0 %v260
    %942 = vmatpush2.msra.mxu0 %v259
    %943 = vmatprep.subr.mxu0 %v254
    %944 = vmatpush2.msra.mxu0 %v253
    %945 = vmatprep.subr.mxu0 %v248
    %946 = vmatpush2.msra.mxu0 %v247
    %947 = vmatprep.subr.mxu0 %v242
    %948 = vmatpush2.msra.mxu0 %v241
    %949 = vmatprep.subr.mxu0 %v236
    %950 = vmatpush2.msra.mxu0 %v235
    %951 = vmatprep.subr.mxu0 %v230
    %952 = vmatpush2.msra.mxu0 %v229
    %953 = vmatprep.subr.mxu0 %v224
    %954 = vmatpush2.msra.mxu0 %v223
    %955 = vmatprep.subr.mxu0 %v218
    %956 = vmatpush2.msra.mxu0 %v217
    %957 = vmatprep.subr.mxu0 %v212
    %958 = vmatpush2.msra.mxu0 %v211
    %959 = vmatprep.subr.mxu0 %v206
    %960 = vmatpush2.msra.mxu0 %v205
    %961 = vmatprep.subr.mxu0 %v200
    %962 = vmatpush2.msra.mxu0 %v199
    %963 = vmatprep.subr.mxu0 %v194
    %964 = vmatpush2.msra.mxu0 %v193
    %965 = vmatprep.subr.mxu0 %v188
    %966 = vmatpush2.msra.mxu0 %v187
    %967 = vmatprep.subr.mxu0 %v182
    %968 = vmatpush2.msra.mxu0 %v181
    %969 = vmatprep.subr.mxu0 %v176
    %970 = vmatpush2.msra.mxu0 %v175
    %971 = vmatprep.subr.mxu0 %v170
    %972 = vmatpush2.msra.mxu0 %v169
    %973 = vmatprep.mubr.f32.mxu0 %v60
    %974 = vmatmul.mubr.f32.gmra.mxu0 %v59
    %v975 = vpop.f32.mrf.mxu0
    %v976 = vadd.f32 %v659, %v975
    %v977 = vpop.f32.mrf.mxu0
    %v978 = vadd.f32 %v663, %v977
    %979 = vmatprep.mubr.f32.mxu0 %v66
    %980 = vmatmul.mubr.f32.gmra.mxu0 %v65
    %v981 = vpop.f32.mrf.mxu0
    %v982 = vadd.f32 %v659, %v981
    %v983 = vpop.f32.mrf.mxu0
    %v984 = vadd.f32 %v663, %v983
    %985 = vdwg.mxu0
    %986 = vmatprep.subr.mxu0 %v356
    %987 = vmatpush1.msra.mxu0 %v355
    %988 = vmatprep.subr.mxu0 %v350
    %989 = vmatpush1.msra.mxu0 %v349
    %990 = vmatprep.subr.mxu0 %v344
    %991 = vmatpush1.msra.mxu0 %v343
    %992 = vmatprep.subr.mxu0 %v338
    %993 = vmatpush1.msra.mxu0 %v337
    %994 = vmatprep.subr.mxu0 %v332
    %995 = vmatpush1.msra.mxu0 %v331
    %996 = vmatprep.subr.mxu0 %v326
    %997 = vmatpush1.msra.mxu0 %v325
    %998 = vmatprep.subr.mxu0 %v320
    %999 = vmatpush1.msra.mxu0 %v319
    %1000 = vmatprep.subr.mxu0 %v314
    %1001 = vmatpush1.msra.mxu0 %v313
    %1002 = vmatprep.subr.mxu0 %v308
    %1003 = vmatpush1.msra.mxu0 %v307
    %1004 = vmatprep.subr.mxu0 %v302
    %1005 = vmatpush1.msra.mxu0 %v301
    %1006 = vmatprep.subr.mxu0 %v296
    %1007 = vmatpush1.msra.mxu0 %v295
    %1008 = vmatprep.subr.mxu0 %v290
    %1009 = vmatpush1.msra.mxu0 %v289
    %1010 = vmatprep.subr.mxu0 %v284
    %1011 = vmatpush1.msra.mxu0 %v283
    %1012 = vmatprep.subr.mxu0 %v278
    %1013 = vmatpush1.msra.mxu0 %v277
    %1014 = vmatprep.subr.mxu0 %v272
    %1015 = vmatpush1.msra.mxu0 %v271
    %1016 = vmatprep.subr.mxu0 %v266
    %1017 = vmatpush1.msra.mxu0 %v265
    %1018 = vmatprep.subr.mxu0 %v452
    %1019 = vmatpush2.msra.mxu0 %v451
    %1020 = vmatprep.subr.mxu0 %v446
    %1021 = vmatpush2.msra.mxu0 %v445
    %1022 = vmatprep.subr.mxu0 %v440
    %1023 = vmatpush2.msra.mxu0 %v439
    %1024 = vmatprep.subr.mxu0 %v434
    %1025 = vmatpush2.msra.mxu0 %v433
    %1026 = vmatprep.subr.mxu0 %v428
    %1027 = vmatpush2.msra.mxu0 %v427
    %1028 = vmatprep.subr.mxu0 %v422
    %1029 = vmatpush2.msra.mxu0 %v421
    %1030 = vmatprep.subr.mxu0 %v416
    %1031 = vmatpush2.msra.mxu0 %v415
    %1032 = vmatprep.subr.mxu0 %v410
    %1033 = vmatpush2.msra.mxu0 %v409
    %1034 = vmatprep.subr.mxu0 %v404
    %1035 = vmatpush2.msra.mxu0 %v403
    %1036 = vmatprep.subr.mxu0 %v398
    %1037 = vmatpush2.msra.mxu0 %v397
    %1038 = vmatprep.subr.mxu0 %v392
    %1039 = vmatpush2.msra.mxu0 %v391
    %1040 = vmatprep.subr.mxu0 %v386
    %1041 = vmatpush2.msra.mxu0 %v385
    %1042 = vmatprep.subr.mxu0 %v380
    %1043 = vmatpush2.msra.mxu0 %v379
    %1044 = vmatprep.subr.mxu0 %v374
    %1045 = vmatpush2.msra.mxu0 %v373
    %1046 = vmatprep.subr.mxu0 %v368
    %1047 = vmatpush2.msra.mxu0 %v367
    %1048 = vmatprep.subr.mxu0 %v362
    %1049 = vmatpush2.msra.mxu0 %v361
    %1050 = vmatprep.mubr.f32.mxu0 %v62
    %1051 = vmatmul.mubr.f32.gmra.mxu0 %v61
    %v1052 = vpop.f32.mrf.mxu0
    %v1053 = vadd.f32 %v976, %v1052
    %v1054 = vpop.f32.mrf.mxu0
    %v1055 = vadd.f32 %v978, %v1054
    %1056 = vmatprep.mubr.f32.mxu0 %v68
    %1057 = vmatmul.mubr.f32.gmra.mxu0 %v67
    %v1058 = vpop.f32.mrf.mxu0
    %v1059 = vadd.f32 %v982, %v1058
    %v1060 = vpop.f32.mrf.mxu0
    %v1061 = vadd.f32 %v984, %v1060
    %1062 = vdwg.mxu0
    %1063 = vmatprep.subr.mxu0 %v548
    %1064 = vmatpush1.msra.mxu0 %v547
    %1065 = vmatprep.subr.mxu0 %v542
    %1066 = vmatpush1.msra.mxu0 %v541
    %1067 = vmatprep.subr.mxu0 %v536
    %1068 = vmatpush1.msra.mxu0 %v535
    %1069 = vmatprep.subr.mxu0 %v530
    %1070 = vmatpush1.msra.mxu0 %v529
    %1071 = vmatprep.subr.mxu0 %v524
    %1072 = vmatpush1.msra.mxu0 %v523
    %1073 = vmatprep.subr.mxu0 %v518
    %1074 = vmatpush1.msra.mxu0 %v517
    %1075 = vmatprep.subr.mxu0 %v512
    %1076 = vmatpush1.msra.mxu0 %v511
    %1077 = vmatprep.subr.mxu0 %v506
    %1078 = vmatpush1.msra.mxu0 %v505
    %1079 = vmatprep.subr.mxu0 %v500
    %1080 = vmatpush1.msra.mxu0 %v499
    %1081 = vmatprep.subr.mxu0 %v494
    %1082 = vmatpush1.msra.mxu0 %v493
    %1083 = vmatprep.subr.mxu0 %v488
    %1084 = vmatpush1.msra.mxu0 %v487
    %1085 = vmatprep.subr.mxu0 %v482
    %1086 = vmatpush1.msra.mxu0 %v481
    %1087 = vmatprep.subr.mxu0 %v476
    %1088 = vmatpush1.msra.mxu0 %v475
    %1089 = vmatprep.subr.mxu0 %v470
    %1090 = vmatpush1.msra.mxu0 %v469
    %1091 = vmatprep.subr.mxu0 %v464
    %1092 = vmatpush1.msra.mxu0 %v463
    %1093 = vmatprep.subr.mxu0 %v458
    %1094 = vmatpush1.msra.mxu0 %v457
    %1095 = vmatprep.subr.mxu0 %v644
    %1096 = vmatpush2.msra.mxu0 %v643
    %1097 = vmatprep.subr.mxu0 %v638
    %1098 = vmatpush2.msra.mxu0 %v637
    %1099 = vmatprep.subr.mxu0 %v632
    %1100 = vmatpush2.msra.mxu0 %v631
    %1101 = vmatprep.subr.mxu0 %v626
    %1102 = vmatpush2.msra.mxu0 %v625
    %1103 = vmatprep.subr.mxu0 %v620
    %1104 = vmatpush2.msra.mxu0 %v619
    %1105 = vmatprep.subr.mxu0 %v614
    %1106 = vmatpush2.msra.mxu0 %v613
    %1107 = vmatprep.subr.mxu0 %v608
    %1108 = vmatpush2.msra.mxu0 %v607
    %1109 = vmatprep.subr.mxu0 %v602
    %1110 = vmatpush2.msra.mxu0 %v601
    %1111 = vmatprep.subr.mxu0 %v596
    %1112 = vmatpush2.msra.mxu0 %v595
    %1113 = vmatprep.subr.mxu0 %v590
    %1114 = vmatpush2.msra.mxu0 %v589
    %1115 = vmatprep.subr.mxu0 %v584
    %1116 = vmatpush2.msra.mxu0 %v583
    %1117 = vmatprep.subr.mxu0 %v578
    %1118 = vmatpush2.msra.mxu0 %v577
    %1119 = vmatprep.subr.mxu0 %v572
    %1120 = vmatpush2.msra.mxu0 %v571
    %1121 = vmatprep.subr.mxu0 %v566
    %1122 = vmatpush2.msra.mxu0 %v565
    %1123 = vmatprep.subr.mxu0 %v560
    %1124 = vmatpush2.msra.mxu0 %v559
    %1125 = vmatprep.subr.mxu0 %v554
    %1126 = vmatpush2.msra.mxu0 %v553
    %1127 = vmatprep.mubr.f32.mxu0 %v64
    %1128 = vmatmul.mubr.f32.gmra.mxu0 %v63
    %v1129 = vpop.f32.mrf.mxu0
    %v1130 = vadd.f32 %v1053, %v1129
    %v1131 = vpop.f32.mrf.mxu0
    %v1132 = vadd.f32 %v1055, %v1131
    %1133 = vmatprep.mubr.f32.mxu0 %v70
    %1134 = vmatmul.mubr.f32.gmra.mxu0 %v69
    %v1135 = vpop.f32.mrf.mxu0
    %v1136 = vadd.f32 %v1059, %v1135
    %v1137 = vpop.f32.mrf.mxu0
    %v1138 = vadd.f32 %v1061, %v1137
    %1139 = vdwg.mxu0
    %1140 = vmatprep.subr.mxu0 %v166
    %1141 = vmatpush1.msra.mxu0 %v165
    %1142 = vmatprep.subr.mxu0 %v160
    %1143 = vmatpush1.msra.mxu0 %v159
    %1144 = vmatprep.subr.mxu0 %v154
    %1145 = vmatpush1.msra.mxu0 %v153
    %1146 = vmatprep.subr.mxu0 %v148
    %1147 = vmatpush1.msra.mxu0 %v147
    %1148 = vmatprep.subr.mxu0 %v142
    %1149 = vmatpush1.msra.mxu0 %v141
    %1150 = vmatprep.subr.mxu0 %v136
    %1151 = vmatpush1.msra.mxu0 %v135
    %1152 = vmatprep.subr.mxu0 %v130
    %1153 = vmatpush1.msra.mxu0 %v129
    %1154 = vmatprep.subr.mxu0 %v124
    %1155 = vmatpush1.msra.mxu0 %v123
    %1156 = vmatprep.subr.mxu0 %v118
    %1157 = vmatpush1.msra.mxu0 %v117
    %1158 = vmatprep.subr.mxu0 %v112
    %1159 = vmatpush1.msra.mxu0 %v111
    %1160 = vmatprep.subr.mxu0 %v106
    %1161 = vmatpush1.msra.mxu0 %v105
    %1162 = vmatprep.subr.mxu0 %v100
    %1163 = vmatpush1.msra.mxu0 %v99
    %1164 = vmatprep.subr.mxu0 %v94
    %1165 = vmatpush1.msra.mxu0 %v93
    %1166 = vmatprep.subr.mxu0 %v88
    %1167 = vmatpush1.msra.mxu0 %v87
    %1168 = vmatprep.subr.mxu0 %v82
    %1169 = vmatpush1.msra.mxu0 %v81
    %1170 = vmatprep.subr.mxu0 %v76
    %1171 = vmatpush1.msra.mxu0 %v75
    %1172 = vmatprep.subr.mxu0 %v262
    %1173 = vmatpush2.msra.mxu0 %v261
    %1174 = vmatprep.subr.mxu0 %v256
    %1175 = vmatpush2.msra.mxu0 %v255
    %1176 = vmatprep.subr.mxu0 %v250
    %1177 = vmatpush2.msra.mxu0 %v249
    %1178 = vmatprep.subr.mxu0 %v244
    %1179 = vmatpush2.msra.mxu0 %v243
    %1180 = vmatprep.subr.mxu0 %v238
    %1181 = vmatpush2.msra.mxu0 %v237
    %1182 = vmatprep.subr.mxu0 %v232
    %1183 = vmatpush2.msra.mxu0 %v231
    %1184 = vmatprep.subr.mxu0 %v226
    %1185 = vmatpush2.msra.mxu0 %v225
    %1186 = vmatprep.subr.mxu0 %v220
    %1187 = vmatpush2.msra.mxu0 %v219
    %1188 = vmatprep.subr.mxu0 %v214
    %1189 = vmatpush2.msra.mxu0 %v213
    %1190 = vmatprep.subr.mxu0 %v208
    %1191 = vmatpush2.msra.mxu0 %v207
    %1192 = vmatprep.subr.mxu0 %v202
    %1193 = vmatpush2.msra.mxu0 %v201
    %1194 = vmatprep.subr.mxu0 %v196
    %1195 = vmatpush2.msra.mxu0 %v195
    %1196 = vmatprep.subr.mxu0 %v190
    %1197 = vmatpush2.msra.mxu0 %v189
    %1198 = vmatprep.subr.mxu0 %v184
    %1199 = vmatpush2.msra.mxu0 %v183
    %1200 = vmatprep.subr.mxu0 %v178
    %1201 = vmatpush2.msra.mxu0 %v177
    %1202 = vmatprep.subr.mxu0 %v172
    %1203 = vmatpush2.msra.mxu0 %v171
    %1204 = vmatprep.mubr.f32.mxu0 %v60
    %1205 = vmatmul.mubr.f32.gmra.mxu0 %v59
    %v1206 = vpop.f32.mrf.mxu0
    %v1207 = vadd.f32 %v667, %v1206
    %v1208 = vpop.f32.mrf.mxu0
    %v1209 = vadd.f32 %v671, %v1208
    %1210 = vmatprep.mubr.f32.mxu0 %v66
    %1211 = vmatmul.mubr.f32.gmra.mxu0 %v65
    %v1212 = vpop.f32.mrf.mxu0
    %v1213 = vadd.f32 %v667, %v1212
    %v1214 = vpop.f32.mrf.mxu0
    %v1215 = vadd.f32 %v671, %v1214
    %1216 = vdwg.mxu0
    %1217 = vmatprep.subr.mxu0 %v358
    %1218 = vmatpush1.msra.mxu0 %v357
    %1219 = vmatprep.subr.mxu0 %v352
    %1220 = vmatpush1.msra.mxu0 %v351
    %1221 = vmatprep.subr.mxu0 %v346
    %1222 = vmatpush1.msra.mxu0 %v345
    %1223 = vmatprep.subr.mxu0 %v340
    %1224 = vmatpush1.msra.mxu0 %v339
    %1225 = vmatprep.subr.mxu0 %v334
    %1226 = vmatpush1.msra.mxu0 %v333
    %1227 = vmatprep.subr.mxu0 %v328
    %1228 = vmatpush1.msra.mxu0 %v327
    %1229 = vmatprep.subr.mxu0 %v322
    %1230 = vmatpush1.msra.mxu0 %v321
    %1231 = vmatprep.subr.mxu0 %v316
    %1232 = vmatpush1.msra.mxu0 %v315
    %1233 = vmatprep.subr.mxu0 %v310
    %1234 = vmatpush1.msra.mxu0 %v309
    %1235 = vmatprep.subr.mxu0 %v304
    %1236 = vmatpush1.msra.mxu0 %v303
    %1237 = vmatprep.subr.mxu0 %v298
    %1238 = vmatpush1.msra.mxu0 %v297
    %1239 = vmatprep.subr.mxu0 %v292
    %1240 = vmatpush1.msra.mxu0 %v291
    %1241 = vmatprep.subr.mxu0 %v286
    %1242 = vmatpush1.msra.mxu0 %v285
    %1243 = vmatprep.subr.mxu0 %v280
    %1244 = vmatpush1.msra.mxu0 %v279
    %1245 = vmatprep.subr.mxu0 %v274
    %1246 = vmatpush1.msra.mxu0 %v273
    %1247 = vmatprep.subr.mxu0 %v268
    %1248 = vmatpush1.msra.mxu0 %v267
    %1249 = vmatprep.subr.mxu0 %v454
    %1250 = vmatpush2.msra.mxu0 %v453
    %1251 = vmatprep.subr.mxu0 %v448
    %1252 = vmatpush2.msra.mxu0 %v447
    %1253 = vmatprep.subr.mxu0 %v442
    %1254 = vmatpush2.msra.mxu0 %v441
    %1255 = vmatprep.subr.mxu0 %v436
    %1256 = vmatpush2.msra.mxu0 %v435
    %1257 = vmatprep.subr.mxu0 %v430
    %1258 = vmatpush2.msra.mxu0 %v429
    %1259 = vmatprep.subr.mxu0 %v424
    %1260 = vmatpush2.msra.mxu0 %v423
    %1261 = vmatprep.subr.mxu0 %v418
    %1262 = vmatpush2.msra.mxu0 %v417
    %1263 = vmatprep.subr.mxu0 %v412
    %1264 = vmatpush2.msra.mxu0 %v411
    %1265 = vmatprep.subr.mxu0 %v406
    %1266 = vmatpush2.msra.mxu0 %v405
    %1267 = vmatprep.subr.mxu0 %v400
    %1268 = vmatpush2.msra.mxu0 %v399
    %1269 = vmatprep.subr.mxu0 %v394
    %1270 = vmatpush2.msra.mxu0 %v393
    %1271 = vmatprep.subr.mxu0 %v388
    %1272 = vmatpush2.msra.mxu0 %v387
    %1273 = vmatprep.subr.mxu0 %v382
    %1274 = vmatpush2.msra.mxu0 %v381
    %1275 = vmatprep.subr.mxu0 %v376
    %1276 = vmatpush2.msra.mxu0 %v375
    %1277 = vmatprep.subr.mxu0 %v370
    %1278 = vmatpush2.msra.mxu0 %v369
    %1279 = vmatprep.subr.mxu0 %v364
    %1280 = vmatpush2.msra.mxu0 %v363
    %1281 = vmatprep.mubr.f32.mxu0 %v62
    %1282 = vmatmul.mubr.f32.gmra.mxu0 %v61
    %v1283 = vpop.f32.mrf.mxu0
    %v1284 = vadd.f32 %v1207, %v1283
    %v1285 = vpop.f32.mrf.mxu0
    %v1286 = vadd.f32 %v1209, %v1285
    %1287 = vmatprep.mubr.f32.mxu0 %v68
    %1288 = vmatmul.mubr.f32.gmra.mxu0 %v67
    %v1289 = vpop.f32.mrf.mxu0
    %v1290 = vadd.f32 %v1213, %v1289
    %v1291 = vpop.f32.mrf.mxu0
    %v1292 = vadd.f32 %v1215, %v1291
    %1293 = vdwg.mxu0
    %1294 = vmatprep.subr.mxu0 %v550
    %1295 = vmatpush1.msra.mxu0 %v549
    %1296 = vmatprep.subr.mxu0 %v544
    %1297 = vmatpush1.msra.mxu0 %v543
    %1298 = vmatprep.subr.mxu0 %v538
    %1299 = vmatpush1.msra.mxu0 %v537
    %1300 = vmatprep.subr.mxu0 %v532
    %1301 = vmatpush1.msra.mxu0 %v531
    %1302 = vmatprep.subr.mxu0 %v526
    %1303 = vmatpush1.msra.mxu0 %v525
    %1304 = vmatprep.subr.mxu0 %v520
    %1305 = vmatpush1.msra.mxu0 %v519
    %1306 = vmatprep.subr.mxu0 %v514
    %1307 = vmatpush1.msra.mxu0 %v513
    %1308 = vmatprep.subr.mxu0 %v508
    %1309 = vmatpush1.msra.mxu0 %v507
    %1310 = vmatprep.subr.mxu0 %v502
    %1311 = vmatpush1.msra.mxu0 %v501
    %1312 = vmatprep.subr.mxu0 %v496
    %1313 = vmatpush1.msra.mxu0 %v495
    %1314 = vmatprep.subr.mxu0 %v490
    %1315 = vmatpush1.msra.mxu0 %v489
    %1316 = vmatprep.subr.mxu0 %v484
    %1317 = vmatpush1.msra.mxu0 %v483
    %1318 = vmatprep.subr.mxu0 %v478
    %1319 = vmatpush1.msra.mxu0 %v477
    %1320 = vmatprep.subr.mxu0 %v472
    %1321 = vmatpush1.msra.mxu0 %v471
    %1322 = vmatprep.subr.mxu0 %v466
    %1323 = vmatpush1.msra.mxu0 %v465
    %1324 = vmatprep.subr.mxu0 %v460
    %1325 = vmatpush1.msra.mxu0 %v459
    %1326 = vmatprep.subr.mxu0 %v646
    %1327 = vmatpush2.msra.mxu0 %v645
    %1328 = vmatprep.subr.mxu0 %v640
    %1329 = vmatpush2.msra.mxu0 %v639
    %1330 = vmatprep.subr.mxu0 %v634
    %1331 = vmatpush2.msra.mxu0 %v633
    %1332 = vmatprep.subr.mxu0 %v628
    %1333 = vmatpush2.msra.mxu0 %v627
    %1334 = vmatprep.subr.mxu0 %v622
    %1335 = vmatpush2.msra.mxu0 %v621
    %1336 = vmatprep.subr.mxu0 %v616
    %1337 = vmatpush2.msra.mxu0 %v615
    %1338 = vmatprep.subr.mxu0 %v610
    %1339 = vmatpush2.msra.mxu0 %v609
    %1340 = vmatprep.subr.mxu0 %v604
    %1341 = vmatpush2.msra.mxu0 %v603
    %1342 = vmatprep.subr.mxu0 %v598
    %1343 = vmatpush2.msra.mxu0 %v597
    %1344 = vmatprep.subr.mxu0 %v592
    %1345 = vmatpush2.msra.mxu0 %v591
    %1346 = vmatprep.subr.mxu0 %v586
    %1347 = vmatpush2.msra.mxu0 %v585
    %1348 = vmatprep.subr.mxu0 %v580
    %1349 = vmatpush2.msra.mxu0 %v579
    %1350 = vmatprep.subr.mxu0 %v574
    %1351 = vmatpush2.msra.mxu0 %v573
    %1352 = vmatprep.subr.mxu0 %v568
    %1353 = vmatpush2.msra.mxu0 %v567
    %1354 = vmatprep.subr.mxu0 %v562
    %1355 = vmatpush2.msra.mxu0 %v561
    %1356 = vmatprep.subr.mxu0 %v556
    %1357 = vmatpush2.msra.mxu0 %v555
    %1358 = vmatprep.mubr.f32.mxu0 %v64
    %1359 = vmatmul.mubr.f32.gmra.mxu0 %v63
    %v1360 = vpop.f32.mrf.mxu0
    %v1361 = vadd.f32 %v1284, %v1360
    %v1362 = vpop.f32.mrf.mxu0
    %v1363 = vadd.f32 %v1286, %v1362
    %1364 = vmatprep.mubr.f32.mxu0 %v70
    %1365 = vmatmul.mubr.f32.gmra.mxu0 %v69
    %v1366 = vpop.f32.mrf.mxu0
    %v1367 = vadd.f32 %v1290, %v1366
    %v1368 = vpop.f32.mrf.mxu0
    %v1369 = vadd.f32 %v1292, %v1368
    %1370 = vdwg.mxu0
    %v1371 = vadd.f32 %v899, %v901
    %v1372 = vadd.f32 %v1371, %v1130
    %v1373 = vadd.f32 %v1372, %v1132
    %v1374 = vadd.f32 %v1373, %v1361
    %v1375 = vadd.f32 %v1374, %v1363
    %1376 = vadd.xlane.f32.xlu0 %v1375
    %v1377 = vpop.xlane.xlu0 %1376
    %v1378 = vadd.f32 %v905, %v907
    %v1379 = vadd.f32 %v1378, %v1136
    %v1380 = vadd.f32 %v1379, %v1138
    %v1381 = vadd.f32 %v1380, %v1367
    %v1382 = vadd.f32 %v1381, %v1369
    %1383 = vadd.xlane.f32.xlu0 %v1382
    %v1384 = vpop.xlane.xlu0 %1383
    %v1385 = vrcp.pop 768.0
    %v1386 = vmul.f32 %v1377, %v1385
    %v1387 = vmul.f32 %v1384, %v1385
    %v1388 = vsub.f32 %v899, %v1386
    %v1389 = vsub.f32 %v901, %v1386
    %v1390 = vsub.f32 %v1130, %v1386
    %v1391 = vsub.f32 %v1132, %v1386
    %v1392 = vsub.f32 %v1361, %v1386
    %v1393 = vsub.f32 %v1363, %v1386
    %v1394 = vsub.f32 %v905, %v1387
    %v1395 = vsub.f32 %v907, %v1387
    %v1396 = vsub.f32 %v1136, %v1387
    %v1397 = vsub.f32 %v1138, %v1387
    %v1398 = vsub.f32 %v1367, %v1387
    %v1399 = vsub.f32 %v1369, %v1387
    %v1400 = vmul.f32 %v1388, %v1388
    %v1401 = vmul.f32 %v1389, %v1389
    %v1402 = vmul.f32 %v1390, %v1390
    %v1403 = vmul.f32 %v1391, %v1391
    %v1404 = vmul.f32 %v1392, %v1392
    %v1405 = vmul.f32 %v1393, %v1393
    %v1406 = vmul.f32 %v1394, %v1394
    %v1407 = vmul.f32 %v1395, %v1395
    %v1408 = vmul.f32 %v1396, %v1396
    %v1409 = vmul.f32 %v1397, %v1397
    %v1410 = vmul.f32 %v1398, %v1398
    %v1411 = vmul.f32 %v1399, %v1399
    %v1412 = vadd.f32 %v1400, %v1401
    %v1413 = vadd.f32 %v1412, %v1402
    %v1414 = vadd.f32 %v1413, %v1403
    %v1415 = vadd.f32 %v1414, %v1404
    %v1416 = vadd.f32 %v1415, %v1405
    %1417 = vadd.xlane.f32.xlu0 %v1416
    %v1418 = vpop.xlane.xlu0 %1417
    %v1419 = vadd.f32 %v1406, %v1407
    %v1420 = vadd.f32 %v1419, %v1408
    %v1421 = vadd.f32 %v1420, %v1409
    %v1422 = vadd.f32 %v1421, %v1410
    %v1423 = vadd.f32 %v1422, %v1411
    %1424 = vadd.xlane.f32.xlu0 %v1423
    %v1425 = vpop.xlane.xlu0 %1424
    %v1426 = vmul.f32 %v1418, %v1385
    %v1427 = vmul.f32 %v1425, %v1385
    %v1428 = vadd.f32 %v1426, 1e-05
    %v1429 = vadd.f32 %v1427, 1e-05
    %v1430 = vrsqrt.pop %v1428
    %v1431 = vrsqrt.pop %v1429
    %v1432 = vmul.f32 %v1388, %v1430
    %v1433 = vmul.f32 %v1389, %v1430
    %v1434 = vmul.f32 %v1390, %v1430
    %v1435 = vmul.f32 %v1391, %v1430
    %v1436 = vmul.f32 %v1392, %v1430
    %v1437 = vmul.f32 %v1393, %v1430
    %v1438 = vmul.f32 %v1394, %v1431
    %v1439 = vmul.f32 %v1395, %v1431
    %v1440 = vmul.f32 %v1396, %v1431
    %v1441 = vmul.f32 %v1397, %v1431
    %v1442 = vmul.f32 %v1398, %v1431
    %v1443 = vmul.f32 %v1399, %v1431
    %v1445 = vlaneseq
    %v1446 = vshrl.u32 %v1445, 7
    %v1447 = vsub.s32 0, %v1446
    %v1448 = vrot.slane %v56, %v1447
    %v1449 = vlaneseq
    %v1450 = vshrl.u32 %v1449, 7
    %v1451 = vsub.s32 1, %v1450
    %v1452 = vrot.slane %v56, %v1451
    %v1453 = vlaneseq
    %v1454 = vshrl.u32 %v1453, 7
    %v1455 = vsub.s32 2, %v1454
    %v1456 = vrot.slane %v56, %v1455
    %v1457 = vlaneseq
    %v1458 = vshrl.u32 %v1457, 7
    %v1459 = vsub.s32 3, %v1458
    %v1460 = vrot.slane %v56, %v1459
    %v1461 = vlaneseq
    %v1462 = vshrl.u32 %v1461, 7
    %v1463 = vsub.s32 4, %v1462
    %v1464 = vrot.slane %v56, %v1463
    %v1465 = vlaneseq
    %v1466 = vshrl.u32 %v1465, 7
    %v1467 = vsub.s32 5, %v1466
    %v1468 = vrot.slane %v56, %v1467
    %v1475 = vmul.f32 %v1432, %v1448
    %v1476 = vmul.f32 %v1433, %v1452
    %v1477 = vmul.f32 %v1434, %v1456
    %v1478 = vmul.f32 %v1435, %v1460
    %v1479 = vmul.f32 %v1436, %v1464
    %v1480 = vmul.f32 %v1437, %v1468
    %v1481 = vmul.f32 %v1438, %v1448
    %v1482 = vmul.f32 %v1439, %v1452
    %v1483 = vmul.f32 %v1440, %v1456
    %v1484 = vmul.f32 %v1441, %v1460
    %v1485 = vmul.f32 %v1442, %v1464
    %v1486 = vmul.f32 %v1443, %v1468
    %v1488 = vlaneseq
    %v1489 = vshrl.u32 %v1488, 7
    %v1490 = vsub.s32 0, %v1489
    %v1491 = vrot.slane %v58, %v1490
    %v1492 = vlaneseq
    %v1493 = vshrl.u32 %v1492, 7
    %v1494 = vsub.s32 1, %v1493
    %v1495 = vrot.slane %v58, %v1494
    %v1496 = vlaneseq
    %v1497 = vshrl.u32 %v1496, 7
    %v1498 = vsub.s32 2, %v1497
    %v1499 = vrot.slane %v58, %v1498
    %v1500 = vlaneseq
    %v1501 = vshrl.u32 %v1500, 7
    %v1502 = vsub.s32 3, %v1501
    %v1503 = vrot.slane %v58, %v1502
    %v1504 = vlaneseq
    %v1505 = vshrl.u32 %v1504, 7
    %v1506 = vsub.s32 4, %v1505
    %v1507 = vrot.slane %v58, %v1506
    %v1508 = vlaneseq
    %v1509 = vshrl.u32 %v1508, 7
    %v1510 = vsub.s32 5, %v1509
    %v1511 = vrot.slane %v58, %v1510
    %v1518 = vadd.f32 %v1475, %v1491
    %v1519 = vadd.f32 %v1476, %v1495
    %v1520 = vadd.f32 %v1477, %v1499
    %v1521 = vadd.f32 %v1478, %v1503
    %v1522 = vadd.f32 %v1479, %v1507
    %v1523 = vadd.f32 %v1480, %v1511
    %v1524 = vadd.f32 %v1481, %v1491
    %v1525 = vadd.f32 %v1482, %v1495
    %v1526 = vadd.f32 %v1483, %v1499
    %v1527 = vadd.f32 %v1484, %v1503
    %v1528 = vadd.f32 %v1485, %v1507
    %v1529 = vadd.f32 %v1486, %v1511
    %1530 = vst [vmem:[#allocation8] sm:$0xff] %v1518
    %1531 = vst [vmem:[#allocation8 + $0x8] sm:$0xff] %v1519
    %1532 = vst [vmem:[#allocation8 + $0x10] sm:$0xff] %v1520
    %1533 = vst [vmem:[#allocation8 + $0x18] sm:$0xff] %v1521
    %1534 = vst [vmem:[#allocation8 + $0x20] sm:$0xff] %v1522
    %1535 = vst [vmem:[#allocation8 + $0x28] sm:$0xff] %v1523
    %1536 = vst [vmem:[#allocation8 + $0x30] sm:$0xff] %v1524
    %1537 = vst [vmem:[#allocation8 + $0x38] sm:$0xff] %v1525
    %1538 = vst [vmem:[#allocation8 + $0x40] sm:$0xff] %v1526
    %1539 = vst [vmem:[#allocation8 + $0x48] sm:$0xff] %v1527
    %1540 = vst [vmem:[#allocation8 + $0x50] sm:$0xff] %v1528
    %1541 = vst [vmem:[#allocation8 + $0x58] sm:$0xff] %v1529
    // Predicated region
    $region26: #{tpu_custom_call.1} parent=1 // pred_check
      _
    $region27: #{tpu_custom_call.1} parent=1 // pred_check_branch
      %1543 = sbr.rel (0) target = $region29
    $region28: #{tpu_custom_call.1} parent=1 // pred_region
      %s1545 = ssub.s32 1536, 1536
      %1546 = vsyncadd [#allocation4], %s1545
      %s1547 = sshll.u32 [#allocation8], 4
      %s1548 = int_to_ptr.vmem [resolvable:$true] %s1547
      %1553 = dma.vmem_to_hbm [thread:$0]  %s1548, 1536, %s3, [#allocation4], 768, 768, 48
    $region29: #{tpu_custom_call.1} parent=1 // pred_fallthru
      _
    // Predicated region
    $region30: #{tpu_custom_call.1} parent=1 // pred_check
      _
    $region31: #{tpu_custom_call.1} parent=1 // pred_check_branch
      %1555 = sbr.rel (0) target = $region33
    $region32: #{tpu_custom_call.1} parent=1 // pred_region
      %1556 = dma.done [#allocation4], 1536
    $region33: #{tpu_custom_call.1} parent=1 // pred_fallthru
      _
    %1557 = vsyncpa [#allocation3], 1
    %1558 = vsyncpa [#allocation6], 1
    %1559 = vsyncpa [#allocation4], 1

</llo_original>
